<compile_context>
chip_gen: v5e
topology: v5e:2x2
jax: 0.10.0
libtpu: 0.0.40
codegen_flags: <defaults>
</compile_context>

<pallas_src>
import jax
import jax.numpy as jnp
from jax.experimental import pallas as pl
from jax.experimental.pallas import tpu as pltpu

# ----------------------- model hyper-parameters (small demo sizes) ----------
BATCH = 2
CHANNELS = 3
IMG = 32
KERNEL = 8                        # patch size == conv stride
EMBED = 64                        # embedding_dim
NUM_HEADS = 4
NUM_LAYERS = 2
MLP_RATIO = 2.0
NUM_CLASSES = 10
M_LDS = 3                         # self.m
LDS_ORDER = 8                     # self.lds_order
OM_DIM = M_LDS * LDS_ORDER ** 2   # 192, input dim of om_layer's final Linear
HIDDEN = int(EMBED * MLP_RATIO)   # 128
HEAD_DIM = EMBED // NUM_HEADS     # 16
N_PATCHES = (IMG // KERNEL) ** 2  # 16
SEQ = N_PATCHES + 1               # +1 class token (seq_pool=False)
CKK = CHANNELS * KERNEL * KERNEL  # 192

# ----------------------- padded (lane/sublane friendly) sizes ---------------
D_PAD = 128                       # EMBED padded to a full 128-lane vreg width
T_PAD = 24                        # SEQ padded to a multiple of 8 sublanes
CLS_PAD = 128                     # classifier output padded to 128 lanes
LOGIT_ROWS = 8                    # sublane-padded logits rows per batch element
LN_EPS = 1e-5


# ----------------------------- in-kernel helpers -----------------------------
def _ln(x, g, b, valid):
    """LayerNorm over the last (lane-padded) axis; only `valid` lanes count.

    Assumes pad lanes of x are zero and pad lanes of g/b are zero, so the output
    keeps pad lanes at exactly zero.
    """
    mask = jax.lax.broadcasted_iota(jnp.int32, x.shape, x.ndim - 1) < valid
    inv_n = 1.0 / valid
    mu = jnp.sum(x, axis=-1, keepdims=True) * inv_n
    xc = jnp.where(mask, x - mu, 0.0)
    var = jnp.sum(xc * xc, axis=-1, keepdims=True) * inv_n
    return xc * jax.lax.rsqrt(var + LN_EPS) * g + b


# ------------------------ kernel 1: tokenizer + om_layer ---------------------
def _tokenizer_kernel(patches_ref, tokw_ref, tokb_ref, lng_ref, lnb_ref,
                      obsw_ref, obsb_ref, fcw_ref, fcb_ref, om_ref):
    x = patches_ref[0]                                                   # (N, CKK)
    tok = jnp.dot(x, tokw_ref[...], preferred_element_type=jnp.float32) + tokb_ref[...]
    y = _ln(tok, lng_ref[...], lnb_ref[...], EMBED)
    # TODO(synk): ObsMatrixTokenizer reference code is not provided; approximated by
    # a deterministic learned Linear(EMBED -> m*lds_order**2), as in the baseline.
    y = jnp.dot(y, obsw_ref[...], preferred_element_type=jnp.float32) + obsb_ref[...]
    om = jnp.dot(y, fcw_ref[...], preferred_element_type=jnp.float32) + fcb_ref[...]
    om_ref[0] = om                                                       # (N, D_PAD)


def tokenizer_om(patches, p):
    B = patches.shape[0]
    full = lambda *s: pl.BlockSpec(s, lambda b: (0,) * len(s))
    return pl.pallas_call(
        _tokenizer_kernel,
        out_shape=jax.ShapeDtypeStruct((B, N_PATCHES, D_PAD), jnp.float32),
        grid=(B,),
        in_specs=[
            pl.BlockSpec((1, N_PATCHES, CKK), lambda b: (b, 0, 0)),
            full(CKK, D_PAD), full(1, D_PAD),
            full(1, D_PAD), full(1, D_PAD),
            full(D_PAD, OM_DIM), full(1, OM_DIM),
            full(OM_DIM, D_PAD), full(1, D_PAD),
        ],
        out_specs=pl.BlockSpec((1, N_PATCHES, D_PAD), lambda b: (b, 0, 0)),
        compiler_params=pltpu.CompilerParams(dimension_semantics=("parallel",)),
    )(patches, p["tok_w"], p["tok_b"], p["om_ln_g"], p["om_ln_b"],
      p["obs_w"], p["obs_b"], p["om_fc_w"], p["om_fc_b"])


# ----------- kernel 2: all encoder layers + final norm + classifier ----------
def _encoder_kernel(z_ref, preg_ref, preb_ref, wq_ref, wk_ref, wv_ref,
                    wproj_ref, projb_ref, n1g_ref, n1b_ref,
                    fc1w_ref, fc1b_ref, fc2w_ref, fc2b_ref,
                    fng_ref, fnb_ref, fcw_ref, fcb_ref, logits_ref):
    scale = HEAD_DIM ** -0.5
    z = z_ref[0]                                                         # (T_PAD, D_PAD)
    # mask pad key positions (>= SEQ) once; hoisted out of the layer loop
    key_mask = jax.lax.broadcasted_iota(jnp.int32, (T_PAD, T_PAD), 1) < SEQ

    for l in range(NUM_LAYERS):
        # --- pre-norm multi-head self-attention (all heads in this block) ---
        h = _ln(z, preg_ref[l], preb_ref[l], EMBED)
        attn = jnp.zeros((T_PAD, D_PAD), jnp.float32)
        for hh in range(NUM_HEADS):
            q = jnp.dot(h, wq_ref[l, hh], preferred_element_type=jnp.float32) * scale
            k = jnp.dot(h, wk_ref[l, hh], preferred_element_type=jnp.float32)
            v = jnp.dot(h, wv_ref[l, hh], preferred_element_type=jnp.float32)
            s = jax.lax.dot_general(q, k, (((1,), (1,)), ((), ())),
                                    preferred_element_type=jnp.float32)   # (T_PAD, T_PAD)
            s = jnp.where(key_mask, s, -1e30)
            s = s - jnp.max(s, axis=-1, keepdims=True)
            p = jnp.exp(s)
            p = p * pl.reciprocal(jnp.sum(p, axis=-1, keepdims=True), approx=True)
            o = jnp.dot(p, v, preferred_element_type=jnp.float32)         # (T_PAD, HD)
            # accumulate the projection per head: avoids concatenating head outputs
            attn = attn + jnp.dot(o, wproj_ref[l, hh],
                                  preferred_element_type=jnp.float32)
        z = z + attn + projb_ref[l]
        # --- CCT encoder layer: norm1 rewrites the residual stream before the MLP ---
        z = _ln(z, n1g_ref[l], n1b_ref[l], EMBED)
        m = jnp.dot(z, fc1w_ref[l], preferred_element_type=jnp.float32) + fc1b_ref[l]
        # TODO(synk): PyTorch nn.GELU defaults to exact erf GELU; tanh approximation
        # used here for guaranteed Mosaic lowering.
        m = jax.nn.gelu(m, approximate=True)
        m = jnp.dot(m, fc2w_ref[l], preferred_element_type=jnp.float32) + fc2b_ref[l]
        z = z + m

    # --- final LayerNorm + classifier head (seq_pool=False -> class token row 0) ---
    cls = _ln(z[0:1, :], fng_ref[...], fnb_ref[...], EMBED)               # (1, D_PAD)
    logits = jnp.dot(cls, fcw_ref[...], preferred_element_type=jnp.float32) + fcb_ref[...]
    logits_ref[0] = jnp.broadcast_to(logits, (LOGIT_ROWS, CLS_PAD))


def encoder_classifier(z0, p):
    B = z0.shape[0]
    full = lambda *s: pl.BlockSpec(s, lambda b: (0,) * len(s))
    L, H = NUM_LAYERS, NUM_HEADS
    return pl.pallas_call(
        _encoder_kernel,
        out_shape=jax.ShapeDtypeStruct((B, LOGIT_ROWS, CLS_PAD), jnp.float32),
        grid=(B,),
        in_specs=[
            pl.BlockSpec((1, T_PAD, D_PAD), lambda b: (b, 0, 0)),
            full(L, 1, D_PAD), full(L, 1, D_PAD),
            full(L, H, D_PAD, HEAD_DIM),
            full(L, H, D_PAD, HEAD_DIM),
            full(L, H, D_PAD, HEAD_DIM),
            full(L, H, HEAD_DIM, D_PAD),
            full(L, 1, D_PAD),
            full(L, 1, D_PAD), full(L, 1, D_PAD),
            full(L, D_PAD, HIDDEN), full(L, 1, HIDDEN),
            full(L, HIDDEN, D_PAD), full(L, 1, D_PAD),
            full(1, D_PAD), full(1, D_PAD),
            full(D_PAD, CLS_PAD), full(1, CLS_PAD),
        ],
        out_specs=pl.BlockSpec((1, LOGIT_ROWS, CLS_PAD), lambda b: (b, 0, 0)),
        compiler_params=pltpu.CompilerParams(dimension_semantics=("parallel",)),
    )(z0, p["pre_g"], p["pre_b"], p["wq"], p["wk"], p["wv"], p["wproj"], p["proj_b"],
      p["n1_g"], p["n1_b"], p["fc1_w"], p["fc1_b"], p["fc2_w"], p["fc2_b"],
      p["norm_g"], p["norm_b"], p["fc_w"], p["fc_b"])


# ------------------------------ parameters ----------------------------------
def _pad_to(a, shape):
    return jnp.pad(a, [(0, t - s) for s, t in zip(a.shape, shape)])


def init_params(key):
    def nrm(k, shape, scale=0.02):
        return (scale * jax.random.normal(k, shape)).astype(jnp.float32)

    ks = iter(jax.random.split(key, 16 + 8 * NUM_LAYERS))
    p = {}
    # Tokenizer: Conv2d(C, D, k, stride=k, bias=True) -> flattened (C*k*k, D), padded
    p["tok_w"] = _pad_to(nrm(next(ks), (CKK, EMBED)), (CKK, D_PAD))
    p["tok_b"] = _pad_to(nrm(next(ks), (1, EMBED)), (1, D_PAD))
    # om_layer: LayerNorm(D) -> ObsMatrixTokenizer (approx) -> Linear(m*lds^2, D)
    p["om_ln_g"] = _pad_to(jnp.ones((1, EMBED), jnp.float32), (1, D_PAD))
    p["om_ln_b"] = jnp.zeros((1, D_PAD), jnp.float32)
    p["obs_w"] = _pad_to(nrm(next(ks), (EMBED, OM_DIM)), (D_PAD, OM_DIM))
    p["obs_b"] = jnp.zeros((1, OM_DIM), jnp.float32)
    p["om_fc_w"] = _pad_to(nrm(next(ks), (OM_DIM, EMBED)), (OM_DIM, D_PAD))
    p["om_fc_b"] = _pad_to(nrm(next(ks), (1, EMBED)), (1, D_PAD))
    # classifier embeddings (CCT TransformerClassifier, seq_pool=False, learnable PE)
    p["cls_token"] = jnp.zeros((1, 1, EMBED), jnp.float32)
    p["pos_emb"] = nrm(next(ks), (1, SEQ, EMBED), scale=0.2)

    pre_g, pre_b, wq, wk, wv, wproj, proj_b = [], [], [], [], [], [], []
    n1_g, n1_b, fc1_w, fc1_b, fc2_w, fc2_b = [], [], [], [], [], []
    for _ in range(NUM_LAYERS):
        qkv = nrm(next(ks), (EMBED, 3 * EMBED))           # CCT qkv Linear has no bias
        q_w = qkv[:, 0 * EMBED:1 * EMBED]
        k_w = qkv[:, 1 * EMBED:2 * EMBED]
        v_w = qkv[:, 2 * EMBED:3 * EMBED]

        def per_head(w):                                   # (D, D) -> (H, D_PAD, HD)
            return _pad_to(w.reshape(EMBED, NUM_HEADS, HEAD_DIM).transpose(1, 0, 2),
                           (NUM_HEADS, D_PAD, HEAD_DIM))

        wq.append(per_head(q_w))
        wk.append(per_head(k_w))
        wv.append(per_head(v_w))
        pw = nrm(next(ks), (EMBED, EMBED))                 # proj: rows = concatenated heads
        wproj.append(_pad_to(pw.reshape(NUM_HEADS, HEAD_DIM, EMBED),
                             (NUM_HEADS, HEAD_DIM, D_PAD)))
        proj_b.append(jnp.zeros((1, D_PAD), jnp.float32))
        pre_g.append(_pad_to(jnp.ones((1, EMBED), jnp.float32), (1, D_PAD)))
        pre_b.append(jnp.zeros((1, D_PAD), jnp.float32))
        n1_g.append(_pad_to(jnp.ones((1, EMBED), jnp.float32), (1, D_PAD)))
        n1_b.append(jnp.zeros((1, D_PAD), jnp.float32))
        fc1_w.append(_pad_to(nrm(next(ks), (EMBED, HIDDEN)), (D_PAD, HIDDEN)))
        fc1_b.append(jnp.zeros((1, HIDDEN), jnp.float32))
        fc2_w.append(_pad_to(nrm(next(ks), (HIDDEN, EMBED)), (HIDDEN, D_PAD)))
        fc2_b.append(jnp.zeros((1, D_PAD), jnp.float32))

    stack = lambda xs: jnp.stack(xs, axis=0)
    p.update(pre_g=stack(pre_g), pre_b=stack(pre_b), wq=stack(wq), wk=stack(wk),
             wv=stack(wv), wproj=stack(wproj), proj_b=stack(proj_b),
             n1_g=stack(n1_g), n1_b=stack(n1_b), fc1_w=stack(fc1_w), fc1_b=stack(fc1_b),
             fc2_w=stack(fc2_w), fc2_b=stack(fc2_b))
    p["norm_g"] = _pad_to(jnp.ones((1, EMBED), jnp.float32), (1, D_PAD))
    p["norm_b"] = jnp.zeros((1, D_PAD), jnp.float32)
    p["fc_w"] = _pad_to(nrm(next(ks), (EMBED, NUM_CLASSES)), (D_PAD, CLS_PAD))
    p["fc_b"] = jnp.zeros((1, CLS_PAD), jnp.float32)
    return p


# ------------------------------- forward ------------------------------------
@jax.jit
def forward(params, x):
    B, C, H, W = x.shape
    k = KERNEL
    Hp, Wp = H // k, W // k
    N = Hp * Wp

    # --- Tokenizer patch extraction (layout glue; Conv2d with kernel==stride) ---
    patches = (x.reshape(B, C, Hp, k, Wp, k)
                 .transpose(0, 2, 4, 1, 3, 5)             # (B, Hp, Wp, C, k, k)
                 .reshape(B, N, C * k * k))

    # --- fused tokenizer + om_layer kernel ---
    om = tokenizer_om(patches, params)                     # (B, N, D_PAD)

    # --- class token + positional embedding, padded to (T_PAD, D_PAD) ---
    pe = jnp.pad(params["pos_emb"][0], ((0, T_PAD - SEQ), (0, D_PAD - EMBED)))
    ct = jnp.pad(params["cls_token"][0], ((0, T_PAD - 1), (0, D_PAD - EMBED)))
    base = pe + ct                                         # (T_PAD, D_PAD)
    z0 = base[None, :, :] + jnp.pad(om, ((0, 0), (1, T_PAD - 1 - N), (0, 0)))

    # --- fused transformer encoder + final norm + classifier head kernel ---
    out = encoder_classifier(z0, params)                   # (B, LOGIT_ROWS, CLS_PAD)
    return out[:, 0, :NUM_CLASSES]


# --------------------------------- main --------------------------------------
if __name__ == "__main__":
    x = jax.random.normal(
        jax.random.PRNGKey(0), (BATCH, CHANNELS, IMG, IMG), dtype=jnp.float32
    )
    params = init_params(jax.random.PRNGKey(42))
    logits = forward(params, x)
    jax.block_until_ready(logits)
    assert logits.shape == (BATCH, NUM_CLASSES), logits.shape
    assert bool(jnp.all(jnp.isfinite(logits)))
    print("KERNEL_OK")
</pallas_src>

<mosaic_0001>
module attributes {stable_mosaic.version = 11 : i64} {
  func.func @_tokenizer_kernel(%arg0: i32, %arg1: memref<1x16x192xf32, #tpu.memory_space<vmem>>, %arg2: memref<192x128xf32, #tpu.memory_space<vmem>>, %arg3: memref<1x128xf32, #tpu.memory_space<vmem>>, %arg4: memref<1x128xf32, #tpu.memory_space<vmem>>, %arg5: memref<1x128xf32, #tpu.memory_space<vmem>>, %arg6: memref<128x192xf32, #tpu.memory_space<vmem>>, %arg7: memref<1x192xf32, #tpu.memory_space<vmem>>, %arg8: memref<192x128xf32, #tpu.memory_space<vmem>>, %arg9: memref<1x128xf32, #tpu.memory_space<vmem>>, %arg10: memref<1x16x128xf32, #tpu.memory_space<vmem>>) attributes {dimension_semantics = [#tpu.dimension_semantics<parallel>], iteration_bounds = array<i64: 2>, scalar_prefetch = 0 : i64, scratch_operands = 0 : i64, tpu.core_type = #tpu.core_type<tc>, window_params = [{transform_indices = @transform_0, window_bounds = array<i64: 1, 16, 192>}, {pipeline_mode = #tpu.pipeline_mode<synchronous>, transform_indices = @transform_1, window_bounds = array<i64: 192, 128>}, {pipeline_mode = #tpu.pipeline_mode<synchronous>, transform_indices = @transform_2, window_bounds = array<i64: 1, 128>}, {pipeline_mode = #tpu.pipeline_mode<synchronous>, transform_indices = @transform_3, window_bounds = array<i64: 1, 128>}, {pipeline_mode = #tpu.pipeline_mode<synchronous>, transform_indices = @transform_4, window_bounds = array<i64: 1, 128>}, {pipeline_mode = #tpu.pipeline_mode<synchronous>, transform_indices = @transform_5, window_bounds = array<i64: 128, 192>}, {pipeline_mode = #tpu.pipeline_mode<synchronous>, transform_indices = @transform_6, window_bounds = array<i64: 1, 192>}, {pipeline_mode = #tpu.pipeline_mode<synchronous>, transform_indices = @transform_7, window_bounds = array<i64: 192, 128>}, {pipeline_mode = #tpu.pipeline_mode<synchronous>, transform_indices = @transform_8, window_bounds = array<i64: 1, 128>}, {transform_indices = @transform_9, window_bounds = array<i64: 1, 16, 128>}]} {
    %c0 = arith.constant 0 : index
    %c0_0 = arith.constant 0 : index
    %c0_1 = arith.constant 0 : index
    %0 = vector.load %arg1[%c0, %c0_0, %c0_1] : memref<1x16x192xf32, #tpu.memory_space<vmem>>, vector<1x16x192xf32>
    %1 = vector.shape_cast %0 : vector<1x16x192xf32> to vector<16x192xf32>
    %c0_2 = arith.constant 0 : index
    %c0_3 = arith.constant 0 : index
    %2 = vector.load %arg2[%c0_2, %c0_3] : memref<192x128xf32, #tpu.memory_space<vmem>>, vector<192x128xf32>
    %cst = arith.constant dense<0.000000e+00> : vector<16x128xf32>
    %3 = tpu.matmul %1, %2, %cst {dimension_numbers = #tpu.dot_dimension_numbers<[1], [0], [0], [1], [0, 0, 1, 1], [], []>} : vector<16x192xf32>, vector<192x128xf32>, vector<16x128xf32> -> vector<16x128xf32>
    %c0_4 = arith.constant 0 : index
    %c0_5 = arith.constant 0 : index
    %4 = vector.load %arg3[%c0_4, %c0_5] : memref<1x128xf32, #tpu.memory_space<vmem>>, vector<1x128xf32>
    %5 = vector.broadcast %4 : vector<1x128xf32> to vector<16x128xf32>
    %6 = arith.addf %3, %5 : vector<16x128xf32>
    %c0_6 = arith.constant 0 : index
    %c0_7 = arith.constant 0 : index
    %7 = vector.load %arg4[%c0_6, %c0_7] : memref<1x128xf32, #tpu.memory_space<vmem>>, vector<1x128xf32>
    %c0_8 = arith.constant 0 : index
    %c0_9 = arith.constant 0 : index
    %8 = vector.load %arg5[%c0_8, %c0_9] : memref<1x128xf32, #tpu.memory_space<vmem>>, vector<1x128xf32>
    %9 = tpu.iota {dimensions = array<i32: 1>} : vector<16x128xi32>
    %c64_i32 = arith.constant 64 : i32
    %10 = vector.broadcast %c64_i32 : i32 to vector<16x128xi32>
    %11 = arith.cmpi slt, %9, %10 : vector<16x128xi32>
    %cst_10 = arith.constant dense<0.000000e+00> : vector<16xf32>
    %12 = vector.multi_reduction <add>, %6, %cst_10 [1] : vector<16x128xf32> to vector<16xf32>
    %13 = vector.shape_cast %12 : vector<16xf32> to vector<16x1xf32>
    %cst_11 = arith.constant 1.562500e-02 : f32
    %14 = vector.broadcast %cst_11 : f32 to vector<16x1xf32>
    %15 = arith.mulf %13, %14 : vector<16x1xf32>
    %16 = vector.broadcast %15 : vector<16x1xf32> to vector<16x128xf32>
    %17 = arith.subf %6, %16 : vector<16x128xf32>
    %cst_12 = arith.constant 0.000000e+00 : f32
    %18 = vector.broadcast %cst_12 : f32 to vector<16x128xf32>
    %19 = arith.select %11, %17, %18 : vector<16x128xi1>, vector<16x128xf32>
    %20 = arith.mulf %19, %19 : vector<16x128xf32>
    %cst_13 = arith.constant dense<0.000000e+00> : vector<16xf32>
    %21 = vector.multi_reduction <add>, %20, %cst_13 [1] : vector<16x128xf32> to vector<16xf32>
    %22 = vector.shape_cast %21 : vector<16xf32> to vector<16x1xf32>
    %cst_14 = arith.constant 1.562500e-02 : f32
    %23 = vector.broadcast %cst_14 : f32 to vector<16x1xf32>
    %24 = arith.mulf %22, %23 : vector<16x1xf32>
    %cst_15 = arith.constant 9.99999974E-6 : f32
    %25 = vector.broadcast %cst_15 : f32 to vector<16x1xf32>
    %26 = arith.addf %24, %25 : vector<16x1xf32>
    %27 = math.rsqrt %26 : vector<16x1xf32>
    %28 = vector.broadcast %27 : vector<16x1xf32> to vector<16x128xf32>
    %29 = arith.mulf %19, %28 : vector<16x128xf32>
    %30 = vector.broadcast %7 : vector<1x128xf32> to vector<16x128xf32>
    %31 = arith.mulf %29, %30 : vector<16x128xf32>
    %32 = vector.broadcast %8 : vector<1x128xf32> to vector<16x128xf32>
    %33 = arith.addf %31, %32 : vector<16x128xf32>
    %c0_16 = arith.constant 0 : index
    %c0_17 = arith.constant 0 : index
    %34 = vector.load %arg6[%c0_16, %c0_17] : memref<128x192xf32, #tpu.memory_space<vmem>>, vector<128x192xf32>
    %cst_18 = arith.constant dense<0.000000e+00> : vector<16x192xf32>
    %35 = tpu.matmul %33, %34, %cst_18 {dimension_numbers = #tpu.dot_dimension_numbers<[1], [0], [0], [1], [0, 0, 1, 1], [], []>} : vector<16x128xf32>, vector<128x192xf32>, vector<16x192xf32> -> vector<16x192xf32>
    %c0_19 = arith.constant 0 : index
    %c0_20 = arith.constant 0 : index
    %36 = vector.load %arg7[%c0_19, %c0_20] : memref<1x192xf32, #tpu.memory_space<vmem>>, vector<1x192xf32>
    %37 = vector.broadcast %36 : vector<1x192xf32> to vector<16x192xf32>
    %38 = arith.addf %35, %37 : vector<16x192xf32>
    %c0_21 = arith.constant 0 : index
    %c0_22 = arith.constant 0 : index
    %39 = vector.load %arg8[%c0_21, %c0_22] : memref<192x128xf32, #tpu.memory_space<vmem>>, vector<192x128xf32>
    %cst_23 = arith.constant dense<0.000000e+00> : vector<16x128xf32>
    %40 = tpu.matmul %38, %39, %cst_23 {dimension_numbers = #tpu.dot_dimension_numbers<[1], [0], [0], [1], [0, 0, 1, 1], [], []>} : vector<16x192xf32>, vector<192x128xf32>, vector<16x128xf32> -> vector<16x128xf32>
    %c0_24 = arith.constant 0 : index
    %c0_25 = arith.constant 0 : index
    %41 = vector.load %arg9[%c0_24, %c0_25] : memref<1x128xf32, #tpu.memory_space<vmem>>, vector<1x128xf32>
    %42 = vector.broadcast %41 : vector<1x128xf32> to vector<16x128xf32>
    %43 = arith.addf %40, %42 : vector<16x128xf32>
    %c0_26 = arith.constant 0 : index
    %c0_27 = arith.constant 0 : index
    %c0_28 = arith.constant 0 : index
    %44 = vector.load %arg10[%c0_26, %c0_27, %c0_28] : memref<1x16x128xf32, #tpu.memory_space<vmem>>, vector<1x16x128xf32>
    %45 = vector.shape_cast %44 : vector<1x16x128xf32> to vector<16x128xf32>
    %46 = vector.shape_cast %43 : vector<16x128xf32> to vector<1x16x128xf32>
    tpu.vector_store %arg10[%c0_26, %c0_27, %c0_28], %46 {strides = array<i32>} : memref<1x16x128xf32, #tpu.memory_space<vmem>>, vector<1x16x128xf32>,
    return
  }
  func.func @transform_0(%arg0: i32) -> (i32, i32, i32) {
    %c0_i32 = arith.constant 0 : i32
    %c0_i32_0 = arith.constant 0 : i32
    %c0_i32_1 = arith.constant 0 : i32
    return %arg0, %c0_i32, %c0_i32_0 : i32, i32, i32
  }
  func.func @transform_1(%arg0: i32) -> (i32, i32) {
    %c0_i32 = arith.constant 0 : i32
    %c0_i32_0 = arith.constant 0 : i32
    %c0_i32_1 = arith.constant 0 : i32
    return %c0_i32, %c0_i32_0 : i32, i32
  }
  func.func @transform_2(%arg0: i32) -> (i32, i32) {
    %c0_i32 = arith.constant 0 : i32
    %c0_i32_0 = arith.constant 0 : i32
    %c0_i32_1 = arith.constant 0 : i32
    return %c0_i32, %c0_i32_0 : i32, i32
  }
  func.func @transform_3(%arg0: i32) -> (i32, i32) {
    %c0_i32 = arith.constant 0 : i32
    %c0_i32_0 = arith.constant 0 : i32
    %c0_i32_1 = arith.constant 0 : i32
    return %c0_i32, %c0_i32_0 : i32, i32
  }
  func.func @transform_4(%arg0: i32) -> (i32, i32) {
    %c0_i32 = arith.constant 0 : i32
    %c0_i32_0 = arith.constant 0 : i32
    %c0_i32_1 = arith.constant 0 : i32
    return %c0_i32, %c0_i32_0 : i32, i32
  }
  func.func @transform_5(%arg0: i32) -> (i32, i32) {
    %c0_i32 = arith.constant 0 : i32
    %c0_i32_0 = arith.constant 0 : i32
    %c0_i32_1 = arith.constant 0 : i32
    return %c0_i32, %c0_i32_0 : i32, i32
  }
  func.func @transform_6(%arg0: i32) -> (i32, i32) {
    %c0_i32 = arith.constant 0 : i32
    %c0_i32_0 = arith.constant 0 : i32
    %c0_i32_1 = arith.constant 0 : i32
    return %c0_i32, %c0_i32_0 : i32, i32
  }
  func.func @transform_7(%arg0: i32) -> (i32, i32) {
    %c0_i32 = arith.constant 0 : i32
    %c0_i32_0 = arith.constant 0 : i32
    %c0_i32_1 = arith.constant 0 : i32
    return %c0_i32, %c0_i32_0 : i32, i32
  }
  func.func @transform_8(%arg0: i32) -> (i32, i32) {
    %c0_i32 = arith.constant 0 : i32
    %c0_i32_0 = arith.constant 0 : i32
    %c0_i32_1 = arith.constant 0 : i32
    return %c0_i32, %c0_i32_0 : i32, i32
  }
  func.func @transform_9(%arg0: i32) -> (i32, i32, i32) {
    %c0_i32 = arith.constant 0 : i32
    %c0_i32_0 = arith.constant 0 : i32
    %c0_i32_1 = arith.constant 0 : i32
    return %arg0, %c0_i32, %c0_i32_0 : i32, i32, i32
  }
}

module attributes {stable_mosaic.version = 11 : i64} {
  func.func @_encoder_kernel(%arg0: i32, %arg1: memref<1x24x128xf32, #tpu.memory_space<vmem>>, %arg2: memref<2x1x128xf32, #tpu.memory_space<vmem>>, %arg3: memref<2x1x128xf32, #tpu.memory_space<vmem>>, %arg4: memref<2x4x128x16xf32, #tpu.memory_space<vmem>>, %arg5: memref<2x4x128x16xf32, #tpu.memory_space<vmem>>, %arg6: memref<2x4x128x16xf32, #tpu.memory_space<vmem>>, %arg7: memref<2x4x16x128xf32, #tpu.memory_space<vmem>>, %arg8: memref<2x1x128xf32, #tpu.memory_space<vmem>>, %arg9: memref<2x1x128xf32, #tpu.memory_space<vmem>>, %arg10: memref<2x1x128xf32, #tpu.memory_space<vmem>>, %arg11: memref<2x128x128xf32, #tpu.memory_space<vmem>>, %arg12: memref<2x1x128xf32, #tpu.memory_space<vmem>>, %arg13: memref<2x128x128xf32, #tpu.memory_space<vmem>>, %arg14: memref<2x1x128xf32, #tpu.memory_space<vmem>>, %arg15: memref<1x128xf32, #tpu.memory_space<vmem>>, %arg16: memref<1x128xf32, #tpu.memory_space<vmem>>, %arg17: memref<128x128xf32, #tpu.memory_space<vmem>>, %arg18: memref<1x128xf32, #tpu.memory_space<vmem>>, %arg19: memref<1x8x128xf32, #tpu.memory_space<vmem>>) attributes {dimension_semantics = [#tpu.dimension_semantics<parallel>], iteration_bounds = array<i64: 2>, scalar_prefetch = 0 : i64, scratch_operands = 0 : i64, tpu.core_type = #tpu.core_type<tc>, window_params = [{transform_indices = @transform_0, window_bounds = array<i64: 1, 24, 128>}, {pipeline_mode = #tpu.pipeline_mode<synchronous>, transform_indices = @transform_1, window_bounds = array<i64: 2, 1, 128>}, {pipeline_mode = #tpu.pipeline_mode<synchronous>, transform_indices = @transform_2, window_bounds = array<i64: 2, 1, 128>}, {pipeline_mode = #tpu.pipeline_mode<synchronous>, transform_indices = @transform_3, window_bounds = array<i64: 2, 4, 128, 16>}, {pipeline_mode = #tpu.pipeline_mode<synchronous>, transform_indices = @transform_4, window_bounds = array<i64: 2, 4, 128, 16>}, {pipeline_mode = #tpu.pipeline_mode<synchronous>, transform_indices = @transform_5, window_bounds = array<i64: 2, 4, 128, 16>}, {pipeline_mode = #tpu.pipeline_mode<synchronous>, transform_indices = @transform_6, window_bounds = array<i64: 2, 4, 16, 128>}, {pipeline_mode = #tpu.pipeline_mode<synchronous>, transform_indices = @transform_7, window_bounds = array<i64: 2, 1, 128>}, {pipeline_mode = #tpu.pipeline_mode<synchronous>, transform_indices = @transform_8, window_bounds = array<i64: 2, 1, 128>}, {pipeline_mode = #tpu.pipeline_mode<synchronous>, transform_indices = @transform_9, window_bounds = array<i64: 2, 1, 128>}, {pipeline_mode = #tpu.pipeline_mode<synchronous>, transform_indices = @transform_10, window_bounds = array<i64: 2, 128, 128>}, {pipeline_mode = #tpu.pipeline_mode<synchronous>, transform_indices = @transform_11, window_bounds = array<i64: 2, 1, 128>}, {pipeline_mode = #tpu.pipeline_mode<synchronous>, transform_indices = @transform_12, window_bounds = array<i64: 2, 128, 128>}, {pipeline_mode = #tpu.pipeline_mode<synchronous>, transform_indices = @transform_13, window_bounds = array<i64: 2, 1, 128>}, {pipeline_mode = #tpu.pipeline_mode<synchronous>, transform_indices = @transform_14, window_bounds = array<i64: 1, 128>}, {pipeline_mode = #tpu.pipeline_mode<synchronous>, transform_indices = @transform_15, window_bounds = array<i64: 1, 128>}, {pipeline_mode = #tpu.pipeline_mode<synchronous>, transform_indices = @transform_16, window_bounds = array<i64: 128, 128>}, {pipeline_mode = #tpu.pipeline_mode<synchronous>, transform_indices = @transform_17, window_bounds = array<i64: 1, 128>}, {transform_indices = @transform_18, window_bounds = array<i64: 1, 8, 128>}]} {
    %c0 = arith.constant 0 : index
    %c0_0 = arith.constant 0 : index
    %c0_1 = arith.constant 0 : index
    %0 = vector.load %arg1[%c0, %c0_0, %c0_1] : memref<1x24x128xf32, #tpu.memory_space<vmem>>, vector<1x24x128xf32>
    %1 = vector.shape_cast %0 : vector<1x24x128xf32> to vector<24x128xf32>
    %2 = tpu.iota {dimensions = array<i32: 1>} : vector<24x24xi32>
    %c17_i32 = arith.constant 17 : i32
    %3 = vector.broadcast %c17_i32 : i32 to vector<24x24xi32>
    %4 = arith.cmpi slt, %2, %3 : vector<24x24xi32>
    %c0_2 = arith.constant 0 : index
    %c0_3 = arith.constant 0 : index
    %c0_4 = arith.constant 0 : index
    %5 = vector.load %arg2[%c0_2, %c0_3, %c0_4] : memref<2x1x128xf32, #tpu.memory_space<vmem>>, vector<1x1x128xf32>
    %6 = vector.shape_cast %5 : vector<1x1x128xf32> to vector<1x128xf32>
    %c0_5 = arith.constant 0 : index
    %c0_6 = arith.constant 0 : index
    %c0_7 = arith.constant 0 : index
    %7 = vector.load %arg3[%c0_5, %c0_6, %c0_7] : memref<2x1x128xf32, #tpu.memory_space<vmem>>, vector<1x1x128xf32>
    %8 = vector.shape_cast %7 : vector<1x1x128xf32> to vector<1x128xf32>
    %9 = tpu.iota {dimensions = array<i32: 1>} : vector<24x128xi32>
    %c64_i32 = arith.constant 64 : i32
    %10 = vector.broadcast %c64_i32 : i32 to vector<24x128xi32>
    %11 = arith.cmpi slt, %9, %10 : vector<24x128xi32>
    %cst = arith.constant dense<0.000000e+00> : vector<24xf32>
    %12 = vector.multi_reduction <add>, %1, %cst [1] : vector<24x128xf32> to vector<24xf32>
    %13 = vector.shape_cast %12 : vector<24xf32> to vector<24x1xf32>
    %cst_8 = arith.constant 1.562500e-02 : f32
    %14 = vector.broadcast %cst_8 : f32 to vector<24x1xf32>
    %15 = arith.mulf %13, %14 : vector<24x1xf32>
    %16 = vector.broadcast %15 : vector<24x1xf32> to vector<24x128xf32>
    %17 = arith.subf %1, %16 : vector<24x128xf32>
    %cst_9 = arith.constant 0.000000e+00 : f32
    %18 = vector.broadcast %cst_9 : f32 to vector<24x128xf32>
    %19 = arith.select %11, %17, %18 : vector<24x128xi1>, vector<24x128xf32>
    %20 = arith.mulf %19, %19 : vector<24x128xf32>
    %cst_10 = arith.constant dense<0.000000e+00> : vector<24xf32>
    %21 = vector.multi_reduction <add>, %20, %cst_10 [1] : vector<24x128xf32> to vector<24xf32>
    %22 = vector.shape_cast %21 : vector<24xf32> to vector<24x1xf32>
    %cst_11 = arith.constant 1.562500e-02 : f32
    %23 = vector.broadcast %cst_11 : f32 to vector<24x1xf32>
    %24 = arith.mulf %22, %23 : vector<24x1xf32>
    %cst_12 = arith.constant 9.99999974E-6 : f32
    %25 = vector.broadcast %cst_12 : f32 to vector<24x1xf32>
    %26 = arith.addf %24, %25 : vector<24x1xf32>
    %27 = math.rsqrt %26 : vector<24x1xf32>
    %28 = vector.broadcast %27 : vector<24x1xf32> to vector<24x128xf32>
    %29 = arith.mulf %19, %28 : vector<24x128xf32>
    %30 = vector.broadcast %6 : vector<1x128xf32> to vector<24x128xf32>
    %31 = arith.mulf %29, %30 : vector<24x128xf32>
    %32 = vector.broadcast %8 : vector<1x128xf32> to vector<24x128xf32>
    %33 = arith.addf %31, %32 : vector<24x128xf32>
    %cst_13 = arith.constant 0.000000e+00 : f32
    %34 = vector.broadcast %cst_13 : f32 to vector<24x128xf32>
    %c0_14 = arith.constant 0 : index
    %c0_15 = arith.constant 0 : index
    %c0_16 = arith.constant 0 : index
    %c0_17 = arith.constant 0 : index
    %35 = vector.load %arg4[%c0_14, %c0_15, %c0_16, %c0_17] : memref<2x4x128x16xf32, #tpu.memory_space<vmem>>, vector<1x1x128x16xf32>
    %36 = vector.shape_cast %35 : vector<1x1x128x16xf32> to vector<128x16xf32>
    %cst_18 = arith.constant dense<0.000000e+00> : vector<24x16xf32>
    %37 = tpu.matmul %33, %36, %cst_18 {dimension_numbers = #tpu.dot_dimension_numbers<[1], [0], [0], [1], [0, 0, 1, 1], [], []>} : vector<24x128xf32>, vector<128x16xf32>, vector<24x16xf32> -> vector<24x16xf32>
    %cst_19 = arith.constant 2.500000e-01 : f32
    %38 = vector.broadcast %cst_19 : f32 to vector<24x16xf32>
    %39 = arith.mulf %37, %38 : vector<24x16xf32>
    %c0_20 = arith.constant 0 : index
    %c0_21 = arith.constant 0 : index
    %c0_22 = arith.constant 0 : index
    %c0_23 = arith.constant 0 : index
    %40 = vector.load %arg5[%c0_20, %c0_21, %c0_22, %c0_23] : memref<2x4x128x16xf32, #tpu.memory_space<vmem>>, vector<1x1x128x16xf32>
    %41 = vector.shape_cast %40 : vector<1x1x128x16xf32> to vector<128x16xf32>
    %cst_24 = arith.constant dense<0.000000e+00> : vector<24x16xf32>
    %42 = tpu.matmul %33, %41, %cst_24 {dimension_numbers = #tpu.dot_dimension_numbers<[1], [0], [0], [1], [0, 0, 1, 1], [], []>} : vector<24x128xf32>, vector<128x16xf32>, vector<24x16xf32> -> vector<24x16xf32>
    %c0_25 = arith.constant 0 : index
    %c0_26 = arith.constant 0 : index
    %c0_27 = arith.constant 0 : index
    %c0_28 = arith.constant 0 : index
    %43 = vector.load %arg6[%c0_25, %c0_26, %c0_27, %c0_28] : memref<2x4x128x16xf32, #tpu.memory_space<vmem>>, vector<1x1x128x16xf32>
    %44 = vector.shape_cast %43 : vector<1x1x128x16xf32> to vector<128x16xf32>
    %cst_29 = arith.constant dense<0.000000e+00> : vector<24x16xf32>
    %45 = tpu.matmul %33, %44, %cst_29 {dimension_numbers = #tpu.dot_dimension_numbers<[1], [0], [0], [1], [0, 0, 1, 1], [], []>} : vector<24x128xf32>, vector<128x16xf32>, vector<24x16xf32> -> vector<24x16xf32>
    %cst_30 = arith.constant dense<0.000000e+00> : vector<24x24xf32>
    %46 = tpu.matmul %39, %42, %cst_30 {dimension_numbers = #tpu.dot_dimension_numbers<[1], [1], [0], [0], [0, 0, 1, 0], [], []>} : vector<24x16xf32>, vector<24x16xf32>, vector<24x24xf32> -> vector<24x24xf32>
    %cst_31 = arith.constant -1.000000e+30 : f32
    %47 = vector.broadcast %cst_31 : f32 to vector<24x24xf32>
    %48 = arith.select %4, %46, %47 : vector<24x24xi1>, vector<24x24xf32>
    %cst_32 = arith.constant dense<0xFF800000> : vector<24xf32>
    %49 = vector.multi_reduction <maximumf>, %48, %cst_32 [1] : vector<24x24xf32> to vector<24xf32>
    %50 = vector.shape_cast %49 : vector<24xf32> to vector<24x1xf32>
    %51 = vector.broadcast %50 : vector<24x1xf32> to vector<24x24xf32>
    %52 = arith.subf %48, %51 : vector<24x24xf32>
    %53 = math.exp %52 : vector<24x24xf32>
    %cst_33 = arith.constant dense<0.000000e+00> : vector<24xf32>
    %54 = vector.multi_reduction <add>, %53, %cst_33 [1] : vector<24x24xf32> to vector<24xf32>
    %55 = vector.shape_cast %54 : vector<24xf32> to vector<24x1xf32>
    %56 = tpu.reciprocal %55 {approx = true} : vector<24x1xf32> -> vector<24x1xf32>
    %57 = vector.broadcast %56 : vector<24x1xf32> to vector<24x24xf32>
    %58 = arith.mulf %53, %57 : vector<24x24xf32>
    %cst_34 = arith.constant dense<0.000000e+00> : vector<24x16xf32>
    %59 = tpu.matmul %58, %45, %cst_34 {dimension_numbers = #tpu.dot_dimension_numbers<[1], [0], [0], [1], [0, 0, 1, 1], [], []>} : vector<24x24xf32>, vector<24x16xf32>, vector<24x16xf32> -> vector<24x16xf32>
    %c0_35 = arith.constant 0 : index
    %c0_36 = arith.constant 0 : index
    %c0_37 = arith.constant 0 : index
    %c0_38 = arith.constant 0 : index
    %60 = vector.load %arg7[%c0_35, %c0_36, %c0_37, %c0_38] : memref<2x4x16x128xf32, #tpu.memory_space<vmem>>, vector<1x1x16x128xf32>
    %61 = vector.shape_cast %60 : vector<1x1x16x128xf32> to vector<16x128xf32>
    %cst_39 = arith.constant dense<0.000000e+00> : vector<24x128xf32>
    %62 = tpu.matmul %59, %61, %cst_39 {dimension_numbers = #tpu.dot_dimension_numbers<[1], [0], [0], [1], [0, 0, 1, 1], [], []>} : vector<24x16xf32>, vector<16x128xf32>, vector<24x128xf32> -> vector<24x128xf32>
    %63 = arith.addf %34, %62 : vector<24x128xf32>
    %c0_40 = arith.constant 0 : index
    %c1 = arith.constant 1 : index
    %c0_41 = arith.constant 0 : index
    %c0_42 = arith.constant 0 : index
    %64 = vector.load %arg4[%c0_40, %c1, %c0_41, %c0_42] : memref<2x4x128x16xf32, #tpu.memory_space<vmem>>, vector<1x1x128x16xf32>
    %65 = vector.shape_cast %64 : vector<1x1x128x16xf32> to vector<128x16xf32>
    %cst_43 = arith.constant dense<0.000000e+00> : vector<24x16xf32>
    %66 = tpu.matmul %33, %65, %cst_43 {dimension_numbers = #tpu.dot_dimension_numbers<[1], [0], [0], [1], [0, 0, 1, 1], [], []>} : vector<24x128xf32>, vector<128x16xf32>, vector<24x16xf32> -> vector<24x16xf32>
    %cst_44 = arith.constant 2.500000e-01 : f32
    %67 = vector.broadcast %cst_44 : f32 to vector<24x16xf32>
    %68 = arith.mulf %66, %67 : vector<24x16xf32>
    %c0_45 = arith.constant 0 : index
    %c1_46 = arith.constant 1 : index
    %c0_47 = arith.constant 0 : index
    %c0_48 = arith.constant 0 : index
    %69 = vector.load %arg5[%c0_45, %c1_46, %c0_47, %c0_48] : memref<2x4x128x16xf32, #tpu.memory_space<vmem>>, vector<1x1x128x16xf32>
    %70 = vector.shape_cast %69 : vector<1x1x128x16xf32> to vector<128x16xf32>
    %cst_49 = arith.constant dense<0.000000e+00> : vector<24x16xf32>
    %71 = tpu.matmul %33, %70, %cst_49 {dimension_numbers = #tpu.dot_dimension_numbers<[1], [0], [0], [1], [0, 0, 1, 1], [], []>} : vector<24x128xf32>, vector<128x16xf32>, vector<24x16xf32> -> vector<24x16xf32>
    %c0_50 = arith.constant 0 : index
    %c1_51 = arith.constant 1 : index
    %c0_52 = arith.constant 0 : index
    %c0_53 = arith.constant 0 : index
    %72 = vector.load %arg6[%c0_50, %c1_51, %c0_52, %c0_53] : memref<2x4x128x16xf32, #tpu.memory_space<vmem>>, vector<1x1x128x16xf32>
    %73 = vector.shape_cast %72 : vector<1x1x128x16xf32> to vector<128x16xf32>
    %cst_54 = arith.constant dense<0.000000e+00> : vector<24x16xf32>
    %74 = tpu.matmul %33, %73, %cst_54 {dimension_numbers = #tpu.dot_dimension_numbers<[1], [0], [0], [1], [0, 0, 1, 1], [], []>} : vector<24x128xf32>, vector<128x16xf32>, vector<24x16xf32> -> vector<24x16xf32>
    %cst_55 = arith.constant dense<0.000000e+00> : vector<24x24xf32>
    %75 = tpu.matmul %68, %71, %cst_55 {dimension_numbers = #tpu.dot_dimension_numbers<[1], [1], [0], [0], [0, 0, 1, 0], [], []>} : vector<24x16xf32>, vector<24x16xf32>, vector<24x24xf32> -> vector<24x24xf32>
    %cst_56 = arith.constant -1.000000e+30 : f32
    %76 = vector.broadcast %cst_56 : f32 to vector<24x24xf32>
    %77 = arith.select %4, %75, %76 : vector<24x24xi1>, vector<24x24xf32>
    %cst_57 = arith.constant dense<0xFF800000> : vector<24xf32>
    %78 = vector.multi_reduction <maximumf>, %77, %cst_57 [1] : vector<24x24xf32> to vector<24xf32>
    %79 = vector.shape_cast %78 : vector<24xf32> to vector<24x1xf32>
    %80 = vector.broadcast %79 : vector<24x1xf32> to vector<24x24xf32>
    %81 = arith.subf %77, %80 : vector<24x24xf32>
    %82 = math.exp %81 : vector<24x24xf32>
    %cst_58 = arith.constant dense<0.000000e+00> : vector<24xf32>
    %83 = vector.multi_reduction <add>, %82, %cst_58 [1] : vector<24x24xf32> to vector<24xf32>
    %84 = vector.shape_cast %83 : vector<24xf32> to vector<24x1xf32>
    %85 = tpu.reciprocal %84 {approx = true} : vector<24x1xf32> -> vector<24x1xf32>
    %86 = vector.broadcast %85 : vector<24x1xf32> to vector<24x24xf32>
    %87 = arith.mulf %82, %86 : vector<24x24xf32>
    %cst_59 = arith.constant dense<0.000000e+00> : vector<24x16xf32>
    %88 = tpu.matmul %87, %74, %cst_59 {dimension_numbers = #tpu.dot_dimension_numbers<[1], [0], [0], [1], [0, 0, 1, 1], [], []>} : vector<24x24xf32>, vector<24x16xf32>, vector<24x16xf32> -> vector<24x16xf32>
    %c0_60 = arith.constant 0 : index
    %c1_61 = arith.constant 1 : index
    %c0_62 = arith.constant 0 : index
    %c0_63 = arith.constant 0 : index
    %89 = vector.load %arg7[%c0_60, %c1_61, %c0_62, %c0_63] : memref<2x4x16x128xf32, #tpu.memory_space<vmem>>, vector<1x1x16x128xf32>
    %90 = vector.shape_cast %89 : vector<1x1x16x128xf32> to vector<16x128xf32>
    %cst_64 = arith.constant dense<0.000000e+00> : vector<24x128xf32>
    %91 = tpu.matmul %88, %90, %cst_64 {dimension_numbers = #tpu.dot_dimension_numbers<[1], [0], [0], [1], [0, 0, 1, 1], [], []>} : vector<24x16xf32>, vector<16x128xf32>, vector<24x128xf32> -> vector<24x128xf32>
    %92 = arith.addf %63, %91 : vector<24x128xf32>
    %c0_65 = arith.constant 0 : index
    %c2 = arith.constant 2 : index
    %c0_66 = arith.constant 0 : index
    %c0_67 = arith.constant 0 : index
    %93 = vector.load %arg4[%c0_65, %c2, %c0_66, %c0_67] : memref<2x4x128x16xf32, #tpu.memory_space<vmem>>, vector<1x1x128x16xf32>
    %94 = vector.shape_cast %93 : vector<1x1x128x16xf32> to vector<128x16xf32>
    %cst_68 = arith.constant dense<0.000000e+00> : vector<24x16xf32>
    %95 = tpu.matmul %33, %94, %cst_68 {dimension_numbers = #tpu.dot_dimension_numbers<[1], [0], [0], [1], [0, 0, 1, 1], [], []>} : vector<24x128xf32>, vector<128x16xf32>, vector<24x16xf32> -> vector<24x16xf32>
    %cst_69 = arith.constant 2.500000e-01 : f32
    %96 = vector.broadcast %cst_69 : f32 to vector<24x16xf32>
    %97 = arith.mulf %95, %96 : vector<24x16xf32>
    %c0_70 = arith.constant 0 : index
    %c2_71 = arith.constant 2 : index
    %c0_72 = arith.constant 0 : index
    %c0_73 = arith.constant 0 : index
    %98 = vector.load %arg5[%c0_70, %c2_71, %c0_72, %c0_73] : memref<2x4x128x16xf32, #tpu.memory_space<vmem>>, vector<1x1x128x16xf32>
    %99 = vector.shape_cast %98 : vector<1x1x128x16xf32> to vector<128x16xf32>
    %cst_74 = arith.constant dense<0.000000e+00> : vector<24x16xf32>
    %100 = tpu.matmul %33, %99, %cst_74 {dimension_numbers = #tpu.dot_dimension_numbers<[1], [0], [0], [1], [0, 0, 1, 1], [], []>} : vector<24x128xf32>, vector<128x16xf32>, vector<24x16xf32> -> vector<24x16xf32>
    %c0_75 = arith.constant 0 : index
    %c2_76 = arith.constant 2 : index
    %c0_77 = arith.constant 0 : index
    %c0_78 = arith.constant 0 : index
    %101 = vector.load %arg6[%c0_75, %c2_76, %c0_77, %c0_78] : memref<2x4x128x16xf32, #tpu.memory_space<vmem>>, vector<1x1x128x16xf32>
    %102 = vector.shape_cast %101 : vector<1x1x128x16xf32> to vector<128x16xf32>
    %cst_79 = arith.constant dense<0.000000e+00> : vector<24x16xf32>
    %103 = tpu.matmul %33, %102, %cst_79 {dimension_numbers = #tpu.dot_dimension_numbers<[1], [0], [0], [1], [0, 0, 1, 1], [], []>} : vector<24x128xf32>, vector<128x16xf32>, vector<24x16xf32> -> vector<24x16xf32>
    %cst_80 = arith.constant dense<0.000000e+00> : vector<24x24xf32>
    %104 = tpu.matmul %97, %100, %cst_80 {dimension_numbers = #tpu.dot_dimension_numbers<[1], [1], [0], [0], [0, 0, 1, 0], [], []>} : vector<24x16xf32>, vector<24x16xf32>, vector<24x24xf32> -> vector<24x24xf32>
    %cst_81 = arith.constant -1.000000e+30 : f32
    %105 = vector.broadcast %cst_81 : f32 to vector<24x24xf32>
    %106 = arith.select %4, %104, %105 : vector<24x24xi1>, vector<24x24xf32>
    %cst_82 = arith.constant dense<0xFF800000> : vector<24xf32>
    %107 = vector.multi_reduction <maximumf>, %106, %cst_82 [1] : vector<24x24xf32> to vector<24xf32>
    %108 = vector.shape_cast %107 : vector<24xf32> to vector<24x1xf32>
    %109 = vector.broadcast %108 : vector<24x1xf32> to vector<24x24xf32>
    %110 = arith.subf %106, %109 : vector<24x24xf32>
    %111 = math.exp %110 : vector<24x24xf32>
    %cst_83 = arith.constant dense<0.000000e+00> : vector<24xf32>
    %112 = vector.multi_reduction <add>, %111, %cst_83 [1] : vector<24x24xf32> to vector<24xf32>
    %113 = vector.shape_cast %112 : vector<24xf32> to vector<24x1xf32>
    %114 = tpu.reciprocal %113 {approx = true} : vector<24x1xf32> -> vector<24x1xf32>
    %115 = vector.broadcast %114 : vector<24x1xf32> to vector<24x24xf32>
    %116 = arith.mulf %111, %115 : vector<24x24xf32>
    %cst_84 = arith.constant dense<0.000000e+00> : vector<24x16xf32>
    %117 = tpu.matmul %116, %103, %cst_84 {dimension_numbers = #tpu.dot_dimension_numbers<[1], [0], [0], [1], [0, 0, 1, 1], [], []>} : vector<24x24xf32>, vector<24x16xf32>, vector<24x16xf32> -> vector<24x16xf32>
    %c0_85 = arith.constant 0 : index
    %c2_86 = arith.constant 2 : index
    %c0_87 = arith.constant 0 : index
    %c0_88 = arith.constant 0 : index
    %118 = vector.load %arg7[%c0_85, %c2_86, %c0_87, %c0_88] : memref<2x4x16x128xf32, #tpu.memory_space<vmem>>, vector<1x1x16x128xf32>
    %119 = vector.shape_cast %118 : vector<1x1x16x128xf32> to vector<16x128xf32>
    %cst_89 = arith.constant dense<0.000000e+00> : vector<24x128xf32>
    %120 = tpu.matmul %117, %119, %cst_89 {dimension_numbers = #tpu.dot_dimension_numbers<[1], [0], [0], [1], [0, 0, 1, 1], [], []>} : vector<24x16xf32>, vector<16x128xf32>, vector<24x128xf32> -> vector<24x128xf32>
    %121 = arith.addf %92, %120 : vector<24x128xf32>
    %c0_90 = arith.constant 0 : index
    %c3 = arith.constant 3 : index
    %c0_91 = arith.constant 0 : index
    %c0_92 = arith.constant 0 : index
    %122 = vector.load %arg4[%c0_90, %c3, %c0_91, %c0_92] : memref<2x4x128x16xf32, #tpu.memory_space<vmem>>, vector<1x1x128x16xf32>
    %123 = vector.shape_cast %122 : vector<1x1x128x16xf32> to vector<128x16xf32>
    %cst_93 = arith.constant dense<0.000000e+00> : vector<24x16xf32>
    %124 = tpu.matmul %33, %123, %cst_93 {dimension_numbers = #tpu.dot_dimension_numbers<[1], [0], [0], [1], [0, 0, 1, 1], [], []>} : vector<24x128xf32>, vector<128x16xf32>, vector<24x16xf32> -> vector<24x16xf32>
    %cst_94 = arith.constant 2.500000e-01 : f32
    %125 = vector.broadcast %cst_94 : f32 to vector<24x16xf32>
    %126 = arith.mulf %124, %125 : vector<24x16xf32>
    %c0_95 = arith.constant 0 : index
    %c3_96 = arith.constant 3 : index
    %c0_97 = arith.constant 0 : index
    %c0_98 = arith.constant 0 : index
    %127 = vector.load %arg5[%c0_95, %c3_96, %c0_97, %c0_98] : memref<2x4x128x16xf32, #tpu.memory_space<vmem>>, vector<1x1x128x16xf32>
    %128 = vector.shape_cast %127 : vector<1x1x128x16xf32> to vector<128x16xf32>
    %cst_99 = arith.constant dense<0.000000e+00> : vector<24x16xf32>
    %129 = tpu.matmul %33, %128, %cst_99 {dimension_numbers = #tpu.dot_dimension_numbers<[1], [0], [0], [1], [0, 0, 1, 1], [], []>} : vector<24x128xf32>, vector<128x16xf32>, vector<24x16xf32> -> vector<24x16xf32>
    %c0_100 = arith.constant 0 : index
    %c3_101 = arith.constant 3 : index
    %c0_102 = arith.constant 0 : index
    %c0_103 = arith.constant 0 : index
    %130 = vector.load %arg6[%c0_100, %c3_101, %c0_102, %c0_103] : memref<2x4x128x16xf32, #tpu.memory_space<vmem>>, vector<1x1x128x16xf32>
    %131 = vector.shape_cast %130 : vector<1x1x128x16xf32> to vector<128x16xf32>
    %cst_104 = arith.constant dense<0.000000e+00> : vector<24x16xf32>
    %132 = tpu.matmul %33, %131, %cst_104 {dimension_numbers = #tpu.dot_dimension_numbers<[1], [0], [0], [1], [0, 0, 1, 1], [], []>} : vector<24x128xf32>, vector<128x16xf32>, vector<24x16xf32> -> vector<24x16xf32>
    %cst_105 = arith.constant dense<0.000000e+00> : vector<24x24xf32>
    %133 = tpu.matmul %126, %129, %cst_105 {dimension_numbers = #tpu.dot_dimension_numbers<[1], [1], [0], [0], [0, 0, 1, 0], [], []>} : vector<24x16xf32>, vector<24x16xf32>, vector<24x24xf32> -> vector<24x24xf32>
    %cst_106 = arith.constant -1.000000e+30 : f32
    %134 = vector.broadcast %cst_106 : f32 to vector<24x24xf32>
    %135 = arith.select %4, %133, %134 : vector<24x24xi1>, vector<24x24xf32>
    %cst_107 = arith.constant dense<0xFF800000> : vector<24xf32>
    %136 = vector.multi_reduction <maximumf>, %135, %cst_107 [1] : vector<24x24xf32> to vector<24xf32>
    %137 = vector.shape_cast %136 : vector<24xf32> to vector<24x1xf32>
    %138 = vector.broadcast %137 : vector<24x1xf32> to vector<24x24xf32>
    %139 = arith.subf %135, %138 : vector<24x24xf32>
    %140 = math.exp %139 : vector<24x24xf32>
    %cst_108 = arith.constant dense<0.000000e+00> : vector<24xf32>
    %141 = vector.multi_reduction <add>, %140, %cst_108 [1] : vector<24x24xf32> to vector<24xf32>
    %142 = vector.shape_cast %141 : vector<24xf32> to vector<24x1xf32>
    %143 = tpu.reciprocal %142 {approx = true} : vector<24x1xf32> -> vector<24x1xf32>
    %144 = vector.broadcast %143 : vector<24x1xf32> to vector<24x24xf32>
    %145 = arith.mulf %140, %144 : vector<24x24xf32>
    %cst_109 = arith.constant dense<0.000000e+00> : vector<24x16xf32>
    %146 = tpu.matmul %145, %132, %cst_109 {dimension_numbers = #tpu.dot_dimension_numbers<[1], [0], [0], [1], [0, 0, 1, 1], [], []>} : vector<24x24xf32>, vector<24x16xf32>, vector<24x16xf32> -> vector<24x16xf32>
    %c0_110 = arith.constant 0 : index
    %c3_111 = arith.constant 3 : index
    %c0_112 = arith.constant 0 : index
    %c0_113 = arith.constant 0 : index
    %147 = vector.load %arg7[%c0_110, %c3_111, %c0_112, %c0_113] : memref<2x4x16x128xf32, #tpu.memory_space<vmem>>, vector<1x1x16x128xf32>
    %148 = vector.shape_cast %147 : vector<1x1x16x128xf32> to vector<16x128xf32>
    %cst_114 = arith.constant dense<0.000000e+00> : vector<24x128xf32>
    %149 = tpu.matmul %146, %148, %cst_114 {dimension_numbers = #tpu.dot_dimension_numbers<[1], [0], [0], [1], [0, 0, 1, 1], [], []>} : vector<24x16xf32>, vector<16x128xf32>, vector<24x128xf32> -> vector<24x128xf32>
    %150 = arith.addf %121, %149 : vector<24x128xf32>
    %151 = arith.addf %1, %150 : vector<24x128xf32>
    %c0_115 = arith.constant 0 : index
    %c0_116 = arith.constant 0 : index
    %c0_117 = arith.constant 0 : index
    %152 = vector.load %arg8[%c0_115, %c0_116, %c0_117] : memref<2x1x128xf32, #tpu.memory_space<vmem>>, vector<1x1x128xf32>
    %153 = vector.shape_cast %152 : vector<1x1x128xf32> to vector<1x128xf32>
    %154 = vector.broadcast %153 : vector<1x128xf32> to vector<24x128xf32>
    %155 = arith.addf %151, %154 : vector<24x128xf32>
    %c0_118 = arith.constant 0 : index
    %c0_119 = arith.constant 0 : index
    %c0_120 = arith.constant 0 : index
    %156 = vector.load %arg9[%c0_118, %c0_119, %c0_120] : memref<2x1x128xf32, #tpu.memory_space<vmem>>, vector<1x1x128xf32>
    %157 = vector.shape_cast %156 : vector<1x1x128xf32> to vector<1x128xf32>
    %c0_121 = arith.constant 0 : index
    %c0_122 = arith.constant 0 : index
    %c0_123 = arith.constant 0 : index
    %158 = vector.load %arg10[%c0_121, %c0_122, %c0_123] : memref<2x1x128xf32, #tpu.memory_space<vmem>>, vector<1x1x128xf32>
    %159 = vector.shape_cast %158 : vector<1x1x128xf32> to vector<1x128xf32>
    %160 = tpu.iota {dimensions = array<i32: 1>} : vector<24x128xi32>
    %c64_i32_124 = arith.constant 64 : i32
    %161 = vector.broadcast %c64_i32_124 : i32 to vector<24x128xi32>
    %162 = arith.cmpi slt, %160, %161 : vector<24x128xi32>
    %cst_125 = arith.constant dense<0.000000e+00> : vector<24xf32>
    %163 = vector.multi_reduction <add>, %155, %cst_125 [1] : vector<24x128xf32> to vector<24xf32>
    %164 = vector.shape_cast %163 : vector<24xf32> to vector<24x1xf32>
    %cst_126 = arith.constant 1.562500e-02 : f32
    %165 = vector.broadcast %cst_126 : f32 to vector<24x1xf32>
    %166 = arith.mulf %164, %165 : vector<24x1xf32>
    %167 = vector.broadcast %166 : vector<24x1xf32> to vector<24x128xf32>
    %168 = arith.subf %155, %167 : vector<24x128xf32>
    %cst_127 = arith.constant 0.000000e+00 : f32
    %169 = vector.broadcast %cst_127 : f32 to vector<24x128xf32>
    %170 = arith.select %162, %168, %169 : vector<24x128xi1>, vector<24x128xf32>
    %171 = arith.mulf %170, %170 : vector<24x128xf32>
    %cst_128 = arith.constant dense<0.000000e+00> : vector<24xf32>
    %172 = vector.multi_reduction <add>, %171, %cst_128 [1] : vector<24x128xf32> to vector<24xf32>
    %173 = vector.shape_cast %172 : vector<24xf32> to vector<24x1xf32>
    %cst_129 = arith.constant 1.562500e-02 : f32
    %174 = vector.broadcast %cst_129 : f32 to vector<24x1xf32>
    %175 = arith.mulf %173, %174 : vector<24x1xf32>
    %cst_130 = arith.constant 9.99999974E-6 : f32
    %176 = vector.broadcast %cst_130 : f32 to vector<24x1xf32>
    %177 = arith.addf %175, %176 : vector<24x1xf32>
    %178 = math.rsqrt %177 : vector<24x1xf32>
    %179 = vector.broadcast %178 : vector<24x1xf32> to vector<24x128xf32>
    %180 = arith.mulf %170, %179 : vector<24x128xf32>
    %181 = vector.broadcast %157 : vector<1x128xf32> to vector<24x128xf32>
    %182 = arith.mulf %180, %181 : vector<24x128xf32>
    %183 = vector.broadcast %159 : vector<1x128xf32> to vector<24x128xf32>
    %184 = arith.addf %182, %183 : vector<24x128xf32>
    %c0_131 = arith.constant 0 : index
    %c0_132 = arith.constant 0 : index
    %c0_133 = arith.constant 0 : index
    %185 = vector.load %arg11[%c0_131, %c0_132, %c0_133] : memref<2x128x128xf32, #tpu.memory_space<vmem>>, vector<1x128x128xf32>
    %186 = vector.shape_cast %185 : vector<1x128x128xf32> to vector<128x128xf32>
    %cst_134 = arith.constant dense<0.000000e+00> : vector<24x128xf32>
    %187 = tpu.matmul %184, %186, %cst_134 {dimension_numbers = #tpu.dot_dimension_numbers<[1], [0], [0], [1], [0, 0, 1, 1], [], []>} : vector<24x128xf32>, vector<128x128xf32>, vector<24x128xf32> -> vector<24x128xf32>
    %c0_135 = arith.constant 0 : index
    %c0_136 = arith.constant 0 : index
    %c0_137 = arith.constant 0 : index
    %188 = vector.load %arg12[%c0_135, %c0_136, %c0_137] : memref<2x1x128xf32, #tpu.memory_space<vmem>>, vector<1x1x128xf32>
    %189 = vector.shape_cast %188 : vector<1x1x128xf32> to vector<1x128xf32>
    %190 = vector.broadcast %189 : vector<1x128xf32> to vector<24x128xf32>
    %191 = arith.addf %187, %190 : vector<24x128xf32>
    %192 = arith.mulf %191, %191 : vector<24x128xf32>
    %193 = arith.mulf %191, %192 : vector<24x128xf32>
    %cst_138 = arith.constant 4.471500e-02 : f32
    %194 = vector.broadcast %cst_138 : f32 to vector<24x128xf32>
    %195 = arith.mulf %194, %193 : vector<24x128xf32>
    %196 = arith.addf %191, %195 : vector<24x128xf32>
    %cst_139 = arith.constant 0.797884583 : f32
    %197 = vector.broadcast %cst_139 : f32 to vector<24x128xf32>
    %198 = arith.mulf %197, %196 : vector<24x128xf32>
    %199 = math.tanh %198 : vector<24x128xf32>
    %cst_140 = arith.constant 1.000000e+00 : f32
    %200 = vector.broadcast %cst_140 : f32 to vector<24x128xf32>
    %201 = arith.addf %200, %199 : vector<24x128xf32>
    %cst_141 = arith.constant 5.000000e-01 : f32
    %202 = vector.broadcast %cst_141 : f32 to vector<24x128xf32>
    %203 = arith.mulf %202, %201 : vector<24x128xf32>
    %204 = arith.mulf %191, %203 : vector<24x128xf32>
    %c0_142 = arith.constant 0 : index
    %c0_143 = arith.constant 0 : index
    %c0_144 = arith.constant 0 : index
    %205 = vector.load %arg13[%c0_142, %c0_143, %c0_144] : memref<2x128x128xf32, #tpu.memory_space<vmem>>, vector<1x128x128xf32>
    %206 = vector.shape_cast %205 : vector<1x128x128xf32> to vector<128x128xf32>
    %cst_145 = arith.constant dense<0.000000e+00> : vector<24x128xf32>
    %207 = tpu.matmul %204, %206, %cst_145 {dimension_numbers = #tpu.dot_dimension_numbers<[1], [0], [0], [1], [0, 0, 1, 1], [], []>} : vector<24x128xf32>, vector<128x128xf32>, vector<24x128xf32> -> vector<24x128xf32>
    %c0_146 = arith.constant 0 : index
    %c0_147 = arith.constant 0 : index
    %c0_148 = arith.constant 0 : index
    %208 = vector.load %arg14[%c0_146, %c0_147, %c0_148] : memref<2x1x128xf32, #tpu.memory_space<vmem>>, vector<1x1x128xf32>
    %209 = vector.shape_cast %208 : vector<1x1x128xf32> to vector<1x128xf32>
    %210 = vector.broadcast %209 : vector<1x128xf32> to vector<24x128xf32>
    %211 = arith.addf %207, %210 : vector<24x128xf32>
    %212 = arith.addf %184, %211 : vector<24x128xf32>
    %c1_149 = arith.constant 1 : index
    %c0_150 = arith.constant 0 : index
    %c0_151 = arith.constant 0 : index
    %213 = vector.load %arg2[%c1_149, %c0_150, %c0_151] : memref<2x1x128xf32, #tpu.memory_space<vmem>>, vector<1x1x128xf32>
    %214 = vector.shape_cast %213 : vector<1x1x128xf32> to vector<1x128xf32>
    %c1_152 = arith.constant 1 : index
    %c0_153 = arith.constant 0 : index
    %c0_154 = arith.constant 0 : index
    %215 = vector.load %arg3[%c1_152, %c0_153, %c0_154] : memref<2x1x128xf32, #tpu.memory_space<vmem>>, vector<1x1x128xf32>
    %216 = vector.shape_cast %215 : vector<1x1x128xf32> to vector<1x128xf32>
    %217 = tpu.iota {dimensions = array<i32: 1>} : vector<24x128xi32>
    %c64_i32_155 = arith.constant 64 : i32
    %218 = vector.broadcast %c64_i32_155 : i32 to vector<24x128xi32>
    %219 = arith.cmpi slt, %217, %218 : vector<24x128xi32>
    %cst_156 = arith.constant dense<0.000000e+00> : vector<24xf32>
    %220 = vector.multi_reduction <add>, %212, %cst_156 [1] : vector<24x128xf32> to vector<24xf32>
    %221 = vector.shape_cast %220 : vector<24xf32> to vector<24x1xf32>
    %cst_157 = arith.constant 1.562500e-02 : f32
    %222 = vector.broadcast %cst_157 : f32 to vector<24x1xf32>
    %223 = arith.mulf %221, %222 : vector<24x1xf32>
    %224 = vector.broadcast %223 : vector<24x1xf32> to vector<24x128xf32>
    %225 = arith.subf %212, %224 : vector<24x128xf32>
    %cst_158 = arith.constant 0.000000e+00 : f32
    %226 = vector.broadcast %cst_158 : f32 to vector<24x128xf32>
    %227 = arith.select %219, %225, %226 : vector<24x128xi1>, vector<24x128xf32>
    %228 = arith.mulf %227, %227 : vector<24x128xf32>
    %cst_159 = arith.constant dense<0.000000e+00> : vector<24xf32>
    %229 = vector.multi_reduction <add>, %228, %cst_159 [1] : vector<24x128xf32> to vector<24xf32>
    %230 = vector.shape_cast %229 : vector<24xf32> to vector<24x1xf32>
    %cst_160 = arith.constant 1.562500e-02 : f32
    %231 = vector.broadcast %cst_160 : f32 to vector<24x1xf32>
    %232 = arith.mulf %230, %231 : vector<24x1xf32>
    %cst_161 = arith.constant 9.99999974E-6 : f32
    %233 = vector.broadcast %cst_161 : f32 to vector<24x1xf32>
    %234 = arith.addf %232, %233 : vector<24x1xf32>
    %235 = math.rsqrt %234 : vector<24x1xf32>
    %236 = vector.broadcast %235 : vector<24x1xf32> to vector<24x128xf32>
    %237 = arith.mulf %227, %236 : vector<24x128xf32>
    %238 = vector.broadcast %214 : vector<1x128xf32> to vector<24x128xf32>
    %239 = arith.mulf %237, %238 : vector<24x128xf32>
    %240 = vector.broadcast %216 : vector<1x128xf32> to vector<24x128xf32>
    %241 = arith.addf %239, %240 : vector<24x128xf32>
    %cst_162 = arith.constant 0.000000e+00 : f32
    %242 = vector.broadcast %cst_162 : f32 to vector<24x128xf32>
    %c1_163 = arith.constant 1 : index
    %c0_164 = arith.constant 0 : index
    %c0_165 = arith.constant 0 : index
    %c0_166 = arith.constant 0 : index
    %243 = vector.load %arg4[%c1_163, %c0_164, %c0_165, %c0_166] : memref<2x4x128x16xf32, #tpu.memory_space<vmem>>, vector<1x1x128x16xf32>
    %244 = vector.shape_cast %243 : vector<1x1x128x16xf32> to vector<128x16xf32>
    %cst_167 = arith.constant dense<0.000000e+00> : vector<24x16xf32>
    %245 = tpu.matmul %241, %244, %cst_167 {dimension_numbers = #tpu.dot_dimension_numbers<[1], [0], [0], [1], [0, 0, 1, 1], [], []>} : vector<24x128xf32>, vector<128x16xf32>, vector<24x16xf32> -> vector<24x16xf32>
    %cst_168 = arith.constant 2.500000e-01 : f32
    %246 = vector.broadcast %cst_168 : f32 to vector<24x16xf32>
    %247 = arith.mulf %245, %246 : vector<24x16xf32>
    %c1_169 = arith.constant 1 : index
    %c0_170 = arith.constant 0 : index
    %c0_171 = arith.constant 0 : index
    %c0_172 = arith.constant 0 : index
    %248 = vector.load %arg5[%c1_169, %c0_170, %c0_171, %c0_172] : memref<2x4x128x16xf32, #tpu.memory_space<vmem>>, vector<1x1x128x16xf32>
    %249 = vector.shape_cast %248 : vector<1x1x128x16xf32> to vector<128x16xf32>
    %cst_173 = arith.constant dense<0.000000e+00> : vector<24x16xf32>
    %250 = tpu.matmul %241, %249, %cst_173 {dimension_numbers = #tpu.dot_dimension_numbers<[1], [0], [0], [1], [0, 0, 1, 1], [], []>} : vector<24x128xf32>, vector<128x16xf32>, vector<24x16xf32> -> vector<24x16xf32>
    %c1_174 = arith.constant 1 : index
    %c0_175 = arith.constant 0 : index
    %c0_176 = arith.constant 0 : index
    %c0_177 = arith.constant 0 : index
    %251 = vector.load %arg6[%c1_174, %c0_175, %c0_176, %c0_177] : memref<2x4x128x16xf32, #tpu.memory_space<vmem>>, vector<1x1x128x16xf32>
    %252 = vector.shape_cast %251 : vector<1x1x128x16xf32> to vector<128x16xf32>
    %cst_178 = arith.constant dense<0.000000e+00> : vector<24x16xf32>
    %253 = tpu.matmul %241, %252, %cst_178 {dimension_numbers = #tpu.dot_dimension_numbers<[1], [0], [0], [1], [0, 0, 1, 1], [], []>} : vector<24x128xf32>, vector<128x16xf32>, vector<24x16xf32> -> vector<24x16xf32>
    %cst_179 = arith.constant dense<0.000000e+00> : vector<24x24xf32>
    %254 = tpu.matmul %247, %250, %cst_179 {dimension_numbers = #tpu.dot_dimension_numbers<[1], [1], [0], [0], [0, 0, 1, 0], [], []>} : vector<24x16xf32>, vector<24x16xf32>, vector<24x24xf32> -> vector<24x24xf32>
    %cst_180 = arith.constant -1.000000e+30 : f32
    %255 = vector.broadcast %cst_180 : f32 to vector<24x24xf32>
    %256 = arith.select %4, %254, %255 : vector<24x24xi1>, vector<24x24xf32>
    %cst_181 = arith.constant dense<0xFF800000> : vector<24xf32>
    %257 = vector.multi_reduction <maximumf>, %256, %cst_181 [1] : vector<24x24xf32> to vector<24xf32>
    %258 = vector.shape_cast %257 : vector<24xf32> to vector<24x1xf32>
    %259 = vector.broadcast %258 : vector<24x1xf32> to vector<24x24xf32>
    %260 = arith.subf %256, %259 : vector<24x24xf32>
    %261 = math.exp %260 : vector<24x24xf32>
    %cst_182 = arith.constant dense<0.000000e+00> : vector<24xf32>
    %262 = vector.multi_reduction <add>, %261, %cst_182 [1] : vector<24x24xf32> to vector<24xf32>
    %263 = vector.shape_cast %262 : vector<24xf32> to vector<24x1xf32>
    %264 = tpu.reciprocal %263 {approx = true} : vector<24x1xf32> -> vector<24x1xf32>
    %265 = vector.broadcast %264 : vector<24x1xf32> to vector<24x24xf32>
    %266 = arith.mulf %261, %265 : vector<24x24xf32>
    %cst_183 = arith.constant dense<0.000000e+00> : vector<24x16xf32>
    %267 = tpu.matmul %266, %253, %cst_183 {dimension_numbers = #tpu.dot_dimension_numbers<[1], [0], [0], [1], [0, 0, 1, 1], [], []>} : vector<24x24xf32>, vector<24x16xf32>, vector<24x16xf32> -> vector<24x16xf32>
    %c1_184 = arith.constant 1 : index
    %c0_185 = arith.constant 0 : index
    %c0_186 = arith.constant 0 : index
    %c0_187 = arith.constant 0 : index
    %268 = vector.load %arg7[%c1_184, %c0_185, %c0_186, %c0_187] : memref<2x4x16x128xf32, #tpu.memory_space<vmem>>, vector<1x1x16x128xf32>
    %269 = vector.shape_cast %268 : vector<1x1x16x128xf32> to vector<16x128xf32>
    %cst_188 = arith.constant dense<0.000000e+00> : vector<24x128xf32>
    %270 = tpu.matmul %267, %269, %cst_188 {dimension_numbers = #tpu.dot_dimension_numbers<[1], [0], [0], [1], [0, 0, 1, 1], [], []>} : vector<24x16xf32>, vector<16x128xf32>, vector<24x128xf32> -> vector<24x128xf32>
    %271 = arith.addf %242, %270 : vector<24x128xf32>
    %c1_189 = arith.constant 1 : index
    %c1_190 = arith.constant 1 : index
    %c0_191 = arith.constant 0 : index
    %c0_192 = arith.constant 0 : index
    %272 = vector.load %arg4[%c1_189, %c1_190, %c0_191, %c0_192] : memref<2x4x128x16xf32, #tpu.memory_space<vmem>>, vector<1x1x128x16xf32>
    %273 = vector.shape_cast %272 : vector<1x1x128x16xf32> to vector<128x16xf32>
    %cst_193 = arith.constant dense<0.000000e+00> : vector<24x16xf32>
    %274 = tpu.matmul %241, %273, %cst_193 {dimension_numbers = #tpu.dot_dimension_numbers<[1], [0], [0], [1], [0, 0, 1, 1], [], []>} : vector<24x128xf32>, vector<128x16xf32>, vector<24x16xf32> -> vector<24x16xf32>
    %cst_194 = arith.constant 2.500000e-01 : f32
    %275 = vector.broadcast %cst_194 : f32 to vector<24x16xf32>
    %276 = arith.mulf %274, %275 : vector<24x16xf32>
    %c1_195 = arith.constant 1 : index
    %c1_196 = arith.constant 1 : index
    %c0_197 = arith.constant 0 : index
    %c0_198 = arith.constant 0 : index
    %277 = vector.load %arg5[%c1_195, %c1_196, %c0_197, %c0_198] : memref<2x4x128x16xf32, #tpu.memory_space<vmem>>, vector<1x1x128x16xf32>
    %278 = vector.shape_cast %277 : vector<1x1x128x16xf32> to vector<128x16xf32>
    %cst_199 = arith.constant dense<0.000000e+00> : vector<24x16xf32>
    %279 = tpu.matmul %241, %278, %cst_199 {dimension_numbers = #tpu.dot_dimension_numbers<[1], [0], [0], [1], [0, 0, 1, 1], [], []>} : vector<24x128xf32>, vector<128x16xf32>, vector<24x16xf32> -> vector<24x16xf32>
    %c1_200 = arith.constant 1 : index
    %c1_201 = arith.constant 1 : index
    %c0_202 = arith.constant 0 : index
    %c0_203 = arith.constant 0 : index
    %280 = vector.load %arg6[%c1_200, %c1_201, %c0_202, %c0_203] : memref<2x4x128x16xf32, #tpu.memory_space<vmem>>, vector<1x1x128x16xf32>
    %281 = vector.shape_cast %280 : vector<1x1x128x16xf32> to vector<128x16xf32>
    %cst_204 = arith.constant dense<0.000000e+00> : vector<24x16xf32>
    %282 = tpu.matmul %241, %281, %cst_204 {dimension_numbers = #tpu.dot_dimension_numbers<[1], [0], [0], [1], [0, 0, 1, 1], [], []>} : vector<24x128xf32>, vector<128x16xf32>, vector<24x16xf32> -> vector<24x16xf32>
    %cst_205 = arith.constant dense<0.000000e+00> : vector<24x24xf32>
    %283 = tpu.matmul %276, %279, %cst_205 {dimension_numbers = #tpu.dot_dimension_numbers<[1], [1], [0], [0], [0, 0, 1, 0], [], []>} : vector<24x16xf32>, vector<24x16xf32>, vector<24x24xf32> -> vector<24x24xf32>
    %cst_206 = arith.constant -1.000000e+30 : f32
    %284 = vector.broadcast %cst_206 : f32 to vector<24x24xf32>
    %285 = arith.select %4, %283, %284 : vector<24x24xi1>, vector<24x24xf32>
    %cst_207 = arith.constant dense<0xFF800000> : vector<24xf32>
    %286 = vector.multi_reduction <maximumf>, %285, %cst_207 [1] : vector<24x24xf32> to vector<24xf32>
    %287 = vector.shape_cast %286 : vector<24xf32> to vector<24x1xf32>
    %288 = vector.broadcast %287 : vector<24x1xf32> to vector<24x24xf32>
    %289 = arith.subf %285, %288 : vector<24x24xf32>
    %290 = math.exp %289 : vector<24x24xf32>
    %cst_208 = arith.constant dense<0.000000e+00> : vector<24xf32>
    %291 = vector.multi_reduction <add>, %290, %cst_208 [1] : vector<24x24xf32> to vector<24xf32>
    %292 = vector.shape_cast %291 : vector<24xf32> to vector<24x1xf32>
    %293 = tpu.reciprocal %292 {approx = true} : vector<24x1xf32> -> vector<24x1xf32>
    %294 = vector.broadcast %293 : vector<24x1xf32> to vector<24x24xf32>
    %295 = arith.mulf %290, %294 : vector<24x24xf32>
    %cst_209 = arith.constant dense<0.000000e+00> : vector<24x16xf32>
    %296 = tpu.matmul %295, %282, %cst_209 {dimension_numbers = #tpu.dot_dimension_numbers<[1], [0], [0], [1], [0, 0, 1, 1], [], []>} : vector<24x24xf32>, vector<24x16xf32>, vector<24x16xf32> -> vector<24x16xf32>
    %c1_210 = arith.constant 1 : index
    %c1_211 = arith.constant 1 : index
    %c0_212 = arith.constant 0 : index
    %c0_213 = arith.constant 0 : index
    %297 = vector.load %arg7[%c1_210, %c1_211, %c0_212, %c0_213] : memref<2x4x16x128xf32, #tpu.memory_space<vmem>>, vector<1x1x16x128xf32>
    %298 = vector.shape_cast %297 : vector<1x1x16x128xf32> to vector<16x128xf32>
    %cst_214 = arith.constant dense<0.000000e+00> : vector<24x128xf32>
    %299 = tpu.matmul %296, %298, %cst_214 {dimension_numbers = #tpu.dot_dimension_numbers<[1], [0], [0], [1], [0, 0, 1, 1], [], []>} : vector<24x16xf32>, vector<16x128xf32>, vector<24x128xf32> -> vector<24x128xf32>
    %300 = arith.addf %271, %299 : vector<24x128xf32>
    %c1_215 = arith.constant 1 : index
    %c2_216 = arith.constant 2 : index
    %c0_217 = arith.constant 0 : index
    %c0_218 = arith.constant 0 : index
    %301 = vector.load %arg4[%c1_215, %c2_216, %c0_217, %c0_218] : memref<2x4x128x16xf32, #tpu.memory_space<vmem>>, vector<1x1x128x16xf32>
    %302 = vector.shape_cast %301 : vector<1x1x128x16xf32> to vector<128x16xf32>
    %cst_219 = arith.constant dense<0.000000e+00> : vector<24x16xf32>
    %303 = tpu.matmul %241, %302, %cst_219 {dimension_numbers = #tpu.dot_dimension_numbers<[1], [0], [0], [1], [0, 0, 1, 1], [], []>} : vector<24x128xf32>, vector<128x16xf32>, vector<24x16xf32> -> vector<24x16xf32>
    %cst_220 = arith.constant 2.500000e-01 : f32
    %304 = vector.broadcast %cst_220 : f32 to vector<24x16xf32>
    %305 = arith.mulf %303, %304 : vector<24x16xf32>
    %c1_221 = arith.constant 1 : index
    %c2_222 = arith.constant 2 : index
    %c0_223 = arith.constant 0 : index
    %c0_224 = arith.constant 0 : index
    %306 = vector.load %arg5[%c1_221, %c2_222, %c0_223, %c0_224] : memref<2x4x128x16xf32, #tpu.memory_space<vmem>>, vector<1x1x128x16xf32>
    %307 = vector.shape_cast %306 : vector<1x1x128x16xf32> to vector<128x16xf32>
    %cst_225 = arith.constant dense<0.000000e+00> : vector<24x16xf32>
    %308 = tpu.matmul %241, %307, %cst_225 {dimension_numbers = #tpu.dot_dimension_numbers<[1], [0], [0], [1], [0, 0, 1, 1], [], []>} : vector<24x128xf32>, vector<128x16xf32>, vector<24x16xf32> -> vector<24x16xf32>
    %c1_226 = arith.constant 1 : index
    %c2_227 = arith.constant 2 : index
    %c0_228 = arith.constant 0 : index
    %c0_229 = arith.constant 0 : index
    %309 = vector.load %arg6[%c1_226, %c2_227, %c0_228, %c0_229] : memref<2x4x128x16xf32, #tpu.memory_space<vmem>>, vector<1x1x128x16xf32>
    %310 = vector.shape_cast %309 : vector<1x1x128x16xf32> to vector<128x16xf32>
    %cst_230 = arith.constant dense<0.000000e+00> : vector<24x16xf32>
    %311 = tpu.matmul %241, %310, %cst_230 {dimension_numbers = #tpu.dot_dimension_numbers<[1], [0], [0], [1], [0, 0, 1, 1], [], []>} : vector<24x128xf32>, vector<128x16xf32>, vector<24x16xf32> -> vector<24x16xf32>
    %cst_231 = arith.constant dense<0.000000e+00> : vector<24x24xf32>
    %312 = tpu.matmul %305, %308, %cst_231 {dimension_numbers = #tpu.dot_dimension_numbers<[1], [1], [0], [0], [0, 0, 1, 0], [], []>} : vector<24x16xf32>, vector<24x16xf32>, vector<24x24xf32> -> vector<24x24xf32>
    %cst_232 = arith.constant -1.000000e+30 : f32
    %313 = vector.broadcast %cst_232 : f32 to vector<24x24xf32>
    %314 = arith.select %4, %312, %313 : vector<24x24xi1>, vector<24x24xf32>
    %cst_233 = arith.constant dense<0xFF800000> : vector<24xf32>
    %315 = vector.multi_reduction <maximumf>, %314, %cst_233 [1] : vector<24x24xf32> to vector<24xf32>
    %316 = vector.shape_cast %315 : vector<24xf32> to vector<24x1xf32>
    %317 = vector.broadcast %316 : vector<24x1xf32> to vector<24x24xf32>
    %318 = arith.subf %314, %317 : vector<24x24xf32>
    %319 = math.exp %318 : vector<24x24xf32>
    %cst_234 = arith.constant dense<0.000000e+00> : vector<24xf32>
    %320 = vector.multi_reduction <add>, %319, %cst_234 [1] : vector<24x24xf32> to vector<24xf32>
    %321 = vector.shape_cast %320 : vector<24xf32> to vector<24x1xf32>
    %322 = tpu.reciprocal %321 {approx = true} : vector<24x1xf32> -> vector<24x1xf32>
    %323 = vector.broadcast %322 : vector<24x1xf32> to vector<24x24xf32>
    %324 = arith.mulf %319, %323 : vector<24x24xf32>
    %cst_235 = arith.constant dense<0.000000e+00> : vector<24x16xf32>
    %325 = tpu.matmul %324, %311, %cst_235 {dimension_numbers = #tpu.dot_dimension_numbers<[1], [0], [0], [1], [0, 0, 1, 1], [], []>} : vector<24x24xf32>, vector<24x16xf32>, vector<24x16xf32> -> vector<24x16xf32>
    %c1_236 = arith.constant 1 : index
    %c2_237 = arith.constant 2 : index
    %c0_238 = arith.constant 0 : index
    %c0_239 = arith.constant 0 : index
    %326 = vector.load %arg7[%c1_236, %c2_237, %c0_238, %c0_239] : memref<2x4x16x128xf32, #tpu.memory_space<vmem>>, vector<1x1x16x128xf32>
    %327 = vector.shape_cast %326 : vector<1x1x16x128xf32> to vector<16x128xf32>
    %cst_240 = arith.constant dense<0.000000e+00> : vector<24x128xf32>
    %328 = tpu.matmul %325, %327, %cst_240 {dimension_numbers = #tpu.dot_dimension_numbers<[1], [0], [0], [1], [0, 0, 1, 1], [], []>} : vector<24x16xf32>, vector<16x128xf32>, vector<24x128xf32> -> vector<24x128xf32>
    %329 = arith.addf %300, %328 : vector<24x128xf32>
    %c1_241 = arith.constant 1 : index
    %c3_242 = arith.constant 3 : index
    %c0_243 = arith.constant 0 : index
    %c0_244 = arith.constant 0 : index
    %330 = vector.load %arg4[%c1_241, %c3_242, %c0_243, %c0_244] : memref<2x4x128x16xf32, #tpu.memory_space<vmem>>, vector<1x1x128x16xf32>
    %331 = vector.shape_cast %330 : vector<1x1x128x16xf32> to vector<128x16xf32>
    %cst_245 = arith.constant dense<0.000000e+00> : vector<24x16xf32>
    %332 = tpu.matmul %241, %331, %cst_245 {dimension_numbers = #tpu.dot_dimension_numbers<[1], [0], [0], [1], [0, 0, 1, 1], [], []>} : vector<24x128xf32>, vector<128x16xf32>, vector<24x16xf32> -> vector<24x16xf32>
    %cst_246 = arith.constant 2.500000e-01 : f32
    %333 = vector.broadcast %cst_246 : f32 to vector<24x16xf32>
    %334 = arith.mulf %332, %333 : vector<24x16xf32>
    %c1_247 = arith.constant 1 : index
    %c3_248 = arith.constant 3 : index
    %c0_249 = arith.constant 0 : index
    %c0_250 = arith.constant 0 : index
    %335 = vector.load %arg5[%c1_247, %c3_248, %c0_249, %c0_250] : memref<2x4x128x16xf32, #tpu.memory_space<vmem>>, vector<1x1x128x16xf32>
    %336 = vector.shape_cast %335 : vector<1x1x128x16xf32> to vector<128x16xf32>
    %cst_251 = arith.constant dense<0.000000e+00> : vector<24x16xf32>
    %337 = tpu.matmul %241, %336, %cst_251 {dimension_numbers = #tpu.dot_dimension_numbers<[1], [0], [0], [1], [0, 0, 1, 1], [], []>} : vector<24x128xf32>, vector<128x16xf32>, vector<24x16xf32> -> vector<24x16xf32>
    %c1_252 = arith.constant 1 : index
    %c3_253 = arith.constant 3 : index
    %c0_254 = arith.constant 0 : index
    %c0_255 = arith.constant 0 : index
    %338 = vector.load %arg6[%c1_252, %c3_253, %c0_254, %c0_255] : memref<2x4x128x16xf32, #tpu.memory_space<vmem>>, vector<1x1x128x16xf32>
    %339 = vector.shape_cast %338 : vector<1x1x128x16xf32> to vector<128x16xf32>
    %cst_256 = arith.constant dense<0.000000e+00> : vector<24x16xf32>
    %340 = tpu.matmul %241, %339, %cst_256 {dimension_numbers = #tpu.dot_dimension_numbers<[1], [0], [0], [1], [0, 0, 1, 1], [], []>} : vector<24x128xf32>, vector<128x16xf32>, vector<24x16xf32> -> vector<24x16xf32>
    %cst_257 = arith.constant dense<0.000000e+00> : vector<24x24xf32>
    %341 = tpu.matmul %334, %337, %cst_257 {dimension_numbers = #tpu.dot_dimension_numbers<[1], [1], [0], [0], [0, 0, 1, 0], [], []>} : vector<24x16xf32>, vector<24x16xf32>, vector<24x24xf32> -> vector<24x24xf32>
    %cst_258 = arith.constant -1.000000e+30 : f32
    %342 = vector.broadcast %cst_258 : f32 to vector<24x24xf32>
    %343 = arith.select %4, %341, %342 : vector<24x24xi1>, vector<24x24xf32>
    %cst_259 = arith.constant dense<0xFF800000> : vector<24xf32>
    %344 = vector.multi_reduction <maximumf>, %343, %cst_259 [1] : vector<24x24xf32> to vector<24xf32>
    %345 = vector.shape_cast %344 : vector<24xf32> to vector<24x1xf32>
    %346 = vector.broadcast %345 : vector<24x1xf32> to vector<24x24xf32>
    %347 = arith.subf %343, %346 : vector<24x24xf32>
    %348 = math.exp %347 : vector<24x24xf32>
    %cst_260 = arith.constant dense<0.000000e+00> : vector<24xf32>
    %349 = vector.multi_reduction <add>, %348, %cst_260 [1] : vector<24x24xf32> to vector<24xf32>
    %350 = vector.shape_cast %349 : vector<24xf32> to vector<24x1xf32>
    %351 = tpu.reciprocal %350 {approx = true} : vector<24x1xf32> -> vector<24x1xf32>
    %352 = vector.broadcast %351 : vector<24x1xf32> to vector<24x24xf32>
    %353 = arith.mulf %348, %352 : vector<24x24xf32>
    %cst_261 = arith.constant dense<0.000000e+00> : vector<24x16xf32>
    %354 = tpu.matmul %353, %340, %cst_261 {dimension_numbers = #tpu.dot_dimension_numbers<[1], [0], [0], [1], [0, 0, 1, 1], [], []>} : vector<24x24xf32>, vector<24x16xf32>, vector<24x16xf32> -> vector<24x16xf32>
    %c1_262 = arith.constant 1 : index
    %c3_263 = arith.constant 3 : index
    %c0_264 = arith.constant 0 : index
    %c0_265 = arith.constant 0 : index
    %355 = vector.load %arg7[%c1_262, %c3_263, %c0_264, %c0_265] : memref<2x4x16x128xf32, #tpu.memory_space<vmem>>, vector<1x1x16x128xf32>
    %356 = vector.shape_cast %355 : vector<1x1x16x128xf32> to vector<16x128xf32>
    %cst_266 = arith.constant dense<0.000000e+00> : vector<24x128xf32>
    %357 = tpu.matmul %354, %356, %cst_266 {dimension_numbers = #tpu.dot_dimension_numbers<[1], [0], [0], [1], [0, 0, 1, 1], [], []>} : vector<24x16xf32>, vector<16x128xf32>, vector<24x128xf32> -> vector<24x128xf32>
    %358 = arith.addf %329, %357 : vector<24x128xf32>
    %359 = arith.addf %212, %358 : vector<24x128xf32>
    %c1_267 = arith.constant 1 : index
    %c0_268 = arith.constant 0 : index
    %c0_269 = arith.constant 0 : index
    %360 = vector.load %arg8[%c1_267, %c0_268, %c0_269] : memref<2x1x128xf32, #tpu.memory_space<vmem>>, vector<1x1x128xf32>
    %361 = vector.shape_cast %360 : vector<1x1x128xf32> to vector<1x128xf32>
    %362 = vector.broadcast %361 : vector<1x128xf32> to vector<24x128xf32>
    %363 = arith.addf %359, %362 : vector<24x128xf32>
    %c1_270 = arith.constant 1 : index
    %c0_271 = arith.constant 0 : index
    %c0_272 = arith.constant 0 : index
    %364 = vector.load %arg9[%c1_270, %c0_271, %c0_272] : memref<2x1x128xf32, #tpu.memory_space<vmem>>, vector<1x1x128xf32>
    %365 = vector.shape_cast %364 : vector<1x1x128xf32> to vector<1x128xf32>
    %c1_273 = arith.constant 1 : index
    %c0_274 = arith.constant 0 : index
    %c0_275 = arith.constant 0 : index
    %366 = vector.load %arg10[%c1_273, %c0_274, %c0_275] : memref<2x1x128xf32, #tpu.memory_space<vmem>>, vector<1x1x128xf32>
    %367 = vector.shape_cast %366 : vector<1x1x128xf32> to vector<1x128xf32>
    %368 = tpu.iota {dimensions = array<i32: 1>} : vector<24x128xi32>
    %c64_i32_276 = arith.constant 64 : i32
    %369 = vector.broadcast %c64_i32_276 : i32 to vector<24x128xi32>
    %370 = arith.cmpi slt, %368, %369 : vector<24x128xi32>
    %cst_277 = arith.constant dense<0.000000e+00> : vector<24xf32>
    %371 = vector.multi_reduction <add>, %363, %cst_277 [1] : vector<24x128xf32> to vector<24xf32>
    %372 = vector.shape_cast %371 : vector<24xf32> to vector<24x1xf32>
    %cst_278 = arith.constant 1.562500e-02 : f32
    %373 = vector.broadcast %cst_278 : f32 to vector<24x1xf32>
    %374 = arith.mulf %372, %373 : vector<24x1xf32>
    %375 = vector.broadcast %374 : vector<24x1xf32> to vector<24x128xf32>
    %376 = arith.subf %363, %375 : vector<24x128xf32>
    %cst_279 = arith.constant 0.000000e+00 : f32
    %377 = vector.broadcast %cst_279 : f32 to vector<24x128xf32>
    %378 = arith.select %370, %376, %377 : vector<24x128xi1>, vector<24x128xf32>
    %379 = arith.mulf %378, %378 : vector<24x128xf32>
    %cst_280 = arith.constant dense<0.000000e+00> : vector<24xf32>
    %380 = vector.multi_reduction <add>, %379, %cst_280 [1] : vector<24x128xf32> to vector<24xf32>
    %381 = vector.shape_cast %380 : vector<24xf32> to vector<24x1xf32>
    %cst_281 = arith.constant 1.562500e-02 : f32
    %382 = vector.broadcast %cst_281 : f32 to vector<24x1xf32>
    %383 = arith.mulf %381, %382 : vector<24x1xf32>
    %cst_282 = arith.constant 9.99999974E-6 : f32
    %384 = vector.broadcast %cst_282 : f32 to vector<24x1xf32>
    %385 = arith.addf %383, %384 : vector<24x1xf32>
    %386 = math.rsqrt %385 : vector<24x1xf32>
    %387 = vector.broadcast %386 : vector<24x1xf32> to vector<24x128xf32>
    %388 = arith.mulf %378, %387 : vector<24x128xf32>
    %389 = vector.broadcast %365 : vector<1x128xf32> to vector<24x128xf32>
    %390 = arith.mulf %388, %389 : vector<24x128xf32>
    %391 = vector.broadcast %367 : vector<1x128xf32> to vector<24x128xf32>
    %392 = arith.addf %390, %391 : vector<24x128xf32>
    %c1_283 = arith.constant 1 : index
    %c0_284 = arith.constant 0 : index
    %c0_285 = arith.constant 0 : index
    %393 = vector.load %arg11[%c1_283, %c0_284, %c0_285] : memref<2x128x128xf32, #tpu.memory_space<vmem>>, vector<1x128x128xf32>
    %394 = vector.shape_cast %393 : vector<1x128x128xf32> to vector<128x128xf32>
    %cst_286 = arith.constant dense<0.000000e+00> : vector<24x128xf32>
    %395 = tpu.matmul %392, %394, %cst_286 {dimension_numbers = #tpu.dot_dimension_numbers<[1], [0], [0], [1], [0, 0, 1, 1], [], []>} : vector<24x128xf32>, vector<128x128xf32>, vector<24x128xf32> -> vector<24x128xf32>
    %c1_287 = arith.constant 1 : index
    %c0_288 = arith.constant 0 : index
    %c0_289 = arith.constant 0 : index
    %396 = vector.load %arg12[%c1_287, %c0_288, %c0_289] : memref<2x1x128xf32, #tpu.memory_space<vmem>>, vector<1x1x128xf32>
    %397 = vector.shape_cast %396 : vector<1x1x128xf32> to vector<1x128xf32>
    %398 = vector.broadcast %397 : vector<1x128xf32> to vector<24x128xf32>
    %399 = arith.addf %395, %398 : vector<24x128xf32>
    %400 = arith.mulf %399, %399 : vector<24x128xf32>
    %401 = arith.mulf %399, %400 : vector<24x128xf32>
    %cst_290 = arith.constant 4.471500e-02 : f32
    %402 = vector.broadcast %cst_290 : f32 to vector<24x128xf32>
    %403 = arith.mulf %402, %401 : vector<24x128xf32>
    %404 = arith.addf %399, %403 : vector<24x128xf32>
    %cst_291 = arith.constant 0.797884583 : f32
    %405 = vector.broadcast %cst_291 : f32 to vector<24x128xf32>
    %406 = arith.mulf %405, %404 : vector<24x128xf32>
    %407 = math.tanh %406 : vector<24x128xf32>
    %cst_292 = arith.constant 1.000000e+00 : f32
    %408 = vector.broadcast %cst_292 : f32 to vector<24x128xf32>
    %409 = arith.addf %408, %407 : vector<24x128xf32>
    %cst_293 = arith.constant 5.000000e-01 : f32
    %410 = vector.broadcast %cst_293 : f32 to vector<24x128xf32>
    %411 = arith.mulf %410, %409 : vector<24x128xf32>
    %412 = arith.mulf %399, %411 : vector<24x128xf32>
    %c1_294 = arith.constant 1 : index
    %c0_295 = arith.constant 0 : index
    %c0_296 = arith.constant 0 : index
    %413 = vector.load %arg13[%c1_294, %c0_295, %c0_296] : memref<2x128x128xf32, #tpu.memory_space<vmem>>, vector<1x128x128xf32>
    %414 = vector.shape_cast %413 : vector<1x128x128xf32> to vector<128x128xf32>
    %cst_297 = arith.constant dense<0.000000e+00> : vector<24x128xf32>
    %415 = tpu.matmul %412, %414, %cst_297 {dimension_numbers = #tpu.dot_dimension_numbers<[1], [0], [0], [1], [0, 0, 1, 1], [], []>} : vector<24x128xf32>, vector<128x128xf32>, vector<24x128xf32> -> vector<24x128xf32>
    %c1_298 = arith.constant 1 : index
    %c0_299 = arith.constant 0 : index
    %c0_300 = arith.constant 0 : index
    %416 = vector.load %arg14[%c1_298, %c0_299, %c0_300] : memref<2x1x128xf32, #tpu.memory_space<vmem>>, vector<1x1x128xf32>
    %417 = vector.shape_cast %416 : vector<1x1x128xf32> to vector<1x128xf32>
    %418 = vector.broadcast %417 : vector<1x128xf32> to vector<24x128xf32>
    %419 = arith.addf %415, %418 : vector<24x128xf32>
    %420 = arith.addf %392, %419 : vector<24x128xf32>
    %421 = vector.extract_strided_slice %420 {offsets = [0, 0], sizes = [1, 128], strides = [1, 1]} : vector<24x128xf32> to vector<1x128xf32>
    %c0_301 = arith.constant 0 : index
    %c0_302 = arith.constant 0 : index
    %422 = vector.load %arg15[%c0_301, %c0_302] : memref<1x128xf32, #tpu.memory_space<vmem>>, vector<1x128xf32>
    %c0_303 = arith.constant 0 : index
    %c0_304 = arith.constant 0 : index
    %423 = vector.load %arg16[%c0_303, %c0_304] : memref<1x128xf32, #tpu.memory_space<vmem>>, vector<1x128xf32>
    %424 = tpu.iota {dimensions = array<i32: 1>} : vector<1x128xi32>
    %c64_i32_305 = arith.constant 64 : i32
    %425 = vector.broadcast %c64_i32_305 : i32 to vector<1x128xi32>
    %426 = arith.cmpi slt, %424, %425 : vector<1x128xi32>
    %cst_306 = arith.constant dense<0.000000e+00> : vector<1xf32>
    %427 = vector.multi_reduction <add>, %421, %cst_306 [1] : vector<1x128xf32> to vector<1xf32>
    %428 = vector.shape_cast %427 : vector<1xf32> to vector<1x1xf32>
    %cst_307 = arith.constant 1.562500e-02 : f32
    %429 = vector.broadcast %cst_307 : f32 to vector<1x1xf32>
    %430 = arith.mulf %428, %429 : vector<1x1xf32>
    %431 = vector.broadcast %430 : vector<1x1xf32> to vector<1x128xf32>
    %432 = arith.subf %421, %431 : vector<1x128xf32>
    %cst_308 = arith.constant 0.000000e+00 : f32
    %433 = vector.broadcast %cst_308 : f32 to vector<1x128xf32>
    %434 = arith.select %426, %432, %433 : vector<1x128xi1>, vector<1x128xf32>
    %435 = arith.mulf %434, %434 : vector<1x128xf32>
    %cst_309 = arith.constant dense<0.000000e+00> : vector<1xf32>
    %436 = vector.multi_reduction <add>, %435, %cst_309 [1] : vector<1x128xf32> to vector<1xf32>
    %437 = vector.shape_cast %436 : vector<1xf32> to vector<1x1xf32>
    %cst_310 = arith.constant 1.562500e-02 : f32
    %438 = vector.broadcast %cst_310 : f32 to vector<1x1xf32>
    %439 = arith.mulf %437, %438 : vector<1x1xf32>
    %cst_311 = arith.constant 9.99999974E-6 : f32
    %440 = vector.broadcast %cst_311 : f32 to vector<1x1xf32>
    %441 = arith.addf %439, %440 : vector<1x1xf32>
    %442 = math.rsqrt %441 : vector<1x1xf32>
    %443 = vector.broadcast %442 : vector<1x1xf32> to vector<1x128xf32>
    %444 = arith.mulf %434, %443 : vector<1x128xf32>
    %445 = arith.mulf %444, %422 : vector<1x128xf32>
    %446 = arith.addf %445, %423 : vector<1x128xf32>
    %c0_312 = arith.constant 0 : index
    %c0_313 = arith.constant 0 : index
    %447 = vector.load %arg17[%c0_312, %c0_313] : memref<128x128xf32, #tpu.memory_space<vmem>>, vector<128x128xf32>
    %cst_314 = arith.constant dense<0.000000e+00> : vector<1x128xf32>
    %448 = tpu.matmul %446, %447, %cst_314 {dimension_numbers = #tpu.dot_dimension_numbers<[1], [0], [0], [1], [0, 0, 1, 1], [], []>} : vector<1x128xf32>, vector<128x128xf32>, vector<1x128xf32> -> vector<1x128xf32>
    %c0_315 = arith.constant 0 : index
    %c0_316 = arith.constant 0 : index
    %449 = vector.load %arg18[%c0_315, %c0_316] : memref<1x128xf32, #tpu.memory_space<vmem>>, vector<1x128xf32>
    %450 = arith.addf %448, %449 : vector<1x128xf32>
    %451 = vector.shape_cast %450 : vector<1x128xf32> to vector<1x128xf32>
    %452 = vector.broadcast %451 : vector<1x128xf32> to vector<8x128xf32>
    %c0_317 = arith.constant 0 : index
    %c0_318 = arith.constant 0 : index
    %c0_319 = arith.constant 0 : index
    %453 = vector.load %arg19[%c0_317, %c0_318, %c0_319] : memref<1x8x128xf32, #tpu.memory_space<vmem>>, vector<1x8x128xf32>
    %454 = vector.shape_cast %453 : vector<1x8x128xf32> to vector<8x128xf32>
    %455 = vector.shape_cast %452 : vector<8x128xf32> to vector<1x8x128xf32>
    tpu.vector_store %arg19[%c0_317, %c0_318, %c0_319], %455 {strides = array<i32>} : memref<1x8x128xf32, #tpu.memory_space<vmem>>, vector<1x8x128xf32>,
    return
  }
  func.func @transform_0(%arg0: i32) -> (i32, i32, i32) {
    %c0_i32 = arith.constant 0 : i32
    %c0_i32_0 = arith.constant 0 : i32
    %c0_i32_1 = arith.constant 0 : i32
    return %arg0, %c0_i32, %c0_i32_0 : i32, i32, i32
  }
  func.func @transform_1(%arg0: i32) -> (i32, i32, i32) {
    %c0_i32 = arith.constant 0 : i32
    %c0_i32_0 = arith.constant 0 : i32
    %c0_i32_1 = arith.constant 0 : i32
    %c0_i32_2 = arith.constant 0 : i32
    return %c0_i32, %c0_i32_0, %c0_i32_1 : i32, i32, i32
  }
  func.func @transform_2(%arg0: i32) -> (i32, i32, i32) {
    %c0_i32 = arith.constant 0 : i32
    %c0_i32_0 = arith.constant 0 : i32
    %c0_i32_1 = arith.constant 0 : i32
    %c0_i32_2 = arith.constant 0 : i32
    return %c0_i32, %c0_i32_0, %c0_i32_1 : i32, i32, i32
  }
  func.func @transform_3(%arg0: i32) -> (i32, i32, i32, i32) {
    %c0_i32 = arith.constant 0 : i32
    %c0_i32_0 = arith.constant 0 : i32
    %c0_i32_1 = arith.constant 0 : i32
    %c0_i32_2 = arith.constant 0 : i32
    %c0_i32_3 = arith.constant 0 : i32
    return %c0_i32, %c0_i32_0, %c0_i32_1, %c0_i32_2 : i32, i32, i32, i32
  }
  func.func @transform_4(%arg0: i32) -> (i32, i32, i32, i32) {
    %c0_i32 = arith.constant 0 : i32
    %c0_i32_0 = arith.constant 0 : i32
    %c0_i32_1 = arith.constant 0 : i32
    %c0_i32_2 = arith.constant 0 : i32
    %c0_i32_3 = arith.constant 0 : i32
    return %c0_i32, %c0_i32_0, %c0_i32_1, %c0_i32_2 : i32, i32, i32, i32
  }
  func.func @transform_5(%arg0: i32) -> (i32, i32, i32, i32) {
    %c0_i32 = arith.constant 0 : i32
    %c0_i32_0 = arith.constant 0 : i32
    %c0_i32_1 = arith.constant 0 : i32
    %c0_i32_2 = arith.constant 0 : i32
    %c0_i32_3 = arith.constant 0 : i32
    return %c0_i32, %c0_i32_0, %c0_i32_1, %c0_i32_2 : i32, i32, i32, i32
  }
  func.func @transform_6(%arg0: i32) -> (i32, i32, i32, i32) {
    %c0_i32 = arith.constant 0 : i32
    %c0_i32_0 = arith.constant 0 : i32
    %c0_i32_1 = arith.constant 0 : i32
    %c0_i32_2 = arith.constant 0 : i32
    %c0_i32_3 = arith.constant 0 : i32
    return %c0_i32, %c0_i32_0, %c0_i32_1, %c0_i32_2 : i32, i32, i32, i32
  }
  func.func @transform_7(%arg0: i32) -> (i32, i32, i32) {
    %c0_i32 = arith.constant 0 : i32
    %c0_i32_0 = arith.constant 0 : i32
    %c0_i32_1 = arith.constant 0 : i32
    %c0_i32_2 = arith.constant 0 : i32
    return %c0_i32, %c0_i32_0, %c0_i32_1 : i32, i32, i32
  }
  func.func @transform_8(%arg0: i32) -> (i32, i32, i32) {
    %c0_i32 = arith.constant 0 : i32
    %c0_i32_0 = arith.constant 0 : i32
    %c0_i32_1 = arith.constant 0 : i32
    %c0_i32_2 = arith.constant 0 : i32
    return %c0_i32, %c0_i32_0, %c0_i32_1 : i32, i32, i32
  }
  func.func @transform_9(%arg0: i32) -> (i32, i32, i32) {
    %c0_i32 = arith.constant 0 : i32
    %c0_i32_0 = arith.constant 0 : i32
    %c0_i32_1 = arith.constant 0 : i32
    %c0_i32_2 = arith.constant 0 : i32
    return %c0_i32, %c0_i32_0, %c0_i32_1 : i32, i32, i32
  }
  func.func @transform_10(%arg0: i32) -> (i32, i32, i32) {
    %c0_i32 = arith.constant 0 : i32
    %c0_i32_0 = arith.constant 0 : i32
    %c0_i32_1 = arith.constant 0 : i32
    %c0_i32_2 = arith.constant 0 : i32
    return %c0_i32, %c0_i32_0, %c0_i32_1 : i32, i32, i32
  }
  func.func @transform_11(%arg0: i32) -> (i32, i32, i32) {
    %c0_i32 = arith.constant 0 : i32
    %c0_i32_0 = arith.constant 0 : i32
    %c0_i32_1 = arith.constant 0 : i32
    %c0_i32_2 = arith.constant 0 : i32
    return %c0_i32, %c0_i32_0, %c0_i32_1 : i32, i32, i32
  }
  func.func @transform_12(%arg0: i32) -> (i32, i32, i32) {
    %c0_i32 = arith.constant 0 : i32
    %c0_i32_0 = arith.constant 0 : i32
    %c0_i32_1 = arith.constant 0 : i32
    %c0_i32_2 = arith.constant 0 : i32
    return %c0_i32, %c0_i32_0, %c0_i32_1 : i32, i32, i32
  }
  func.func @transform_13(%arg0: i32) -> (i32, i32, i32) {
    %c0_i32 = arith.constant 0 : i32
    %c0_i32_0 = arith.constant 0 : i32
    %c0_i32_1 = arith.constant 0 : i32
    %c0_i32_2 = arith.constant 0 : i32
    return %c0_i32, %c0_i32_0, %c0_i32_1 : i32, i32, i32
  }
  func.func @transform_14(%arg0: i32) -> (i32, i32) {
    %c0_i32 = arith.constant 0 : i32
    %c0_i32_0 = arith.constant 0 : i32
    %c0_i32_1 = arith.constant 0 : i32
    return %c0_i32, %c0_i32_0 : i32, i32
  }
  func.func @transform_15(%arg0: i32) -> (i32, i32) {
    %c0_i32 = arith.constant 0 : i32
    %c0_i32_0 = arith.constant 0 : i32
    %c0_i32_1 = arith.constant 0 : i32
    return %c0_i32, %c0_i32_0 : i32, i32
  }
  func.func @transform_16(%arg0: i32) -> (i32, i32) {
    %c0_i32 = arith.constant 0 : i32
    %c0_i32_0 = arith.constant 0 : i32
    %c0_i32_1 = arith.constant 0 : i32
    return %c0_i32, %c0_i32_0 : i32, i32
  }
  func.func @transform_17(%arg0: i32) -> (i32, i32) {
    %c0_i32 = arith.constant 0 : i32
    %c0_i32_0 = arith.constant 0 : i32
    %c0_i32_1 = arith.constant 0 : i32
    return %c0_i32, %c0_i32_0 : i32, i32
  }
  func.func @transform_18(%arg0: i32) -> (i32, i32, i32) {
    %c0_i32 = arith.constant 0 : i32
    %c0_i32_0 = arith.constant 0 : i32
    %c0_i32_1 = arith.constant 0 : i32
    return %arg0, %c0_i32, %c0_i32_0 : i32, i32, i32
  }
}

</mosaic_0001>

<llo_original>
// kernel: forward.2
$region0: #{forward.2}
  #allocation0 [shape = 'u32[]', space=smem, size = 0x4, offset = 0x4, fixed_abs, tag = 'smem constant byte address 0x4 - core index']
  #allocation1 [shape = 'u32[72,128]{1,0:T(1,128)}', space=vmem, size = 0x9000, scoped, tag = 'internal scratch']
  %s0 = inlined_call_operand.vmem [shape: f32[2,16,192], index: 0, kind: input, shape index: {}]
  %s1 = inlined_call_operand.vmem [shape: f32[192,128], index: 1, kind: input, shape index: {}]
  %s2 = inlined_call_operand.vmem [shape: f32[1,128], index: 2, kind: input, shape index: {}]
  %s3 = inlined_call_operand.vmem [shape: f32[1,128], index: 3, kind: input, shape index: {}]
  %s4 = inlined_call_operand.vmem [shape: f32[1,128], index: 4, kind: input, shape index: {}]
  %s5 = inlined_call_operand.vmem [shape: f32[128,192], index: 5, kind: input, shape index: {}]
  %s6 = inlined_call_operand.vmem [shape: f32[1,192], index: 6, kind: input, shape index: {}]
  %s7 = inlined_call_operand.vmem [shape: f32[192,128], index: 7, kind: input, shape index: {}]
  %s8 = inlined_call_operand.vmem [shape: f32[1,128], index: 8, kind: input, shape index: {}]
  %s9 = inlined_call_operand.vmem [shape: f32[2,16,128], index: 9, kind: output, shape index: {}]
  %s10 = sld [smem:[#allocation0]]
  $region69: #{forward.2} parent=0
    _
  %s12 = ssub.s32 1, %s10
  %s13 = scalar_select 0, %s12, %s10
  loop: start=0, step=1, limit=4
  $region2: #{forward.2} parent=0 // loop_pre_header
    _
  $region3: #{forward.2} parent=0 // loop_header
    %s15 = sphi 0, %s19
    %p16 = scmp.ge.s32.totalorder %s15, 4
    %s25 = sphi 0, %s27
    %s28 = sphi 0, %s25
    %s29 = sphi 0, %s28
    %s45 = sphi 0, %s29
    %s49 = sphi 0, %s49
    %s51 = sphi 0, %s49
    %s52 = sphi 0, %s51
    %s66 = sphi 0, %s52
    %s70 = sphi 0, %s70
    %s72 = sphi 0, %s70
    %s73 = sphi 0, %s72
    %s87 = sphi 0, %s73
    %s91 = sphi 0, %s91
    %s93 = sphi 0, %s91
    %s94 = sphi 0, %s93
    %s108 = sphi 0, %s94
    %s112 = sphi 0, %s112
    %s114 = sphi 0, %s112
    %s115 = sphi 0, %s114
    %s129 = sphi 0, %s115
    %s133 = sphi 0, %s133
    %s135 = sphi 0, %s133
    %s136 = sphi 0, %s135
    %s150 = sphi 0, %s136
    %s154 = sphi 0, %s154
    %s156 = sphi 0, %s154
    %s157 = sphi 0, %s156
    %s171 = sphi 0, %s157
    %s175 = sphi 0, %s175
    %s177 = sphi 0, %s175
    %s178 = sphi 0, %s177
    %s192 = sphi 0, %s178
    %s196 = sphi 0, %s196
    %s198 = sphi 0, %s196
    %s199 = sphi 0, %s198
    %s213 = sphi 0, %s199
    %s219 = sphi 0, %s221
    %s222 = sphi 0, %s219
    %s223 = sphi 0, %s222
    %s239 = sphi 0, %s223
  $region4: #{forward.2} parent=0 // loop_header_branch
    %18 = sbr.rel (%p16) target = $region8
  $region5: #{forward.2} parent=0 // loop_body
    %s20 = ssub.s32 %s15, 1
    %s21 = ssub.s32 %s15, 2
    %s22 = sadd.s32 %s15, 1
    %s23 = ssub.s32 %s15, %s22
    %p24 = scmp.eq.s32.totalorder %s23, 0
    %s26 = sadd.s32 %s25, 1
    %s27 = scalar_select %p24, %s25, %s26
    %p30 = pneg %p24
    %p31 = scmp.eq.s32.totalorder %s15, 1
    %p32 = por %p30, %p31
    %p33 = scmp.ne.s32.totalorder %s25, %s28
    %p34 = scmp.eq.s32.totalorder %s15, 0
    %p35 = por %p33, %p34
    %p36 = scmp.ne.s32.totalorder %s25, %s28
    %p37 = scmp.eq.s32.totalorder %s20, 1
    %p38 = por %p36, %p37
    %p39 = scmp.ne.s32.totalorder %s28, %s29
    %p40 = scmp.eq.s32.totalorder %s20, 0
    %p41 = por %p39, %p40
    %p42 = scmp.ne.s32.totalorder %s28, %s29
    %p43 = scmp.eq.s32.totalorder %s21, 1
    %p44 = por %p42, %p43
    %p46 = scmp.ne.s32.totalorder %s29, %s45
    %p47 = scmp.eq.s32.totalorder %s21, 0
    %p48 = por %p46, %p47
    %s50 = sadd.s32 %s49, 1
    %p53 = scmp.eq.s32.totalorder %s15, 1
    %p54 = scmp.ne.s32.totalorder %s49, %s51
    %p55 = scmp.eq.s32.totalorder %s15, 0
    %p56 = por %p54, %p55
    %p57 = scmp.ne.s32.totalorder %s49, %s51
    %p58 = scmp.eq.s32.totalorder %s20, 1
    %p59 = por %p57, %p58
    %p60 = scmp.ne.s32.totalorder %s51, %s52
    %p61 = scmp.eq.s32.totalorder %s20, 0
    %p62 = por %p60, %p61
    %p63 = scmp.ne.s32.totalorder %s51, %s52
    %p64 = scmp.eq.s32.totalorder %s21, 1
    %p65 = por %p63, %p64
    %p67 = scmp.ne.s32.totalorder %s52, %s66
    %p68 = scmp.eq.s32.totalorder %s21, 0
    %p69 = por %p67, %p68
    %s71 = sadd.s32 %s70, 1
    %p74 = scmp.eq.s32.totalorder %s15, 1
    %p75 = scmp.ne.s32.totalorder %s70, %s72
    %p76 = scmp.eq.s32.totalorder %s15, 0
    %p77 = por %p75, %p76
    %p78 = scmp.ne.s32.totalorder %s70, %s72
    %p79 = scmp.eq.s32.totalorder %s20, 1
    %p80 = por %p78, %p79
    %p81 = scmp.ne.s32.totalorder %s72, %s73
    %p82 = scmp.eq.s32.totalorder %s20, 0
    %p83 = por %p81, %p82
    %p84 = scmp.ne.s32.totalorder %s72, %s73
    %p85 = scmp.eq.s32.totalorder %s21, 1
    %p86 = por %p84, %p85
    %p88 = scmp.ne.s32.totalorder %s73, %s87
    %p89 = scmp.eq.s32.totalorder %s21, 0
    %p90 = por %p88, %p89
    %s92 = sadd.s32 %s91, 1
    %p95 = scmp.eq.s32.totalorder %s15, 1
    %p96 = scmp.ne.s32.totalorder %s91, %s93
    %p97 = scmp.eq.s32.totalorder %s15, 0
    %p98 = por %p96, %p97
    %p99 = scmp.ne.s32.totalorder %s91, %s93
    %p100 = scmp.eq.s32.totalorder %s20, 1
    %p101 = por %p99, %p100
    %p102 = scmp.ne.s32.totalorder %s93, %s94
    %p103 = scmp.eq.s32.totalorder %s20, 0
    %p104 = por %p102, %p103
    %p105 = scmp.ne.s32.totalorder %s93, %s94
    %p106 = scmp.eq.s32.totalorder %s21, 1
    %p107 = por %p105, %p106
    %p109 = scmp.ne.s32.totalorder %s94, %s108
    %p110 = scmp.eq.s32.totalorder %s21, 0
    %p111 = por %p109, %p110
    %s113 = sadd.s32 %s112, 1
    %p116 = scmp.eq.s32.totalorder %s15, 1
    %p117 = scmp.ne.s32.totalorder %s112, %s114
    %p118 = scmp.eq.s32.totalorder %s15, 0
    %p119 = por %p117, %p118
    %p120 = scmp.ne.s32.totalorder %s112, %s114
    %p121 = scmp.eq.s32.totalorder %s20, 1
    %p122 = por %p120, %p121
    %p123 = scmp.ne.s32.totalorder %s114, %s115
    %p124 = scmp.eq.s32.totalorder %s20, 0
    %p125 = por %p123, %p124
    %p126 = scmp.ne.s32.totalorder %s114, %s115
    %p127 = scmp.eq.s32.totalorder %s21, 1
    %p128 = por %p126, %p127
    %p130 = scmp.ne.s32.totalorder %s115, %s129
    %p131 = scmp.eq.s32.totalorder %s21, 0
    %p132 = por %p130, %p131
    %s134 = sadd.s32 %s133, 1
    %p137 = scmp.eq.s32.totalorder %s15, 1
    %p138 = scmp.ne.s32.totalorder %s133, %s135
    %p139 = scmp.eq.s32.totalorder %s15, 0
    %p140 = por %p138, %p139
    %p141 = scmp.ne.s32.totalorder %s133, %s135
    %p142 = scmp.eq.s32.totalorder %s20, 1
    %p143 = por %p141, %p142
    %p144 = scmp.ne.s32.totalorder %s135, %s136
    %p145 = scmp.eq.s32.totalorder %s20, 0
    %p146 = por %p144, %p145
    %p147 = scmp.ne.s32.totalorder %s135, %s136
    %p148 = scmp.eq.s32.totalorder %s21, 1
    %p149 = por %p147, %p148
    %p151 = scmp.ne.s32.totalorder %s136, %s150
    %p152 = scmp.eq.s32.totalorder %s21, 0
    %p153 = por %p151, %p152
    %s155 = sadd.s32 %s154, 1
    %p158 = scmp.eq.s32.totalorder %s15, 1
    %p159 = scmp.ne.s32.totalorder %s154, %s156
    %p160 = scmp.eq.s32.totalorder %s15, 0
    %p161 = por %p159, %p160
    %p162 = scmp.ne.s32.totalorder %s154, %s156
    %p163 = scmp.eq.s32.totalorder %s20, 1
    %p164 = por %p162, %p163
    %p165 = scmp.ne.s32.totalorder %s156, %s157
    %p166 = scmp.eq.s32.totalorder %s20, 0
    %p167 = por %p165, %p166
    %p168 = scmp.ne.s32.totalorder %s156, %s157
    %p169 = scmp.eq.s32.totalorder %s21, 1
    %p170 = por %p168, %p169
    %p172 = scmp.ne.s32.totalorder %s157, %s171
    %p173 = scmp.eq.s32.totalorder %s21, 0
    %p174 = por %p172, %p173
    %s176 = sadd.s32 %s175, 1
    %p179 = scmp.eq.s32.totalorder %s15, 1
    %p180 = scmp.ne.s32.totalorder %s175, %s177
    %p181 = scmp.eq.s32.totalorder %s15, 0
    %p182 = por %p180, %p181
    %p183 = scmp.ne.s32.totalorder %s175, %s177
    %p184 = scmp.eq.s32.totalorder %s20, 1
    %p185 = por %p183, %p184
    %p186 = scmp.ne.s32.totalorder %s177, %s178
    %p187 = scmp.eq.s32.totalorder %s20, 0
    %p188 = por %p186, %p187
    %p189 = scmp.ne.s32.totalorder %s177, %s178
    %p190 = scmp.eq.s32.totalorder %s21, 1
    %p191 = por %p189, %p190
    %p193 = scmp.ne.s32.totalorder %s178, %s192
    %p194 = scmp.eq.s32.totalorder %s21, 0
    %p195 = por %p193, %p194
    %s197 = sadd.s32 %s196, 1
    %p200 = scmp.eq.s32.totalorder %s15, 1
    %p201 = scmp.ne.s32.totalorder %s196, %s198
    %p202 = scmp.eq.s32.totalorder %s15, 0
    %p203 = por %p201, %p202
    %p204 = scmp.ne.s32.totalorder %s196, %s198
    %p205 = scmp.eq.s32.totalorder %s20, 1
    %p206 = por %p204, %p205
    %p207 = scmp.ne.s32.totalorder %s198, %s199
    %p208 = scmp.eq.s32.totalorder %s20, 0
    %p209 = por %p207, %p208
    %p210 = scmp.ne.s32.totalorder %s198, %s199
    %p211 = scmp.eq.s32.totalorder %s21, 1
    %p212 = por %p210, %p211
    %p214 = scmp.ne.s32.totalorder %s199, %s213
    %p215 = scmp.eq.s32.totalorder %s21, 0
    %p216 = por %p214, %p215
    %s217 = ssub.s32 %s15, %s22
    %p218 = scmp.eq.s32.totalorder %s217, 0
    %s220 = sadd.s32 %s219, 1
    %s221 = scalar_select %p218, %s219, %s220
    %p224 = pneg %p218
    %p225 = scmp.eq.s32.totalorder %s15, 1
    %p226 = por %p224, %p225
    %p227 = scmp.ne.s32.totalorder %s219, %s222
    %p228 = scmp.eq.s32.totalorder %s15, 0
    %p229 = por %p227, %p228
    %p230 = scmp.ne.s32.totalorder %s219, %s222
    %p231 = scmp.eq.s32.totalorder %s20, 1
    %p232 = por %p230, %p231
    %p233 = scmp.ne.s32.totalorder %s222, %s223
    %p234 = scmp.eq.s32.totalorder %s20, 0
    %p235 = por %p233, %p234
    %p236 = scmp.ne.s32.totalorder %s222, %s223
    %p237 = scmp.eq.s32.totalorder %s21, 1
    %p238 = por %p236, %p237
    %p240 = scmp.ne.s32.totalorder %s223, %s239
    %p241 = scmp.eq.s32.totalorder %s21, 0
    %p242 = por %p240, %p241
    %p243 = scmp.le.s32.totalorder 1, %s15
    %p244 = scmp.lt.s32.totalorder %s15, 3
    %p245 = pnand %p243, %p244
    %p246 = pneg %p245
    // Predicated region
    $region9: #{forward.2} parent=5 // pred_check
      _
    $region10: #{forward.2} parent=5 // pred_check_branch
      %248 = sbr.rel (%p245) target = $region12
    $region11: #{forward.2} parent=5 // pred_region
      %s249 = ssub.s32 %s15, 1
      // Predicated region
      $region13: #{forward.2} parent=11 // pred_check
        %p250 = pneg %p62
      $region14: #{forward.2} parent=11 // pred_check_branch
        %252 = sbr.rel (%p250) target = $region16
      $region15: #{forward.2} parent=11 // pred_region
        _
      $region16: #{forward.2} parent=11 // pred_fallthru
        _
      // Predicated region
      $region17: #{forward.2} parent=11 // pred_check
        %p253 = pneg %p83
      $region18: #{forward.2} parent=11 // pred_check_branch
        %255 = sbr.rel (%p253) target = $region20
      $region19: #{forward.2} parent=11 // pred_region
        _
      $region20: #{forward.2} parent=11 // pred_fallthru
        _
      // Predicated region
      $region21: #{forward.2} parent=11 // pred_check
        %p256 = pneg %p104
      $region22: #{forward.2} parent=11 // pred_check_branch
        %258 = sbr.rel (%p256) target = $region24
      $region23: #{forward.2} parent=11 // pred_region
        _
      $region24: #{forward.2} parent=11 // pred_fallthru
        _
      // Predicated region
      $region25: #{forward.2} parent=11 // pred_check
        %p259 = pneg %p125
      $region26: #{forward.2} parent=11 // pred_check_branch
        %261 = sbr.rel (%p259) target = $region28
      $region27: #{forward.2} parent=11 // pred_region
        _
      $region28: #{forward.2} parent=11 // pred_fallthru
        _
      // Predicated region
      $region29: #{forward.2} parent=11 // pred_check
        %p262 = pneg %p146
      $region30: #{forward.2} parent=11 // pred_check_branch
        %264 = sbr.rel (%p262) target = $region32
      $region31: #{forward.2} parent=11 // pred_region
        _
      $region32: #{forward.2} parent=11 // pred_fallthru
        _
      // Predicated region
      $region33: #{forward.2} parent=11 // pred_check
        %p265 = pneg %p167
      $region34: #{forward.2} parent=11 // pred_check_branch
        %267 = sbr.rel (%p265) target = $region36
      $region35: #{forward.2} parent=11 // pred_region
        _
      $region36: #{forward.2} parent=11 // pred_fallthru
        _
      // Predicated region
      $region37: #{forward.2} parent=11 // pred_check
        %p268 = pneg %p188
      $region38: #{forward.2} parent=11 // pred_check_branch
        %270 = sbr.rel (%p268) target = $region40
      $region39: #{forward.2} parent=11 // pred_region
        _
      $region40: #{forward.2} parent=11 // pred_fallthru
        _
      // Predicated region
      $region41: #{forward.2} parent=11 // pred_check
        %p271 = pneg %p209
      $region42: #{forward.2} parent=11 // pred_check_branch
        %273 = sbr.rel (%p271) target = $region44
      $region43: #{forward.2} parent=11 // pred_region
        _
      $region44: #{forward.2} parent=11 // pred_fallthru
        _
    $region12: #{forward.2} parent=5 // pred_fallthru
      _
    %p274 = scmp.lt.s32.totalorder %s15, 2
    // Predicated region
    $region45: #{forward.2} parent=5 // pred_check
      %p275 = pneg %p274
    $region46: #{forward.2} parent=5 // pred_check_branch
      %277 = sbr.rel (%p275) target = $region48
    $region47: #{forward.2} parent=5 // pred_region
      // Predicated region
      $region49: #{forward.2} parent=47 // pred_check
        %p278 = pneg %p35
      $region50: #{forward.2} parent=47 // pred_check_branch
        %280 = sbr.rel (%p278) target = $region52
      $region51: #{forward.2} parent=47 // pred_region
        %p281 = scmp.lt.s32.totalorder %s15, 1
        %s282 = scalar_select %p281, %s15, 1
        %s283 = smul.addr %s282, 4
        %s284 = smul.addr %s283, 8
        %s285 = scalar_lea.vmem %s0, %s284
      $region52: #{forward.2} parent=47 // pred_fallthru
        _
    $region48: #{forward.2} parent=5 // pred_fallthru
      _
    %p286 = scmp.le.s32.totalorder 1, %s15
    %p287 = scmp.lt.s32.totalorder %s15, 3
    %p288 = pnand %p286, %p287
    %p289 = pneg %p288
    // Predicated region
    $region53: #{forward.2} parent=5 // pred_check
      _
    $region54: #{forward.2} parent=5 // pred_check_branch
      %291 = sbr.rel (%p288) target = $region56
    $region55: #{forward.2} parent=5 // pred_region
      %s292 = ssub.s32 %s15, 1
      %p293 = scmp.lt.s32.totalorder %s20, 1
      %s294 = scalar_select %p293, %s20, 1
      %s295 = smul.addr %s294, 4
      %s296 = smul.addr %s295, 8
      %s297 = scalar_lea.vmem %s0, %s296
      %p298 = pneg %p41
      %p299 = pneg %p38
      %p300 = pneg %p62
      %p301 = pneg %p59
      %p302 = pneg %p83
      %p303 = pneg %p80
      %p304 = pneg %p104
      %p305 = pneg %p101
      %p306 = pneg %p125
      %p307 = pneg %p122
      %p308 = pneg %p146
      %p309 = pneg %p143
      %p310 = pneg %p167
      %p311 = pneg %p164
      %p312 = pneg %p188
      %p313 = pneg %p185
      %p314 = pneg %p209
      %p315 = pneg %p206
      %p316 = pneg %p235
      %p317 = pneg %p232
      %p318 = scmp.lt.s32.totalorder %s20, 1
      %s319 = scalar_select %p318, %s20, 1
      %s320 = smul.addr %s319, 2
      %s321 = smul.addr %s320, 8
      %s322 = scalar_lea.vmem %s9, %s321
      %p323 = scmp.lt.s32.totalorder %s20, 1
      %s324 = scalar_select %p323, %s20, 1
      %s325 = smul.addr %s324, 4
      %s326 = smul.addr %s325, 8
      %s327 = scalar_lea.vmem %s0, %s326
      %p328 = scmp.lt.s32.totalorder %s20, 1
      %s329 = scalar_select %p328, %s20, 1
      %s330 = smul.addr %s329, 2
      %s331 = smul.addr %s330, 8
      %s332 = scalar_lea.vmem %s9, %s331
      %v333 = vld [vmem:[%s327] sm:$0xff]
      %v334 = vld [vmem:[%s327 + $0x8] sm:$0xff]
      %v335 = vld [vmem:[%s327 + $0x10] sm:$0xff]
      %v336 = vld [vmem:[%s327 + $0x18] sm:$0xff]
      %v337 = vld [vmem:[%s1] sm:$0xff]
      %v338 = vld [vmem:[%s1 + $0x8] sm:$0xff]
      %v339 = vld [vmem:[%s1 + $0x10] sm:$0xff]
      %v340 = vld [vmem:[%s1 + $0x18] sm:$0xff]
      %v341 = vld [vmem:[%s1 + $0x20] sm:$0xff]
      %v342 = vld [vmem:[%s1 + $0x28] sm:$0xff]
      %v343 = vld [vmem:[%s1 + $0x30] sm:$0xff]
      %v344 = vld [vmem:[%s1 + $0x38] sm:$0xff]
      %v345 = vld [vmem:[%s1 + $0x40] sm:$0xff]
      %v346 = vld [vmem:[%s1 + $0x48] sm:$0xff]
      %v347 = vld [vmem:[%s1 + $0x50] sm:$0xff]
      %v348 = vld [vmem:[%s1 + $0x58] sm:$0xff]
      %v349 = vld [vmem:[%s1 + $0x60] sm:$0xff]
      %v350 = vld [vmem:[%s1 + $0x68] sm:$0xff]
      %v351 = vld [vmem:[%s1 + $0x70] sm:$0xff]
      %v352 = vld [vmem:[%s1 + $0x78] sm:$0xff]
      %v353 = vld [vmem:[%s1 + $0x80] sm:$0xff]
      %v354 = vld [vmem:[%s1 + $0x88] sm:$0xff]
      %v355 = vld [vmem:[%s1 + $0x90] sm:$0xff]
      %v356 = vld [vmem:[%s1 + $0x98] sm:$0xff]
      %v357 = vld [vmem:[%s1 + $0xa0] sm:$0xff]
      %v358 = vld [vmem:[%s1 + $0xa8] sm:$0xff]
      %v359 = vld [vmem:[%s1 + $0xb0] sm:$0xff]
      %v360 = vld [vmem:[%s1 + $0xb8] sm:$0xff]
      %v361 = vld [vmem:[%s2] sm:$0x1]
      %v363 = vperm.slane %v361, 0
      %vm365 = vcmask 523264
      %v367 = vsel %vm365, %v334, 0
      %v370 = vsel %vm365, %v336, 0
      %372 = vmatpush.msra.mxu0 %v352
      %373 = vmatpush.msra.mxu0 %v351
      %374 = vmatpush.msra.mxu0 %v350
      %375 = vmatpush.msra.mxu0 %v349
      %376 = vmatpush.msra.mxu0 %v348
      %377 = vmatpush.msra.mxu0 %v347
      %378 = vmatpush.msra.mxu0 %v346
      %379 = vmatpush.msra.mxu0 %v345
      %380 = vmatpush.msra.mxu0 %v344
      %381 = vmatpush.msra.mxu0 %v343
      %382 = vmatpush.msra.mxu0 %v342
      %383 = vmatpush.msra.mxu0 %v341
      %384 = vmatpush.msra.mxu0 %v340
      %385 = vmatpush.msra.mxu0 %v339
      %386 = vmatpush.msra.mxu0 %v338
      %387 = vmatpush.msra.mxu0 %v337
      %388 = vmatmul.f32.gmra.mxu0 %v333
      %v389 = vpop.f32.mrf.mxu0
      %v390 = vadd.f32 %v363, %v389
      %391 = vmatmul.f32.gmra.mxu0 %v335
      %v392 = vpop.f32.mrf.mxu0
      %v393 = vadd.f32 %v363, %v392
      %394 = vdwg.mxu0
      %395 = vmatpush.msra.mxu0 0.0
      %396 = vmatpush.msra.mxu0 0.0
      %397 = vmatpush.msra.mxu0 0.0
      %398 = vmatpush.msra.mxu0 0.0
      %399 = vmatpush.msra.mxu0 0.0
      %400 = vmatpush.msra.mxu0 0.0
      %401 = vmatpush.msra.mxu0 0.0
      %402 = vmatpush.msra.mxu0 0.0
      %403 = vmatpush.msra.mxu0 %v360
      %404 = vmatpush.msra.mxu0 %v359
      %405 = vmatpush.msra.mxu0 %v358
      %406 = vmatpush.msra.mxu0 %v357
      %407 = vmatpush.msra.mxu0 %v356
      %408 = vmatpush.msra.mxu0 %v355
      %409 = vmatpush.msra.mxu0 %v354
      %410 = vmatpush.msra.mxu0 %v353
      %411 = vmatmul.f32.gmra.mxu0 %v367
      %v412 = vpop.f32.mrf.mxu0
      %v413 = vadd.f32 %v390, %v412
      %414 = vmatmul.f32.gmra.mxu0 %v370
      %v415 = vpop.f32.mrf.mxu0
      %v416 = vadd.f32 %v393, %v415
      %417 = vdwg.mxu0
      %v418 = vld [vmem:[%s3] sm:$0x1]
      %v419 = vld [vmem:[%s4] sm:$0x1]
      %v420 = vlaneseq
      %v421 = vand.u32 %v420, 127
      %vm422 = vcmp.lt.s32.totalorder %v421, 64
      %423 = vadd.xlane.f32.xlu0 %v413
      %v424 = vpop.xlane.xlu0 %423
      %425 = vadd.xlane.f32.xlu0 %v416
      %v426 = vpop.xlane.xlu0 %425
      %v427 = vmul.f32 %v424, 0.015625
      %v428 = vmul.f32 %v426, 0.015625
      %v429 = vsub.f32 %v413, %v427
      %v430 = vsub.f32 %v416, %v428
      %v431 = vsel %vm422, %v429, 0.0
      %v432 = vsel %vm422, %v430, 0.0
      %v433 = vmul.f32 %v431, %v431
      %v434 = vmul.f32 %v432, %v432
      %435 = vadd.xlane.f32.xlu0 %v433
      %v436 = vpop.xlane.xlu0 %435
      %437 = vadd.xlane.f32.xlu0 %v434
      %v438 = vpop.xlane.xlu0 %437
      %v439 = vmul.f32 %v436, 0.015625
      %v440 = vmul.f32 %v438, 0.015625
      %v441 = vadd.f32 %v439, 1e-05
      %v442 = vadd.f32 %v440, 1e-05
      %v443 = vrsqrt.pop %v441
      %v444 = vmul.f32 %v443, %v441
      %v445 = vmul.f32 %v444, %v443
      %v446 = vmul.f32 0.5, %v445
      %v447 = vsub.f32 1.5, %v446
      %v448 = vmul.f32 %v443, %v447
      %vm449 = vweird.f32 %v441
      %vm450 = vweird.f32 %v443
      %vm451 = vmor %vm449, %vm450
      %v452 = vsel %vm451, %v443, %v448
      %v453 = vrsqrt.pop %v442
      %v454 = vmul.f32 %v453, %v442
      %v455 = vmul.f32 %v454, %v453
      %v456 = vmul.f32 0.5, %v455
      %v457 = vsub.f32 1.5, %v456
      %v458 = vmul.f32 %v453, %v457
      %vm459 = vweird.f32 %v442
      %vm460 = vweird.f32 %v453
      %vm461 = vmor %vm459, %vm460
      %v462 = vsel %vm461, %v453, %v458
      %v463 = vmul.f32 %v431, %v452
      %v464 = vmul.f32 %v432, %v462
      %v466 = vperm.slane %v418, 0
      %v468 = vmul.f32 %v463, %v466
      %v469 = vmul.f32 %v464, %v466
      %v471 = vperm.slane %v419, 0
      %v473 = vadd.f32 %v468, %v471
      %v474 = vadd.f32 %v469, %v471
      %v475 = vld [vmem:[%s5] sm:$0xff]
      %v476 = vld [vmem:[%s5 + $0x8] sm:$0xff]
      %v477 = vld [vmem:[%s5 + $0x10] sm:$0xff]
      %v478 = vld [vmem:[%s5 + $0x18] sm:$0xff]
      %v479 = vld [vmem:[%s5 + $0x20] sm:$0xff]
      %v480 = vld [vmem:[%s5 + $0x28] sm:$0xff]
      %v481 = vld [vmem:[%s5 + $0x30] sm:$0xff]
      %v482 = vld [vmem:[%s5 + $0x38] sm:$0xff]
      %v483 = vld [vmem:[%s5 + $0x40] sm:$0xff]
      %v484 = vld [vmem:[%s5 + $0x48] sm:$0xff]
      %v485 = vld [vmem:[%s5 + $0x50] sm:$0xff]
      %v486 = vld [vmem:[%s5 + $0x58] sm:$0xff]
      %v487 = vld [vmem:[%s5 + $0x60] sm:$0xff]
      %v488 = vld [vmem:[%s5 + $0x68] sm:$0xff]
      %v489 = vld [vmem:[%s5 + $0x70] sm:$0xff]
      %v490 = vld [vmem:[%s5 + $0x78] sm:$0xff]
      %v491 = vld [vmem:[%s5 + $0x80] sm:$0xff]
      %v492 = vld [vmem:[%s5 + $0x88] sm:$0xff]
      %v493 = vld [vmem:[%s5 + $0x90] sm:$0xff]
      %v494 = vld [vmem:[%s5 + $0x98] sm:$0xff]
      %v495 = vld [vmem:[%s5 + $0xa0] sm:$0xff]
      %v496 = vld [vmem:[%s5 + $0xa8] sm:$0xff]
      %v497 = vld [vmem:[%s5 + $0xb0] sm:$0xff]
      %v498 = vld [vmem:[%s5 + $0xb8] sm:$0xff]
      %v499 = vld [vmem:[%s5 + $0xc0] sm:$0xff]
      %v500 = vld [vmem:[%s5 + $0xc8] sm:$0xff]
      %v501 = vld [vmem:[%s5 + $0xd0] sm:$0xff]
      %v502 = vld [vmem:[%s5 + $0xd8] sm:$0xff]
      %v503 = vld [vmem:[%s5 + $0xe0] sm:$0xff]
      %v504 = vld [vmem:[%s5 + $0xe8] sm:$0xff]
      %v505 = vld [vmem:[%s5 + $0xf0] sm:$0xff]
      %v506 = vld [vmem:[%s5 + $0xf8] sm:$0xff]
      %v507 = vld [vmem:[%s6] sm:$0x3]
      %v509 = vperm.slane %v507, 0
      %v510 = vperm.slane %v507, 1
      %513 = vmatpush.msra.mxu0 %v505
      %514 = vmatpush.msra.mxu0 %v503
      %515 = vmatpush.msra.mxu0 %v501
      %516 = vmatpush.msra.mxu0 %v499
      %517 = vmatpush.msra.mxu0 %v497
      %518 = vmatpush.msra.mxu0 %v495
      %519 = vmatpush.msra.mxu0 %v493
      %520 = vmatpush.msra.mxu0 %v491
      %521 = vmatpush.msra.mxu0 %v489
      %522 = vmatpush.msra.mxu0 %v487
      %523 = vmatpush.msra.mxu0 %v485
      %524 = vmatpush.msra.mxu0 %v483
      %525 = vmatpush.msra.mxu0 %v481
      %526 = vmatpush.msra.mxu0 %v479
      %527 = vmatpush.msra.mxu0 %v477
      %528 = vmatpush.msra.mxu0 %v475
      %529 = vmatmul.f32.gmra.mxu0 %v473
      %v530 = vpop.f32.mrf.mxu0
      %v531 = vadd.f32 %v509, %v530
      %532 = vmatmul.f32.gmra.mxu0 %v474
      %v533 = vpop.f32.mrf.mxu0
      %v534 = vadd.f32 %v509, %v533
      %535 = vdwg.mxu0
      %536 = vmatpush.msra.mxu0 %v506
      %537 = vmatpush.msra.mxu0 %v504
      %538 = vmatpush.msra.mxu0 %v502
      %539 = vmatpush.msra.mxu0 %v500
      %540 = vmatpush.msra.mxu0 %v498
      %541 = vmatpush.msra.mxu0 %v496
      %542 = vmatpush.msra.mxu0 %v494
      %543 = vmatpush.msra.mxu0 %v492
      %544 = vmatpush.msra.mxu0 %v490
      %545 = vmatpush.msra.mxu0 %v488
      %546 = vmatpush.msra.mxu0 %v486
      %547 = vmatpush.msra.mxu0 %v484
      %548 = vmatpush.msra.mxu0 %v482
      %549 = vmatpush.msra.mxu0 %v480
      %550 = vmatpush.msra.mxu0 %v478
      %551 = vmatpush.msra.mxu0 %v476
      %552 = vmatmul.f32.gmra.mxu0 %v473
      %v553 = vpop.f32.mrf.mxu0
      %v554 = vadd.f32 %v510, %v553
      %555 = vmatmul.f32.gmra.mxu0 %v474
      %v556 = vpop.f32.mrf.mxu0
      %v557 = vadd.f32 %v510, %v556
      %558 = vdwg.mxu0
      %v559 = vld [vmem:[%s7] sm:$0xff]
      %v560 = vld [vmem:[%s7 + $0x8] sm:$0xff]
      %v561 = vld [vmem:[%s7 + $0x10] sm:$0xff]
      %v562 = vld [vmem:[%s7 + $0x18] sm:$0xff]
      %v563 = vld [vmem:[%s7 + $0x20] sm:$0xff]
      %v564 = vld [vmem:[%s7 + $0x28] sm:$0xff]
      %v565 = vld [vmem:[%s7 + $0x30] sm:$0xff]
      %v566 = vld [vmem:[%s7 + $0x38] sm:$0xff]
      %v567 = vld [vmem:[%s7 + $0x40] sm:$0xff]
      %v568 = vld [vmem:[%s7 + $0x48] sm:$0xff]
      %v569 = vld [vmem:[%s7 + $0x50] sm:$0xff]
      %v570 = vld [vmem:[%s7 + $0x58] sm:$0xff]
      %v571 = vld [vmem:[%s7 + $0x60] sm:$0xff]
      %v572 = vld [vmem:[%s7 + $0x68] sm:$0xff]
      %v573 = vld [vmem:[%s7 + $0x70] sm:$0xff]
      %v574 = vld [vmem:[%s7 + $0x78] sm:$0xff]
      %v575 = vld [vmem:[%s7 + $0x80] sm:$0xff]
      %v576 = vld [vmem:[%s7 + $0x88] sm:$0xff]
      %v577 = vld [vmem:[%s7 + $0x90] sm:$0xff]
      %v578 = vld [vmem:[%s7 + $0x98] sm:$0xff]
      %v579 = vld [vmem:[%s7 + $0xa0] sm:$0xff]
      %v580 = vld [vmem:[%s7 + $0xa8] sm:$0xff]
      %v581 = vld [vmem:[%s7 + $0xb0] sm:$0xff]
      %v582 = vld [vmem:[%s7 + $0xb8] sm:$0xff]
      %v583 = vld [vmem:[%s8] sm:$0x1]
      %v585 = vperm.slane %v583, 0
      %v588 = vsel %vm365, %v554, 0
      %v591 = vsel %vm365, %v557, 0
      %593 = vmatpush.msra.mxu0 %v574
      %594 = vmatpush.msra.mxu0 %v573
      %595 = vmatpush.msra.mxu0 %v572
      %596 = vmatpush.msra.mxu0 %v571
      %597 = vmatpush.msra.mxu0 %v570
      %598 = vmatpush.msra.mxu0 %v569
      %599 = vmatpush.msra.mxu0 %v568
      %600 = vmatpush.msra.mxu0 %v567
      %601 = vmatpush.msra.mxu0 %v566
      %602 = vmatpush.msra.mxu0 %v565
      %603 = vmatpush.msra.mxu0 %v564
      %604 = vmatpush.msra.mxu0 %v563
      %605 = vmatpush.msra.mxu0 %v562
      %606 = vmatpush.msra.mxu0 %v561
      %607 = vmatpush.msra.mxu0 %v560
      %608 = vmatpush.msra.mxu0 %v559
      %609 = vmatmul.f32.gmra.mxu0 %v531
      %v610 = vpop.f32.mrf.mxu0
      %v611 = vadd.f32 %v585, %v610
      %612 = vmatmul.f32.gmra.mxu0 %v534
      %v613 = vpop.f32.mrf.mxu0
      %v614 = vadd.f32 %v585, %v613
      %615 = vdwg.mxu0
      %616 = vmatpush.msra.mxu0 0.0
      %617 = vmatpush.msra.mxu0 0.0
      %618 = vmatpush.msra.mxu0 0.0
      %619 = vmatpush.msra.mxu0 0.0
      %620 = vmatpush.msra.mxu0 0.0
      %621 = vmatpush.msra.mxu0 0.0
      %622 = vmatpush.msra.mxu0 0.0
      %623 = vmatpush.msra.mxu0 0.0
      %624 = vmatpush.msra.mxu0 %v582
      %625 = vmatpush.msra.mxu0 %v581
      %626 = vmatpush.msra.mxu0 %v580
      %627 = vmatpush.msra.mxu0 %v579
      %628 = vmatpush.msra.mxu0 %v578
      %629 = vmatpush.msra.mxu0 %v577
      %630 = vmatpush.msra.mxu0 %v576
      %631 = vmatpush.msra.mxu0 %v575
      %632 = vmatmul.f32.gmra.mxu0 %v588
      %v633 = vpop.f32.mrf.mxu0
      %v634 = vadd.f32 %v611, %v633
      %635 = vmatmul.f32.gmra.mxu0 %v591
      %v636 = vpop.f32.mrf.mxu0
      %v637 = vadd.f32 %v614, %v636
      %638 = vdwg.mxu0
      %639 = vst [vmem:[%s332] sm:$0xff] %v634
      %640 = vst [vmem:[%s332 + $0x8] sm:$0xff] %v637
      %p641 = scmp.lt.s32.totalorder %s20, 1
      %s642 = scalar_select %p641, %s20, 1
      %s643 = smul.addr %s642, 2
      %s644 = smul.addr %s643, 8
      %s645 = scalar_lea.vmem %s9, %s644
      // Predicated region
      $region57: #{forward.2} parent=55 // pred_check
        %p646 = pneg %p232
      $region58: #{forward.2} parent=55 // pred_check_branch
        %648 = sbr.rel (%p646) target = $region60
      $region59: #{forward.2} parent=55 // pred_region
        _
      $region60: #{forward.2} parent=55 // pred_fallthru
        _
    $region56: #{forward.2} parent=5 // pred_fallthru
      _
    %p649 = scmp.le.s32.totalorder 2, %s15
    // Predicated region
    $region61: #{forward.2} parent=5 // pred_check
      %p650 = pneg %p649
    $region62: #{forward.2} parent=5 // pred_check_branch
      %652 = sbr.rel (%p650) target = $region64
    $region63: #{forward.2} parent=5 // pred_region
      %s653 = ssub.s32 %s15, 2
      // Predicated region
      $region65: #{forward.2} parent=63 // pred_check
        %p654 = pneg %p238
      $region66: #{forward.2} parent=63 // pred_check_branch
        %656 = sbr.rel (%p654) target = $region68
      $region67: #{forward.2} parent=63 // pred_region
        %p657 = scmp.lt.s32.totalorder %s21, 1
        %s658 = scalar_select %p657, %s21, 1
        %s659 = smul.addr %s658, 2
        %s660 = smul.addr %s659, 8
        %s661 = scalar_lea.vmem %s9, %s660
      $region68: #{forward.2} parent=63 // pred_fallthru
        _
    $region64: #{forward.2} parent=5 // pred_fallthru
      _
  $region6: #{forward.2} parent=0 // loop_footer
    %s19 = sadd.s32 1, %s15
  $region7: #{forward.2} parent=0 // loop_footer_branch
    %14 = sbr.rel target = $region3
  $region8: #{forward.2} parent=0 // loop_exit
    _

// kernel: forward.3
$region0: #{forward.3}
  #allocation0 [shape = 'u32[]', space=smem, size = 0x4, offset = 0x4, fixed_abs, tag = 'smem constant byte address 0x4 - core index']
  #allocation1 [shape = 'u32[72,128]{1,0:T(1,128)}', space=vmem, size = 0x9000, scoped, tag = 'internal scratch']
  %s0 = inlined_call_operand.vmem [shape: f32[2,24,128], index: 0, kind: input, shape index: {}]
  %s1 = inlined_call_operand.vmem [shape: f32[2,1,128], index: 1, kind: input, shape index: {}]
  %s2 = inlined_call_operand.vmem [shape: f32[2,1,128], index: 2, kind: input, shape index: {}]
  %s3 = inlined_call_operand.vmem [shape: f32[2,4,128,16], index: 3, kind: input, shape index: {}]
  %s4 = inlined_call_operand.vmem [shape: f32[2,4,128,16], index: 4, kind: input, shape index: {}]
  %s5 = inlined_call_operand.vmem [shape: f32[2,4,128,16], index: 5, kind: input, shape index: {}]
  %s6 = inlined_call_operand.vmem [shape: f32[2,4,16,128], index: 6, kind: input, shape index: {}]
  %s7 = inlined_call_operand.vmem [shape: f32[2,1,128], index: 7, kind: input, shape index: {}]
  %s8 = inlined_call_operand.vmem [shape: f32[2,1,128], index: 8, kind: input, shape index: {}]
  %s9 = inlined_call_operand.vmem [shape: f32[2,1,128], index: 9, kind: input, shape index: {}]
  %s10 = inlined_call_operand.vmem [shape: f32[2,128,128], index: 10, kind: input, shape index: {}]
  %s11 = inlined_call_operand.vmem [shape: f32[2,1,128], index: 11, kind: input, shape index: {}]
  %s12 = inlined_call_operand.vmem [shape: f32[2,128,128], index: 12, kind: input, shape index: {}]
  %s13 = inlined_call_operand.vmem [shape: f32[2,1,128], index: 13, kind: input, shape index: {}]
  %s14 = inlined_call_operand.vmem [shape: f32[1,128], index: 14, kind: input, shape index: {}]
  %s15 = inlined_call_operand.vmem [shape: f32[1,128], index: 15, kind: input, shape index: {}]
  %s16 = inlined_call_operand.vmem [shape: f32[128,128], index: 16, kind: input, shape index: {}]
  %s17 = inlined_call_operand.vmem [shape: f32[1,128], index: 17, kind: input, shape index: {}]
  %s18 = inlined_call_operand.vmem [shape: f32[2,8,128], index: 18, kind: output, shape index: {}]
  %s19 = sld [smem:[#allocation0]]
  $region105: #{forward.3} parent=0
    _
  %s21 = ssub.s32 1, %s19
  %s22 = scalar_select 0, %s21, %s19
  loop: start=0, step=1, limit=4
  $region2: #{forward.3} parent=0 // loop_pre_header
    _
  $region3: #{forward.3} parent=0 // loop_header
    %s24 = sphi 0, %s28
    %p25 = scmp.ge.s32.totalorder %s24, 4
    %s34 = sphi 0, %s36
    %s37 = sphi 0, %s34
    %s38 = sphi 0, %s37
    %s54 = sphi 0, %s38
    %s58 = sphi 0, %s58
    %s60 = sphi 0, %s58
    %s61 = sphi 0, %s60
    %s75 = sphi 0, %s61
    %s79 = sphi 0, %s79
    %s81 = sphi 0, %s79
    %s82 = sphi 0, %s81
    %s96 = sphi 0, %s82
    %s100 = sphi 0, %s100
    %s102 = sphi 0, %s100
    %s103 = sphi 0, %s102
    %s117 = sphi 0, %s103
    %s121 = sphi 0, %s121
    %s123 = sphi 0, %s121
    %s124 = sphi 0, %s123
    %s138 = sphi 0, %s124
    %s142 = sphi 0, %s142
    %s144 = sphi 0, %s142
    %s145 = sphi 0, %s144
    %s159 = sphi 0, %s145
    %s163 = sphi 0, %s163
    %s165 = sphi 0, %s163
    %s166 = sphi 0, %s165
    %s180 = sphi 0, %s166
    %s184 = sphi 0, %s184
    %s186 = sphi 0, %s184
    %s187 = sphi 0, %s186
    %s201 = sphi 0, %s187
    %s205 = sphi 0, %s205
    %s207 = sphi 0, %s205
    %s208 = sphi 0, %s207
    %s222 = sphi 0, %s208
    %s226 = sphi 0, %s226
    %s228 = sphi 0, %s226
    %s229 = sphi 0, %s228
    %s243 = sphi 0, %s229
    %s247 = sphi 0, %s247
    %s249 = sphi 0, %s247
    %s250 = sphi 0, %s249
    %s264 = sphi 0, %s250
    %s268 = sphi 0, %s268
    %s270 = sphi 0, %s268
    %s271 = sphi 0, %s270
    %s285 = sphi 0, %s271
    %s289 = sphi 0, %s289
    %s291 = sphi 0, %s289
    %s292 = sphi 0, %s291
    %s306 = sphi 0, %s292
    %s310 = sphi 0, %s310
    %s312 = sphi 0, %s310
    %s313 = sphi 0, %s312
    %s327 = sphi 0, %s313
    %s331 = sphi 0, %s331
    %s333 = sphi 0, %s331
    %s334 = sphi 0, %s333
    %s348 = sphi 0, %s334
    %s352 = sphi 0, %s352
    %s354 = sphi 0, %s352
    %s355 = sphi 0, %s354
    %s369 = sphi 0, %s355
    %s373 = sphi 0, %s373
    %s375 = sphi 0, %s373
    %s376 = sphi 0, %s375
    %s390 = sphi 0, %s376
    %s394 = sphi 0, %s394
    %s396 = sphi 0, %s394
    %s397 = sphi 0, %s396
    %s411 = sphi 0, %s397
    %s417 = sphi 0, %s419
    %s420 = sphi 0, %s417
    %s421 = sphi 0, %s420
    %s437 = sphi 0, %s421
  $region4: #{forward.3} parent=0 // loop_header_branch
    %27 = sbr.rel (%p25) target = $region8
  $region5: #{forward.3} parent=0 // loop_body
    %s29 = ssub.s32 %s24, 1
    %s30 = ssub.s32 %s24, 2
    %s31 = sadd.s32 %s24, 1
    %s32 = ssub.s32 %s24, %s31
    %p33 = scmp.eq.s32.totalorder %s32, 0
    %s35 = sadd.s32 %s34, 1
    %s36 = scalar_select %p33, %s34, %s35
    %p39 = pneg %p33
    %p40 = scmp.eq.s32.totalorder %s24, 1
    %p41 = por %p39, %p40
    %p42 = scmp.ne.s32.totalorder %s34, %s37
    %p43 = scmp.eq.s32.totalorder %s24, 0
    %p44 = por %p42, %p43
    %p45 = scmp.ne.s32.totalorder %s34, %s37
    %p46 = scmp.eq.s32.totalorder %s29, 1
    %p47 = por %p45, %p46
    %p48 = scmp.ne.s32.totalorder %s37, %s38
    %p49 = scmp.eq.s32.totalorder %s29, 0
    %p50 = por %p48, %p49
    %p51 = scmp.ne.s32.totalorder %s37, %s38
    %p52 = scmp.eq.s32.totalorder %s30, 1
    %p53 = por %p51, %p52
    %p55 = scmp.ne.s32.totalorder %s38, %s54
    %p56 = scmp.eq.s32.totalorder %s30, 0
    %p57 = por %p55, %p56
    %s59 = sadd.s32 %s58, 1
    %p62 = scmp.eq.s32.totalorder %s24, 1
    %p63 = scmp.ne.s32.totalorder %s58, %s60
    %p64 = scmp.eq.s32.totalorder %s24, 0
    %p65 = por %p63, %p64
    %p66 = scmp.ne.s32.totalorder %s58, %s60
    %p67 = scmp.eq.s32.totalorder %s29, 1
    %p68 = por %p66, %p67
    %p69 = scmp.ne.s32.totalorder %s60, %s61
    %p70 = scmp.eq.s32.totalorder %s29, 0
    %p71 = por %p69, %p70
    %p72 = scmp.ne.s32.totalorder %s60, %s61
    %p73 = scmp.eq.s32.totalorder %s30, 1
    %p74 = por %p72, %p73
    %p76 = scmp.ne.s32.totalorder %s61, %s75
    %p77 = scmp.eq.s32.totalorder %s30, 0
    %p78 = por %p76, %p77
    %s80 = sadd.s32 %s79, 1
    %p83 = scmp.eq.s32.totalorder %s24, 1
    %p84 = scmp.ne.s32.totalorder %s79, %s81
    %p85 = scmp.eq.s32.totalorder %s24, 0
    %p86 = por %p84, %p85
    %p87 = scmp.ne.s32.totalorder %s79, %s81
    %p88 = scmp.eq.s32.totalorder %s29, 1
    %p89 = por %p87, %p88
    %p90 = scmp.ne.s32.totalorder %s81, %s82
    %p91 = scmp.eq.s32.totalorder %s29, 0
    %p92 = por %p90, %p91
    %p93 = scmp.ne.s32.totalorder %s81, %s82
    %p94 = scmp.eq.s32.totalorder %s30, 1
    %p95 = por %p93, %p94
    %p97 = scmp.ne.s32.totalorder %s82, %s96
    %p98 = scmp.eq.s32.totalorder %s30, 0
    %p99 = por %p97, %p98
    %s101 = sadd.s32 %s100, 1
    %p104 = scmp.eq.s32.totalorder %s24, 1
    %p105 = scmp.ne.s32.totalorder %s100, %s102
    %p106 = scmp.eq.s32.totalorder %s24, 0
    %p107 = por %p105, %p106
    %p108 = scmp.ne.s32.totalorder %s100, %s102
    %p109 = scmp.eq.s32.totalorder %s29, 1
    %p110 = por %p108, %p109
    %p111 = scmp.ne.s32.totalorder %s102, %s103
    %p112 = scmp.eq.s32.totalorder %s29, 0
    %p113 = por %p111, %p112
    %p114 = scmp.ne.s32.totalorder %s102, %s103
    %p115 = scmp.eq.s32.totalorder %s30, 1
    %p116 = por %p114, %p115
    %p118 = scmp.ne.s32.totalorder %s103, %s117
    %p119 = scmp.eq.s32.totalorder %s30, 0
    %p120 = por %p118, %p119
    %s122 = sadd.s32 %s121, 1
    %p125 = scmp.eq.s32.totalorder %s24, 1
    %p126 = scmp.ne.s32.totalorder %s121, %s123
    %p127 = scmp.eq.s32.totalorder %s24, 0
    %p128 = por %p126, %p127
    %p129 = scmp.ne.s32.totalorder %s121, %s123
    %p130 = scmp.eq.s32.totalorder %s29, 1
    %p131 = por %p129, %p130
    %p132 = scmp.ne.s32.totalorder %s123, %s124
    %p133 = scmp.eq.s32.totalorder %s29, 0
    %p134 = por %p132, %p133
    %p135 = scmp.ne.s32.totalorder %s123, %s124
    %p136 = scmp.eq.s32.totalorder %s30, 1
    %p137 = por %p135, %p136
    %p139 = scmp.ne.s32.totalorder %s124, %s138
    %p140 = scmp.eq.s32.totalorder %s30, 0
    %p141 = por %p139, %p140
    %s143 = sadd.s32 %s142, 1
    %p146 = scmp.eq.s32.totalorder %s24, 1
    %p147 = scmp.ne.s32.totalorder %s142, %s144
    %p148 = scmp.eq.s32.totalorder %s24, 0
    %p149 = por %p147, %p148
    %p150 = scmp.ne.s32.totalorder %s142, %s144
    %p151 = scmp.eq.s32.totalorder %s29, 1
    %p152 = por %p150, %p151
    %p153 = scmp.ne.s32.totalorder %s144, %s145
    %p154 = scmp.eq.s32.totalorder %s29, 0
    %p155 = por %p153, %p154
    %p156 = scmp.ne.s32.totalorder %s144, %s145
    %p157 = scmp.eq.s32.totalorder %s30, 1
    %p158 = por %p156, %p157
    %p160 = scmp.ne.s32.totalorder %s145, %s159
    %p161 = scmp.eq.s32.totalorder %s30, 0
    %p162 = por %p160, %p161
    %s164 = sadd.s32 %s163, 1
    %p167 = scmp.eq.s32.totalorder %s24, 1
    %p168 = scmp.ne.s32.totalorder %s163, %s165
    %p169 = scmp.eq.s32.totalorder %s24, 0
    %p170 = por %p168, %p169
    %p171 = scmp.ne.s32.totalorder %s163, %s165
    %p172 = scmp.eq.s32.totalorder %s29, 1
    %p173 = por %p171, %p172
    %p174 = scmp.ne.s32.totalorder %s165, %s166
    %p175 = scmp.eq.s32.totalorder %s29, 0
    %p176 = por %p174, %p175
    %p177 = scmp.ne.s32.totalorder %s165, %s166
    %p178 = scmp.eq.s32.totalorder %s30, 1
    %p179 = por %p177, %p178
    %p181 = scmp.ne.s32.totalorder %s166, %s180
    %p182 = scmp.eq.s32.totalorder %s30, 0
    %p183 = por %p181, %p182
    %s185 = sadd.s32 %s184, 1
    %p188 = scmp.eq.s32.totalorder %s24, 1
    %p189 = scmp.ne.s32.totalorder %s184, %s186
    %p190 = scmp.eq.s32.totalorder %s24, 0
    %p191 = por %p189, %p190
    %p192 = scmp.ne.s32.totalorder %s184, %s186
    %p193 = scmp.eq.s32.totalorder %s29, 1
    %p194 = por %p192, %p193
    %p195 = scmp.ne.s32.totalorder %s186, %s187
    %p196 = scmp.eq.s32.totalorder %s29, 0
    %p197 = por %p195, %p196
    %p198 = scmp.ne.s32.totalorder %s186, %s187
    %p199 = scmp.eq.s32.totalorder %s30, 1
    %p200 = por %p198, %p199
    %p202 = scmp.ne.s32.totalorder %s187, %s201
    %p203 = scmp.eq.s32.totalorder %s30, 0
    %p204 = por %p202, %p203
    %s206 = sadd.s32 %s205, 1
    %p209 = scmp.eq.s32.totalorder %s24, 1
    %p210 = scmp.ne.s32.totalorder %s205, %s207
    %p211 = scmp.eq.s32.totalorder %s24, 0
    %p212 = por %p210, %p211
    %p213 = scmp.ne.s32.totalorder %s205, %s207
    %p214 = scmp.eq.s32.totalorder %s29, 1
    %p215 = por %p213, %p214
    %p216 = scmp.ne.s32.totalorder %s207, %s208
    %p217 = scmp.eq.s32.totalorder %s29, 0
    %p218 = por %p216, %p217
    %p219 = scmp.ne.s32.totalorder %s207, %s208
    %p220 = scmp.eq.s32.totalorder %s30, 1
    %p221 = por %p219, %p220
    %p223 = scmp.ne.s32.totalorder %s208, %s222
    %p224 = scmp.eq.s32.totalorder %s30, 0
    %p225 = por %p223, %p224
    %s227 = sadd.s32 %s226, 1
    %p230 = scmp.eq.s32.totalorder %s24, 1
    %p231 = scmp.ne.s32.totalorder %s226, %s228
    %p232 = scmp.eq.s32.totalorder %s24, 0
    %p233 = por %p231, %p232
    %p234 = scmp.ne.s32.totalorder %s226, %s228
    %p235 = scmp.eq.s32.totalorder %s29, 1
    %p236 = por %p234, %p235
    %p237 = scmp.ne.s32.totalorder %s228, %s229
    %p238 = scmp.eq.s32.totalorder %s29, 0
    %p239 = por %p237, %p238
    %p240 = scmp.ne.s32.totalorder %s228, %s229
    %p241 = scmp.eq.s32.totalorder %s30, 1
    %p242 = por %p240, %p241
    %p244 = scmp.ne.s32.totalorder %s229, %s243
    %p245 = scmp.eq.s32.totalorder %s30, 0
    %p246 = por %p244, %p245
    %s248 = sadd.s32 %s247, 1
    %p251 = scmp.eq.s32.totalorder %s24, 1
    %p252 = scmp.ne.s32.totalorder %s247, %s249
    %p253 = scmp.eq.s32.totalorder %s24, 0
    %p254 = por %p252, %p253
    %p255 = scmp.ne.s32.totalorder %s247, %s249
    %p256 = scmp.eq.s32.totalorder %s29, 1
    %p257 = por %p255, %p256
    %p258 = scmp.ne.s32.totalorder %s249, %s250
    %p259 = scmp.eq.s32.totalorder %s29, 0
    %p260 = por %p258, %p259
    %p261 = scmp.ne.s32.totalorder %s249, %s250
    %p262 = scmp.eq.s32.totalorder %s30, 1
    %p263 = por %p261, %p262
    %p265 = scmp.ne.s32.totalorder %s250, %s264
    %p266 = scmp.eq.s32.totalorder %s30, 0
    %p267 = por %p265, %p266
    %s269 = sadd.s32 %s268, 1
    %p272 = scmp.eq.s32.totalorder %s24, 1
    %p273 = scmp.ne.s32.totalorder %s268, %s270
    %p274 = scmp.eq.s32.totalorder %s24, 0
    %p275 = por %p273, %p274
    %p276 = scmp.ne.s32.totalorder %s268, %s270
    %p277 = scmp.eq.s32.totalorder %s29, 1
    %p278 = por %p276, %p277
    %p279 = scmp.ne.s32.totalorder %s270, %s271
    %p280 = scmp.eq.s32.totalorder %s29, 0
    %p281 = por %p279, %p280
    %p282 = scmp.ne.s32.totalorder %s270, %s271
    %p283 = scmp.eq.s32.totalorder %s30, 1
    %p284 = por %p282, %p283
    %p286 = scmp.ne.s32.totalorder %s271, %s285
    %p287 = scmp.eq.s32.totalorder %s30, 0
    %p288 = por %p286, %p287
    %s290 = sadd.s32 %s289, 1
    %p293 = scmp.eq.s32.totalorder %s24, 1
    %p294 = scmp.ne.s32.totalorder %s289, %s291
    %p295 = scmp.eq.s32.totalorder %s24, 0
    %p296 = por %p294, %p295
    %p297 = scmp.ne.s32.totalorder %s289, %s291
    %p298 = scmp.eq.s32.totalorder %s29, 1
    %p299 = por %p297, %p298
    %p300 = scmp.ne.s32.totalorder %s291, %s292
    %p301 = scmp.eq.s32.totalorder %s29, 0
    %p302 = por %p300, %p301
    %p303 = scmp.ne.s32.totalorder %s291, %s292
    %p304 = scmp.eq.s32.totalorder %s30, 1
    %p305 = por %p303, %p304
    %p307 = scmp.ne.s32.totalorder %s292, %s306
    %p308 = scmp.eq.s32.totalorder %s30, 0
    %p309 = por %p307, %p308
    %s311 = sadd.s32 %s310, 1
    %p314 = scmp.eq.s32.totalorder %s24, 1
    %p315 = scmp.ne.s32.totalorder %s310, %s312
    %p316 = scmp.eq.s32.totalorder %s24, 0
    %p317 = por %p315, %p316
    %p318 = scmp.ne.s32.totalorder %s310, %s312
    %p319 = scmp.eq.s32.totalorder %s29, 1
    %p320 = por %p318, %p319
    %p321 = scmp.ne.s32.totalorder %s312, %s313
    %p322 = scmp.eq.s32.totalorder %s29, 0
    %p323 = por %p321, %p322
    %p324 = scmp.ne.s32.totalorder %s312, %s313
    %p325 = scmp.eq.s32.totalorder %s30, 1
    %p326 = por %p324, %p325
    %p328 = scmp.ne.s32.totalorder %s313, %s327
    %p329 = scmp.eq.s32.totalorder %s30, 0
    %p330 = por %p328, %p329
    %s332 = sadd.s32 %s331, 1
    %p335 = scmp.eq.s32.totalorder %s24, 1
    %p336 = scmp.ne.s32.totalorder %s331, %s333
    %p337 = scmp.eq.s32.totalorder %s24, 0
    %p338 = por %p336, %p337
    %p339 = scmp.ne.s32.totalorder %s331, %s333
    %p340 = scmp.eq.s32.totalorder %s29, 1
    %p341 = por %p339, %p340
    %p342 = scmp.ne.s32.totalorder %s333, %s334
    %p343 = scmp.eq.s32.totalorder %s29, 0
    %p344 = por %p342, %p343
    %p345 = scmp.ne.s32.totalorder %s333, %s334
    %p346 = scmp.eq.s32.totalorder %s30, 1
    %p347 = por %p345, %p346
    %p349 = scmp.ne.s32.totalorder %s334, %s348
    %p350 = scmp.eq.s32.totalorder %s30, 0
    %p351 = por %p349, %p350
    %s353 = sadd.s32 %s352, 1
    %p356 = scmp.eq.s32.totalorder %s24, 1
    %p357 = scmp.ne.s32.totalorder %s352, %s354
    %p358 = scmp.eq.s32.totalorder %s24, 0
    %p359 = por %p357, %p358
    %p360 = scmp.ne.s32.totalorder %s352, %s354
    %p361 = scmp.eq.s32.totalorder %s29, 1
    %p362 = por %p360, %p361
    %p363 = scmp.ne.s32.totalorder %s354, %s355
    %p364 = scmp.eq.s32.totalorder %s29, 0
    %p365 = por %p363, %p364
    %p366 = scmp.ne.s32.totalorder %s354, %s355
    %p367 = scmp.eq.s32.totalorder %s30, 1
    %p368 = por %p366, %p367
    %p370 = scmp.ne.s32.totalorder %s355, %s369
    %p371 = scmp.eq.s32.totalorder %s30, 0
    %p372 = por %p370, %p371
    %s374 = sadd.s32 %s373, 1
    %p377 = scmp.eq.s32.totalorder %s24, 1
    %p378 = scmp.ne.s32.totalorder %s373, %s375
    %p379 = scmp.eq.s32.totalorder %s24, 0
    %p380 = por %p378, %p379
    %p381 = scmp.ne.s32.totalorder %s373, %s375
    %p382 = scmp.eq.s32.totalorder %s29, 1
    %p383 = por %p381, %p382
    %p384 = scmp.ne.s32.totalorder %s375, %s376
    %p385 = scmp.eq.s32.totalorder %s29, 0
    %p386 = por %p384, %p385
    %p387 = scmp.ne.s32.totalorder %s375, %s376
    %p388 = scmp.eq.s32.totalorder %s30, 1
    %p389 = por %p387, %p388
    %p391 = scmp.ne.s32.totalorder %s376, %s390
    %p392 = scmp.eq.s32.totalorder %s30, 0
    %p393 = por %p391, %p392
    %s395 = sadd.s32 %s394, 1
    %p398 = scmp.eq.s32.totalorder %s24, 1
    %p399 = scmp.ne.s32.totalorder %s394, %s396
    %p400 = scmp.eq.s32.totalorder %s24, 0
    %p401 = por %p399, %p400
    %p402 = scmp.ne.s32.totalorder %s394, %s396
    %p403 = scmp.eq.s32.totalorder %s29, 1
    %p404 = por %p402, %p403
    %p405 = scmp.ne.s32.totalorder %s396, %s397
    %p406 = scmp.eq.s32.totalorder %s29, 0
    %p407 = por %p405, %p406
    %p408 = scmp.ne.s32.totalorder %s396, %s397
    %p409 = scmp.eq.s32.totalorder %s30, 1
    %p410 = por %p408, %p409
    %p412 = scmp.ne.s32.totalorder %s397, %s411
    %p413 = scmp.eq.s32.totalorder %s30, 0
    %p414 = por %p412, %p413
    %s415 = ssub.s32 %s24, %s31
    %p416 = scmp.eq.s32.totalorder %s415, 0
    %s418 = sadd.s32 %s417, 1
    %s419 = scalar_select %p416, %s417, %s418
    %p422 = pneg %p416
    %p423 = scmp.eq.s32.totalorder %s24, 1
    %p424 = por %p422, %p423
    %p425 = scmp.ne.s32.totalorder %s417, %s420
    %p426 = scmp.eq.s32.totalorder %s24, 0
    %p427 = por %p425, %p426
    %p428 = scmp.ne.s32.totalorder %s417, %s420
    %p429 = scmp.eq.s32.totalorder %s29, 1
    %p430 = por %p428, %p429
    %p431 = scmp.ne.s32.totalorder %s420, %s421
    %p432 = scmp.eq.s32.totalorder %s29, 0
    %p433 = por %p431, %p432
    %p434 = scmp.ne.s32.totalorder %s420, %s421
    %p435 = scmp.eq.s32.totalorder %s30, 1
    %p436 = por %p434, %p435
    %p438 = scmp.ne.s32.totalorder %s421, %s437
    %p439 = scmp.eq.s32.totalorder %s30, 0
    %p440 = por %p438, %p439
    %p441 = scmp.le.s32.totalorder 1, %s24
    %p442 = scmp.lt.s32.totalorder %s24, 3
    %p443 = pnand %p441, %p442
    %p444 = pneg %p443
    // Predicated region
    $region9: #{forward.3} parent=5 // pred_check
      _
    $region10: #{forward.3} parent=5 // pred_check_branch
      %446 = sbr.rel (%p443) target = $region12
    $region11: #{forward.3} parent=5 // pred_region
      %s447 = ssub.s32 %s24, 1
      // Predicated region
      $region13: #{forward.3} parent=11 // pred_check
        %p448 = pneg %p71
      $region14: #{forward.3} parent=11 // pred_check_branch
        %450 = sbr.rel (%p448) target = $region16
      $region15: #{forward.3} parent=11 // pred_region
        _
      $region16: #{forward.3} parent=11 // pred_fallthru
        _
      // Predicated region
      $region17: #{forward.3} parent=11 // pred_check
        %p451 = pneg %p92
      $region18: #{forward.3} parent=11 // pred_check_branch
        %453 = sbr.rel (%p451) target = $region20
      $region19: #{forward.3} parent=11 // pred_region
        _
      $region20: #{forward.3} parent=11 // pred_fallthru
        _
      // Predicated region
      $region21: #{forward.3} parent=11 // pred_check
        %p454 = pneg %p113
      $region22: #{forward.3} parent=11 // pred_check_branch
        %456 = sbr.rel (%p454) target = $region24
      $region23: #{forward.3} parent=11 // pred_region
        _
      $region24: #{forward.3} parent=11 // pred_fallthru
        _
      // Predicated region
      $region25: #{forward.3} parent=11 // pred_check
        %p457 = pneg %p134
      $region26: #{forward.3} parent=11 // pred_check_branch
        %459 = sbr.rel (%p457) target = $region28
      $region27: #{forward.3} parent=11 // pred_region
        _
      $region28: #{forward.3} parent=11 // pred_fallthru
        _
      // Predicated region
      $region29: #{forward.3} parent=11 // pred_check
        %p460 = pneg %p155
      $region30: #{forward.3} parent=11 // pred_check_branch
        %462 = sbr.rel (%p460) target = $region32
      $region31: #{forward.3} parent=11 // pred_region
        _
      $region32: #{forward.3} parent=11 // pred_fallthru
        _
      // Predicated region
      $region33: #{forward.3} parent=11 // pred_check
        %p463 = pneg %p176
      $region34: #{forward.3} parent=11 // pred_check_branch
        %465 = sbr.rel (%p463) target = $region36
      $region35: #{forward.3} parent=11 // pred_region
        _
      $region36: #{forward.3} parent=11 // pred_fallthru
        _
      // Predicated region
      $region37: #{forward.3} parent=11 // pred_check
        %p466 = pneg %p197
      $region38: #{forward.3} parent=11 // pred_check_branch
        %468 = sbr.rel (%p466) target = $region40
      $region39: #{forward.3} parent=11 // pred_region
        _
      $region40: #{forward.3} parent=11 // pred_fallthru
        _
      // Predicated region
      $region41: #{forward.3} parent=11 // pred_check
        %p469 = pneg %p218
      $region42: #{forward.3} parent=11 // pred_check_branch
        %471 = sbr.rel (%p469) target = $region44
      $region43: #{forward.3} parent=11 // pred_region
        _
      $region44: #{forward.3} parent=11 // pred_fallthru
        _
      // Predicated region
      $region45: #{forward.3} parent=11 // pred_check
        %p472 = pneg %p239
      $region46: #{forward.3} parent=11 // pred_check_branch
        %474 = sbr.rel (%p472) target = $region48
      $region47: #{forward.3} parent=11 // pred_region
        _
      $region48: #{forward.3} parent=11 // pred_fallthru
        _
      // Predicated region
      $region49: #{forward.3} parent=11 // pred_check
        %p475 = pneg %p260
      $region50: #{forward.3} parent=11 // pred_check_branch
        %477 = sbr.rel (%p475) target = $region52
      $region51: #{forward.3} parent=11 // pred_region
        _
      $region52: #{forward.3} parent=11 // pred_fallthru
        _
      // Predicated region
      $region53: #{forward.3} parent=11 // pred_check
        %p478 = pneg %p281
      $region54: #{forward.3} parent=11 // pred_check_branch
        %480 = sbr.rel (%p478) target = $region56
      $region55: #{forward.3} parent=11 // pred_region
        _
      $region56: #{forward.3} parent=11 // pred_fallthru
        _
      // Predicated region
      $region57: #{forward.3} parent=11 // pred_check
        %p481 = pneg %p302
      $region58: #{forward.3} parent=11 // pred_check_branch
        %483 = sbr.rel (%p481) target = $region60
      $region59: #{forward.3} parent=11 // pred_region
        _
      $region60: #{forward.3} parent=11 // pred_fallthru
        _
      // Predicated region
      $region61: #{forward.3} parent=11 // pred_check
        %p484 = pneg %p323
      $region62: #{forward.3} parent=11 // pred_check_branch
        %486 = sbr.rel (%p484) target = $region64
      $region63: #{forward.3} parent=11 // pred_region
        _
      $region64: #{forward.3} parent=11 // pred_fallthru
        _
      // Predicated region
      $region65: #{forward.3} parent=11 // pred_check
        %p487 = pneg %p344
      $region66: #{forward.3} parent=11 // pred_check_branch
        %489 = sbr.rel (%p487) target = $region68
      $region67: #{forward.3} parent=11 // pred_region
        _
      $region68: #{forward.3} parent=11 // pred_fallthru
        _
      // Predicated region
      $region69: #{forward.3} parent=11 // pred_check
        %p490 = pneg %p365
      $region70: #{forward.3} parent=11 // pred_check_branch
        %492 = sbr.rel (%p490) target = $region72
      $region71: #{forward.3} parent=11 // pred_region
        _
      $region72: #{forward.3} parent=11 // pred_fallthru
        _
      // Predicated region
      $region73: #{forward.3} parent=11 // pred_check
        %p493 = pneg %p386
      $region74: #{forward.3} parent=11 // pred_check_branch
        %495 = sbr.rel (%p493) target = $region76
      $region75: #{forward.3} parent=11 // pred_region
        _
      $region76: #{forward.3} parent=11 // pred_fallthru
        _
      // Predicated region
      $region77: #{forward.3} parent=11 // pred_check
        %p496 = pneg %p407
      $region78: #{forward.3} parent=11 // pred_check_branch
        %498 = sbr.rel (%p496) target = $region80
      $region79: #{forward.3} parent=11 // pred_region
        _
      $region80: #{forward.3} parent=11 // pred_fallthru
        _
    $region12: #{forward.3} parent=5 // pred_fallthru
      _
    %p499 = scmp.lt.s32.totalorder %s24, 2
    // Predicated region
    $region81: #{forward.3} parent=5 // pred_check
      %p500 = pneg %p499
    $region82: #{forward.3} parent=5 // pred_check_branch
      %502 = sbr.rel (%p500) target = $region84
    $region83: #{forward.3} parent=5 // pred_region
      // Predicated region
      $region85: #{forward.3} parent=83 // pred_check
        %p503 = pneg %p44
      $region86: #{forward.3} parent=83 // pred_check_branch
        %505 = sbr.rel (%p503) target = $region88
      $region87: #{forward.3} parent=83 // pred_region
        %p506 = scmp.lt.s32.totalorder %s24, 1
        %s507 = scalar_select %p506, %s24, 1
        %s508 = smul.addr %s507, 3
        %s509 = smul.addr %s508, 8
        %s510 = scalar_lea.vmem %s0, %s509
      $region88: #{forward.3} parent=83 // pred_fallthru
        _
    $region84: #{forward.3} parent=5 // pred_fallthru
      _
    %p511 = scmp.le.s32.totalorder 1, %s24
    %p512 = scmp.lt.s32.totalorder %s24, 3
    %p513 = pnand %p511, %p512
    %p514 = pneg %p513
    // Predicated region
    $region89: #{forward.3} parent=5 // pred_check
      _
    $region90: #{forward.3} parent=5 // pred_check_branch
      %516 = sbr.rel (%p513) target = $region92
    $region91: #{forward.3} parent=5 // pred_region
      %s517 = ssub.s32 %s24, 1
      %p518 = scmp.lt.s32.totalorder %s29, 1
      %s519 = scalar_select %p518, %s29, 1
      %s520 = smul.addr %s519, 3
      %s521 = smul.addr %s520, 8
      %s522 = scalar_lea.vmem %s0, %s521
      %p523 = pneg %p50
      %p524 = pneg %p47
      %p525 = pneg %p71
      %p526 = pneg %p68
      %p527 = pneg %p92
      %p528 = pneg %p89
      %p529 = pneg %p113
      %p530 = pneg %p110
      %p531 = pneg %p134
      %p532 = pneg %p131
      %p533 = pneg %p155
      %p534 = pneg %p152
      %p535 = pneg %p176
      %p536 = pneg %p173
      %p537 = pneg %p197
      %p538 = pneg %p194
      %p539 = pneg %p218
      %p540 = pneg %p215
      %p541 = pneg %p239
      %p542 = pneg %p236
      %p543 = pneg %p260
      %p544 = pneg %p257
      %p545 = pneg %p281
      %p546 = pneg %p278
      %p547 = pneg %p302
      %p548 = pneg %p299
      %p549 = pneg %p323
      %p550 = pneg %p320
      %p551 = pneg %p344
      %p552 = pneg %p341
      %p553 = pneg %p365
      %p554 = pneg %p362
      %p555 = pneg %p386
      %p556 = pneg %p383
      %p557 = pneg %p407
      %p558 = pneg %p404
      %p559 = pneg %p433
      %p560 = pneg %p430
      %p561 = scmp.lt.s32.totalorder %s29, 1
      %s562 = scalar_select %p561, %s29, 1
      %s563 = smul.addr %s562, 8
      %s564 = scalar_lea.vmem %s18, %s563
      %p565 = scmp.lt.s32.totalorder %s29, 1
      %s566 = scalar_select %p565, %s29, 1
      %s567 = smul.addr %s566, 3
      %s568 = smul.addr %s567, 8
      %s569 = scalar_lea.vmem %s0, %s568
      %p570 = scmp.lt.s32.totalorder %s29, 1
      %s571 = scalar_select %p570, %s29, 1
      %s572 = smul.addr %s571, 8
      %s573 = scalar_lea.vmem %s18, %s572
      %v574 = vld [vmem:[%s569] sm:$0xff]
      %v575 = vld [vmem:[%s569 + $0x8] sm:$0xff]
      %v576 = vld [vmem:[%s569 + $0x10] sm:$0xff]
      %v577 = vlaneseq
      %v578 = vand.u32 %v577, 127
      %vm579 = vcmp.lt.s32.totalorder %v578, 17
      %v580 = vld [vmem:[%s1] sm:$0x1]
      %v581 = vld [vmem:[%s2] sm:$0x1]
      %vm582 = vcmp.lt.s32.totalorder %v578, 64
      %583 = vadd.xlane.f32.xlu0 %v574
      %v584 = vpop.xlane.xlu0 %583
      %585 = vadd.xlane.f32.xlu0 %v575
      %v586 = vpop.xlane.xlu0 %585
      %587 = vadd.xlane.f32.xlu0 %v576
      %v588 = vpop.xlane.xlu0 %587
      %v589 = vmul.f32 %v584, 0.015625
      %v590 = vmul.f32 %v586, 0.015625
      %v591 = vmul.f32 %v588, 0.015625
      %v592 = vsub.f32 %v574, %v589
      %v593 = vsub.f32 %v575, %v590
      %v594 = vsub.f32 %v576, %v591
      %v595 = vsel %vm582, %v592, 0.0
      %v596 = vsel %vm582, %v593, 0.0
      %v597 = vsel %vm582, %v594, 0.0
      %v598 = vmul.f32 %v595, %v595
      %v599 = vmul.f32 %v596, %v596
      %v600 = vmul.f32 %v597, %v597
      %601 = vadd.xlane.f32.xlu0 %v598
      %v602 = vpop.xlane.xlu0 %601
      %603 = vadd.xlane.f32.xlu0 %v599
      %v604 = vpop.xlane.xlu0 %603
      %605 = vadd.xlane.f32.xlu0 %v600
      %v606 = vpop.xlane.xlu0 %605
      %v607 = vmul.f32 %v602, 0.015625
      %v608 = vmul.f32 %v604, 0.015625
      %v609 = vmul.f32 %v606, 0.015625
      %v610 = vadd.f32 %v607, 1e-05
      %v611 = vadd.f32 %v608, 1e-05
      %v612 = vadd.f32 %v609, 1e-05
      %v613 = vrsqrt.pop %v610
      %v614 = vmul.f32 %v613, %v610
      %v615 = vmul.f32 %v614, %v613
      %v616 = vmul.f32 0.5, %v615
      %v617 = vsub.f32 1.5, %v616
      %v618 = vmul.f32 %v613, %v617
      %vm619 = vweird.f32 %v610
      %vm620 = vweird.f32 %v613
      %vm621 = vmor %vm619, %vm620
      %v622 = vsel %vm621, %v613, %v618
      %v623 = vrsqrt.pop %v611
      %v624 = vmul.f32 %v623, %v611
      %v625 = vmul.f32 %v624, %v623
      %v626 = vmul.f32 0.5, %v625
      %v627 = vsub.f32 1.5, %v626
      %v628 = vmul.f32 %v623, %v627
      %vm629 = vweird.f32 %v611
      %vm630 = vweird.f32 %v623
      %vm631 = vmor %vm629, %vm630
      %v632 = vsel %vm631, %v623, %v628
      %v633 = vrsqrt.pop %v612
      %v634 = vmul.f32 %v633, %v612
      %v635 = vmul.f32 %v634, %v633
      %v636 = vmul.f32 0.5, %v635
      %v637 = vsub.f32 1.5, %v636
      %v638 = vmul.f32 %v633, %v637
      %vm639 = vweird.f32 %v612
      %vm640 = vweird.f32 %v633
      %vm641 = vmor %vm639, %vm640
      %v642 = vsel %vm641, %v633, %v638
      %v643 = vmul.f32 %v595, %v622
      %v644 = vmul.f32 %v596, %v632
      %v645 = vmul.f32 %v597, %v642
      %v647 = vperm.slane %v580, 0
      %v649 = vmul.f32 %v643, %v647
      %v650 = vmul.f32 %v644, %v647
      %v651 = vmul.f32 %v645, %v647
      %v653 = vperm.slane %v581, 0
      %v655 = vadd.f32 %v649, %v653
      %v656 = vadd.f32 %v650, %v653
      %v657 = vadd.f32 %v651, %v653
      %v658 = vld [vmem:[%s3] sm:$0xff]
      %v659 = vld [vmem:[%s3 + $0x8] sm:$0xff]
      %v660 = vld [vmem:[%s3 + $0x10] sm:$0xff]
      %v661 = vld [vmem:[%s3 + $0x18] sm:$0xff]
      %v662 = vld [vmem:[%s3 + $0x20] sm:$0xff]
      %v663 = vld [vmem:[%s3 + $0x28] sm:$0xff]
      %v664 = vld [vmem:[%s3 + $0x30] sm:$0xff]
      %v665 = vld [vmem:[%s3 + $0x38] sm:$0xff]
      %v666 = vld [vmem:[%s3 + $0x40] sm:$0xff]
      %v667 = vld [vmem:[%s3 + $0x48] sm:$0xff]
      %v668 = vld [vmem:[%s3 + $0x50] sm:$0xff]
      %v669 = vld [vmem:[%s3 + $0x58] sm:$0xff]
      %v670 = vld [vmem:[%s3 + $0x60] sm:$0xff]
      %v671 = vld [vmem:[%s3 + $0x68] sm:$0xff]
      %v672 = vld [vmem:[%s3 + $0x70] sm:$0xff]
      %v673 = vld [vmem:[%s3 + $0x78] sm:$0xff]
      %674 = vmatpush.msra.mxu0 %v673
      %675 = vmatpush.msra.mxu0 %v672
      %676 = vmatpush.msra.mxu0 %v671
      %677 = vmatpush.msra.mxu0 %v670
      %678 = vmatpush.msra.mxu0 %v669
      %679 = vmatpush.msra.mxu0 %v668
      %680 = vmatpush.msra.mxu0 %v667
      %681 = vmatpush.msra.mxu0 %v666
      %682 = vmatpush.msra.mxu0 %v665
      %683 = vmatpush.msra.mxu0 %v664
      %684 = vmatpush.msra.mxu0 %v663
      %685 = vmatpush.msra.mxu0 %v662
      %686 = vmatpush.msra.mxu0 %v661
      %687 = vmatpush.msra.mxu0 %v660
      %688 = vmatpush.msra.mxu0 %v659
      %689 = vmatpush.msra.mxu0 %v658
      %690 = vmatmul.f32.gmra.mxu0 %v655
      %v691 = vpop.f32.mrf.mxu0
      %v692 = vadd.f32 0.0, %v691
      %693 = vmatmul.f32.gmra.mxu0 %v656
      %v694 = vpop.f32.mrf.mxu0
      %v695 = vadd.f32 0.0, %v694
      %696 = vmatmul.f32.gmra.mxu0 %v657
      %v697 = vpop.f32.mrf.mxu0
      %v698 = vadd.f32 0.0, %v697
      %699 = vdwg.mxu0
      %v700 = vmul.f32 %v692, 0.25
      %v701 = vmul.f32 %v695, 0.25
      %v702 = vmul.f32 %v698, 0.25
      %v703 = vld [vmem:[%s4] sm:$0xff]
      %v704 = vld [vmem:[%s4 + $0x8] sm:$0xff]
      %v705 = vld [vmem:[%s4 + $0x10] sm:$0xff]
      %v706 = vld [vmem:[%s4 + $0x18] sm:$0xff]
      %v707 = vld [vmem:[%s4 + $0x20] sm:$0xff]
      %v708 = vld [vmem:[%s4 + $0x28] sm:$0xff]
      %v709 = vld [vmem:[%s4 + $0x30] sm:$0xff]
      %v710 = vld [vmem:[%s4 + $0x38] sm:$0xff]
      %v711 = vld [vmem:[%s4 + $0x40] sm:$0xff]
      %v712 = vld [vmem:[%s4 + $0x48] sm:$0xff]
      %v713 = vld [vmem:[%s4 + $0x50] sm:$0xff]
      %v714 = vld [vmem:[%s4 + $0x58] sm:$0xff]
      %v715 = vld [vmem:[%s4 + $0x60] sm:$0xff]
      %v716 = vld [vmem:[%s4 + $0x68] sm:$0xff]
      %v717 = vld [vmem:[%s4 + $0x70] sm:$0xff]
      %v718 = vld [vmem:[%s4 + $0x78] sm:$0xff]
      %719 = vmatpush.msra.mxu0 %v718
      %720 = vmatpush.msra.mxu0 %v717
      %721 = vmatpush.msra.mxu0 %v716
      %722 = vmatpush.msra.mxu0 %v715
      %723 = vmatpush.msra.mxu0 %v714
      %724 = vmatpush.msra.mxu0 %v713
      %725 = vmatpush.msra.mxu0 %v712
      %726 = vmatpush.msra.mxu0 %v711
      %727 = vmatpush.msra.mxu0 %v710
      %728 = vmatpush.msra.mxu0 %v709
      %729 = vmatpush.msra.mxu0 %v708
      %730 = vmatpush.msra.mxu0 %v707
      %731 = vmatpush.msra.mxu0 %v706
      %732 = vmatpush.msra.mxu0 %v705
      %733 = vmatpush.msra.mxu0 %v704
      %734 = vmatpush.msra.mxu0 %v703
      %735 = vmatmul.f32.gmra.mxu0 %v655
      %v736 = vpop.f32.mrf.mxu0
      %v737 = vadd.f32 0.0, %v736
      %738 = vmatmul.f32.gmra.mxu0 %v656
      %v739 = vpop.f32.mrf.mxu0
      %v740 = vadd.f32 0.0, %v739
      %741 = vmatmul.f32.gmra.mxu0 %v657
      %v742 = vpop.f32.mrf.mxu0
      %v743 = vadd.f32 0.0, %v742
      %744 = vdwg.mxu0
      %v745 = vld [vmem:[%s5] sm:$0xff]
      %v746 = vld [vmem:[%s5 + $0x8] sm:$0xff]
      %v747 = vld [vmem:[%s5 + $0x10] sm:$0xff]
      %v748 = vld [vmem:[%s5 + $0x18] sm:$0xff]
      %v749 = vld [vmem:[%s5 + $0x20] sm:$0xff]
      %v750 = vld [vmem:[%s5 + $0x28] sm:$0xff]
      %v751 = vld [vmem:[%s5 + $0x30] sm:$0xff]
      %v752 = vld [vmem:[%s5 + $0x38] sm:$0xff]
      %v753 = vld [vmem:[%s5 + $0x40] sm:$0xff]
      %v754 = vld [vmem:[%s5 + $0x48] sm:$0xff]
      %v755 = vld [vmem:[%s5 + $0x50] sm:$0xff]
      %v756 = vld [vmem:[%s5 + $0x58] sm:$0xff]
      %v757 = vld [vmem:[%s5 + $0x60] sm:$0xff]
      %v758 = vld [vmem:[%s5 + $0x68] sm:$0xff]
      %v759 = vld [vmem:[%s5 + $0x70] sm:$0xff]
      %v760 = vld [vmem:[%s5 + $0x78] sm:$0xff]
      %761 = vmatpush.msra.mxu0 %v760
      %762 = vmatpush.msra.mxu0 %v759
      %763 = vmatpush.msra.mxu0 %v758
      %764 = vmatpush.msra.mxu0 %v757
      %765 = vmatpush.msra.mxu0 %v756
      %766 = vmatpush.msra.mxu0 %v755
      %767 = vmatpush.msra.mxu0 %v754
      %768 = vmatpush.msra.mxu0 %v753
      %769 = vmatpush.msra.mxu0 %v752
      %770 = vmatpush.msra.mxu0 %v751
      %771 = vmatpush.msra.mxu0 %v750
      %772 = vmatpush.msra.mxu0 %v749
      %773 = vmatpush.msra.mxu0 %v748
      %774 = vmatpush.msra.mxu0 %v747
      %775 = vmatpush.msra.mxu0 %v746
      %776 = vmatpush.msra.mxu0 %v745
      %777 = vmatmul.f32.gmra.mxu0 %v655
      %v778 = vpop.f32.mrf.mxu0
      %v779 = vadd.f32 0.0, %v778
      %780 = vmatmul.f32.gmra.mxu0 %v656
      %v781 = vpop.f32.mrf.mxu0
      %v782 = vadd.f32 0.0, %v781
      %783 = vmatmul.f32.gmra.mxu0 %v657
      %v784 = vpop.f32.mrf.mxu0
      %v785 = vadd.f32 0.0, %v784
      %786 = vdwg.mxu0
      %vm787 = vcmask 130048
      %v789 = vsel %vm787, %v700, 0
      %v792 = vsel %vm787, %v701, 0
      %v795 = vsel %vm787, %v702, 0
      %v798 = vsel %vm787, %v737, 0
      %v801 = vsel %vm787, %v740, 0
      %v804 = vsel %vm787, %v743, 0
      %806 = vmatpush.xpose.msra.mxu0 0.0
      %807 = vmatpush.xpose.msra.mxu0 0.0
      %808 = vmatpush.xpose.msra.mxu0 0.0
      %809 = vmatpush.xpose.msra.mxu0 0.0
      %810 = vmatpush.xpose.msra.mxu0 0.0
      %811 = vmatpush.xpose.msra.mxu0 0.0
      %812 = vmatpush.xpose.msra.mxu0 0.0
      %813 = vmatpush.xpose.msra.mxu0 0.0
      %814 = vmatpush.xpose.msra.mxu0 0.0
      %815 = vmatpush.xpose.msra.mxu0 0.0
      %816 = vmatpush.xpose.msra.mxu0 0.0
      %817 = vmatpush.xpose.msra.mxu0 0.0
      %818 = vmatpush.xpose.msra.mxu0 0.0
      %819 = vmatpush.xpose.msra.mxu0 %v804
      %820 = vmatpush.xpose.msra.mxu0 %v801
      %821 = vmatpush.xpose.msra.mxu0 %v798
      %822 = vmatmul.f32.gmra.mxu0 %v789
      %v823 = vpop.f32.mrf.mxu0
      %v824 = vadd.f32 0.0, %v823
      %825 = vmatmul.f32.gmra.mxu0 %v792
      %v826 = vpop.f32.mrf.mxu0
      %v827 = vadd.f32 0.0, %v826
      %828 = vmatmul.f32.gmra.mxu0 %v795
      %v829 = vpop.f32.mrf.mxu0
      %v830 = vadd.f32 0.0, %v829
      %831 = vdwg.mxu0
      %v832 = vsel %vm579, %v824, -1e+30
      %v833 = vsel %vm579, %v827, -1e+30
      %v834 = vsel %vm579, %v830, -1e+30
      %vm835 = vcmask 195584
      %v836 = vsel %vm835, %v832, -inf
      %837 = vmax.xlane.f32.xlu0 %v836
      %v838 = vpop.xlane.xlu0 %837
      %v839 = vsel %vm835, %v833, -inf
      %840 = vmax.xlane.f32.xlu0 %v839
      %v841 = vpop.xlane.xlu0 %840
      %v842 = vsel %vm835, %v834, -inf
      %843 = vmax.xlane.f32.xlu0 %v842
      %v844 = vpop.xlane.xlu0 %843
      %v845 = vsub.f32 %v832, %v838
      %v846 = vsub.f32 %v833, %v841
      %v847 = vsub.f32 %v834, %v844
      %v848 = vmul.f32 %v845, 1.442695
      %v849 = vpow.pop %v848
      %v850 = vmul.f32 %v846, 1.442695
      %v851 = vpow.pop %v850
      %v852 = vmul.f32 %v847, 1.442695
      %v853 = vpow.pop %v852
      %v854 = vsel %vm835, %v849, 0.0
      %855 = vadd.xlane.f32.xlu0 %v854
      %v856 = vpop.xlane.xlu0 %855
      %v857 = vsel %vm835, %v851, 0.0
      %858 = vadd.xlane.f32.xlu0 %v857
      %v859 = vpop.xlane.xlu0 %858
      %v860 = vsel %vm835, %v853, 0.0
      %861 = vadd.xlane.f32.xlu0 %v860
      %v862 = vpop.xlane.xlu0 %861
      %v863 = vrcp.pop %v856
      %v864 = vrcp.pop %v859
      %v865 = vrcp.pop %v862
      %v866 = vmul.f32 %v849, %v863
      %v867 = vmul.f32 %v851, %v864
      %v868 = vmul.f32 %v853, %v865
      %v870 = vsel %vm835, %v866, 0
      %v873 = vsel %vm835, %v867, 0
      %v876 = vsel %vm835, %v868, 0
      %878 = vmatpush.msra.mxu0 0.0
      %879 = vmatpush.msra.mxu0 0.0
      %880 = vmatpush.msra.mxu0 0.0
      %881 = vmatpush.msra.mxu0 0.0
      %882 = vmatpush.msra.mxu0 0.0
      %883 = vmatpush.msra.mxu0 0.0
      %884 = vmatpush.msra.mxu0 0.0
      %885 = vmatpush.msra.mxu0 0.0
      %886 = vmatpush.msra.mxu0 0.0
      %887 = vmatpush.msra.mxu0 0.0
      %888 = vmatpush.msra.mxu0 0.0
      %889 = vmatpush.msra.mxu0 0.0
      %890 = vmatpush.msra.mxu0 0.0
      %891 = vmatpush.msra.mxu0 %v785
      %892 = vmatpush.msra.mxu0 %v782
      %893 = vmatpush.msra.mxu0 %v779
      %894 = vmatmul.f32.gmra.mxu0 %v870
      %v895 = vpop.f32.mrf.mxu0
      %v896 = vadd.f32 0.0, %v895
      %897 = vmatmul.f32.gmra.mxu0 %v873
      %v898 = vpop.f32.mrf.mxu0
      %v899 = vadd.f32 0.0, %v898
      %900 = vmatmul.f32.gmra.mxu0 %v876
      %v901 = vpop.f32.mrf.mxu0
      %v902 = vadd.f32 0.0, %v901
      %903 = vdwg.mxu0
      %v904 = vld [vmem:[%s6] sm:$0xff]
      %v905 = vld [vmem:[%s6 + $0x8] sm:$0xff]
      %s906 = scalar_lea.vmem %s3, 128
      %v907 = vld [vmem:[%s906] sm:$0xff]
      %v908 = vld [vmem:[%s906 + $0x8] sm:$0xff]
      %v909 = vld [vmem:[%s906 + $0x10] sm:$0xff]
      %v910 = vld [vmem:[%s906 + $0x18] sm:$0xff]
      %v911 = vld [vmem:[%s906 + $0x20] sm:$0xff]
      %v912 = vld [vmem:[%s906 + $0x28] sm:$0xff]
      %v913 = vld [vmem:[%s906 + $0x30] sm:$0xff]
      %v914 = vld [vmem:[%s906 + $0x38] sm:$0xff]
      %v915 = vld [vmem:[%s906 + $0x40] sm:$0xff]
      %v916 = vld [vmem:[%s906 + $0x48] sm:$0xff]
      %v917 = vld [vmem:[%s906 + $0x50] sm:$0xff]
      %v918 = vld [vmem:[%s906 + $0x58] sm:$0xff]
      %v919 = vld [vmem:[%s906 + $0x60] sm:$0xff]
      %v920 = vld [vmem:[%s906 + $0x68] sm:$0xff]
      %v921 = vld [vmem:[%s906 + $0x70] sm:$0xff]
      %v922 = vld [vmem:[%s906 + $0x78] sm:$0xff]
      %923 = vmatpush.msra.mxu0 %v922
      %924 = vmatpush.msra.mxu0 %v921
      %925 = vmatpush.msra.mxu0 %v920
      %926 = vmatpush.msra.mxu0 %v919
      %927 = vmatpush.msra.mxu0 %v918
      %928 = vmatpush.msra.mxu0 %v917
      %929 = vmatpush.msra.mxu0 %v916
      %930 = vmatpush.msra.mxu0 %v915
      %931 = vmatpush.msra.mxu0 %v914
      %932 = vmatpush.msra.mxu0 %v913
      %933 = vmatpush.msra.mxu0 %v912
      %934 = vmatpush.msra.mxu0 %v911
      %935 = vmatpush.msra.mxu0 %v910
      %936 = vmatpush.msra.mxu0 %v909
      %937 = vmatpush.msra.mxu0 %v908
      %938 = vmatpush.msra.mxu0 %v907
      %939 = vmatmul.f32.gmra.mxu0 %v655
      %v940 = vpop.f32.mrf.mxu0
      %v941 = vadd.f32 0.0, %v940
      %942 = vmatmul.f32.gmra.mxu0 %v656
      %v943 = vpop.f32.mrf.mxu0
      %v944 = vadd.f32 0.0, %v943
      %945 = vmatmul.f32.gmra.mxu0 %v657
      %v946 = vpop.f32.mrf.mxu0
      %v947 = vadd.f32 0.0, %v946
      %948 = vdwg.mxu0
      %v949 = vmul.f32 %v941, 0.25
      %v950 = vmul.f32 %v944, 0.25
      %v951 = vmul.f32 %v947, 0.25
      %s952 = scalar_lea.vmem %s4, 128
      %v953 = vld [vmem:[%s952] sm:$0xff]
      %v954 = vld [vmem:[%s952 + $0x8] sm:$0xff]
      %v955 = vld [vmem:[%s952 + $0x10] sm:$0xff]
      %v956 = vld [vmem:[%s952 + $0x18] sm:$0xff]
      %v957 = vld [vmem:[%s952 + $0x20] sm:$0xff]
      %v958 = vld [vmem:[%s952 + $0x28] sm:$0xff]
      %v959 = vld [vmem:[%s952 + $0x30] sm:$0xff]
      %v960 = vld [vmem:[%s952 + $0x38] sm:$0xff]
      %v961 = vld [vmem:[%s952 + $0x40] sm:$0xff]
      %v962 = vld [vmem:[%s952 + $0x48] sm:$0xff]
      %v963 = vld [vmem:[%s952 + $0x50] sm:$0xff]
      %v964 = vld [vmem:[%s952 + $0x58] sm:$0xff]
      %v965 = vld [vmem:[%s952 + $0x60] sm:$0xff]
      %v966 = vld [vmem:[%s952 + $0x68] sm:$0xff]
      %v967 = vld [vmem:[%s952 + $0x70] sm:$0xff]
      %v968 = vld [vmem:[%s952 + $0x78] sm:$0xff]
      %969 = vmatpush.msra.mxu0 %v968
      %970 = vmatpush.msra.mxu0 %v967
      %971 = vmatpush.msra.mxu0 %v966
      %972 = vmatpush.msra.mxu0 %v965
      %973 = vmatpush.msra.mxu0 %v964
      %974 = vmatpush.msra.mxu0 %v963
      %975 = vmatpush.msra.mxu0 %v962
      %976 = vmatpush.msra.mxu0 %v961
      %977 = vmatpush.msra.mxu0 %v960
      %978 = vmatpush.msra.mxu0 %v959
      %979 = vmatpush.msra.mxu0 %v958
      %980 = vmatpush.msra.mxu0 %v957
      %981 = vmatpush.msra.mxu0 %v956
      %982 = vmatpush.msra.mxu0 %v955
      %983 = vmatpush.msra.mxu0 %v954
      %984 = vmatpush.msra.mxu0 %v953
      %985 = vmatmul.f32.gmra.mxu0 %v655
      %v986 = vpop.f32.mrf.mxu0
      %v987 = vadd.f32 0.0, %v986
      %988 = vmatmul.f32.gmra.mxu0 %v656
      %v989 = vpop.f32.mrf.mxu0
      %v990 = vadd.f32 0.0, %v989
      %991 = vmatmul.f32.gmra.mxu0 %v657
      %v992 = vpop.f32.mrf.mxu0
      %v993 = vadd.f32 0.0, %v992
      %994 = vdwg.mxu0
      %s995 = scalar_lea.vmem %s5, 128
      %v996 = vld [vmem:[%s995] sm:$0xff]
      %v997 = vld [vmem:[%s995 + $0x8] sm:$0xff]
      %v998 = vld [vmem:[%s995 + $0x10] sm:$0xff]
      %v999 = vld [vmem:[%s995 + $0x18] sm:$0xff]
      %v1000 = vld [vmem:[%s995 + $0x20] sm:$0xff]
      %v1001 = vld [vmem:[%s995 + $0x28] sm:$0xff]
      %v1002 = vld [vmem:[%s995 + $0x30] sm:$0xff]
      %v1003 = vld [vmem:[%s995 + $0x38] sm:$0xff]
      %v1004 = vld [vmem:[%s995 + $0x40] sm:$0xff]
      %v1005 = vld [vmem:[%s995 + $0x48] sm:$0xff]
      %v1006 = vld [vmem:[%s995 + $0x50] sm:$0xff]
      %v1007 = vld [vmem:[%s995 + $0x58] sm:$0xff]
      %v1008 = vld [vmem:[%s995 + $0x60] sm:$0xff]
      %v1009 = vld [vmem:[%s995 + $0x68] sm:$0xff]
      %v1010 = vld [vmem:[%s995 + $0x70] sm:$0xff]
      %v1011 = vld [vmem:[%s995 + $0x78] sm:$0xff]
      %1012 = vmatpush.msra.mxu0 %v1011
      %1013 = vmatpush.msra.mxu0 %v1010
      %1014 = vmatpush.msra.mxu0 %v1009
      %1015 = vmatpush.msra.mxu0 %v1008
      %1016 = vmatpush.msra.mxu0 %v1007
      %1017 = vmatpush.msra.mxu0 %v1006
      %1018 = vmatpush.msra.mxu0 %v1005
      %1019 = vmatpush.msra.mxu0 %v1004
      %1020 = vmatpush.msra.mxu0 %v1003
      %1021 = vmatpush.msra.mxu0 %v1002
      %1022 = vmatpush.msra.mxu0 %v1001
      %1023 = vmatpush.msra.mxu0 %v1000
      %1024 = vmatpush.msra.mxu0 %v999
      %1025 = vmatpush.msra.mxu0 %v998
      %1026 = vmatpush.msra.mxu0 %v997
      %1027 = vmatpush.msra.mxu0 %v996
      %1028 = vmatmul.f32.gmra.mxu0 %v655
      %v1029 = vpop.f32.mrf.mxu0
      %v1030 = vadd.f32 0.0, %v1029
      %1031 = vmatmul.f32.gmra.mxu0 %v656
      %v1032 = vpop.f32.mrf.mxu0
      %v1033 = vadd.f32 0.0, %v1032
      %1034 = vmatmul.f32.gmra.mxu0 %v657
      %v1035 = vpop.f32.mrf.mxu0
      %v1036 = vadd.f32 0.0, %v1035
      %1037 = vdwg.mxu0
      %v1039 = vsel %vm787, %v949, 0
      %v1042 = vsel %vm787, %v950, 0
      %v1045 = vsel %vm787, %v951, 0
      %v1048 = vsel %vm787, %v987, 0
      %v1051 = vsel %vm787, %v990, 0
      %v1054 = vsel %vm787, %v993, 0
      %1056 = vmatpush.xpose.msra.mxu0 0.0
      %1057 = vmatpush.xpose.msra.mxu0 0.0
      %1058 = vmatpush.xpose.msra.mxu0 0.0
      %1059 = vmatpush.xpose.msra.mxu0 0.0
      %1060 = vmatpush.xpose.msra.mxu0 0.0
      %1061 = vmatpush.xpose.msra.mxu0 0.0
      %1062 = vmatpush.xpose.msra.mxu0 0.0
      %1063 = vmatpush.xpose.msra.mxu0 0.0
      %1064 = vmatpush.xpose.msra.mxu0 0.0
      %1065 = vmatpush.xpose.msra.mxu0 0.0
      %1066 = vmatpush.xpose.msra.mxu0 0.0
      %1067 = vmatpush.xpose.msra.mxu0 0.0
      %1068 = vmatpush.xpose.msra.mxu0 0.0
      %1069 = vmatpush.xpose.msra.mxu0 %v1054
      %1070 = vmatpush.xpose.msra.mxu0 %v1051
      %1071 = vmatpush.xpose.msra.mxu0 %v1048
      %1072 = vmatmul.f32.gmra.mxu0 %v1039
      %v1073 = vpop.f32.mrf.mxu0
      %v1074 = vadd.f32 0.0, %v1073
      %1075 = vmatmul.f32.gmra.mxu0 %v1042
      %v1076 = vpop.f32.mrf.mxu0
      %v1077 = vadd.f32 0.0, %v1076
      %1078 = vmatmul.f32.gmra.mxu0 %v1045
      %v1079 = vpop.f32.mrf.mxu0
      %v1080 = vadd.f32 0.0, %v1079
      %1081 = vdwg.mxu0
      %v1082 = vsel %vm579, %v1074, -1e+30
      %v1083 = vsel %vm579, %v1077, -1e+30
      %v1084 = vsel %vm579, %v1080, -1e+30
      %v1085 = vsel %vm835, %v1082, -inf
      %1086 = vmax.xlane.f32.xlu0 %v1085
      %v1087 = vpop.xlane.xlu0 %1086
      %v1088 = vsel %vm835, %v1083, -inf
      %1089 = vmax.xlane.f32.xlu0 %v1088
      %v1090 = vpop.xlane.xlu0 %1089
      %v1091 = vsel %vm835, %v1084, -inf
      %1092 = vmax.xlane.f32.xlu0 %v1091
      %v1093 = vpop.xlane.xlu0 %1092
      %v1094 = vsub.f32 %v1082, %v1087
      %v1095 = vsub.f32 %v1083, %v1090
      %v1096 = vsub.f32 %v1084, %v1093
      %v1097 = vmul.f32 %v1094, 1.442695
      %v1098 = vpow.pop %v1097
      %v1099 = vmul.f32 %v1095, 1.442695
      %v1100 = vpow.pop %v1099
      %v1101 = vmul.f32 %v1096, 1.442695
      %v1102 = vpow.pop %v1101
      %v1103 = vsel %vm835, %v1098, 0.0
      %1104 = vadd.xlane.f32.xlu0 %v1103
      %v1105 = vpop.xlane.xlu0 %1104
      %v1106 = vsel %vm835, %v1100, 0.0
      %1107 = vadd.xlane.f32.xlu0 %v1106
      %v1108 = vpop.xlane.xlu0 %1107
      %v1109 = vsel %vm835, %v1102, 0.0
      %1110 = vadd.xlane.f32.xlu0 %v1109
      %v1111 = vpop.xlane.xlu0 %1110
      %v1112 = vrcp.pop %v1105
      %v1113 = vrcp.pop %v1108
      %v1114 = vrcp.pop %v1111
      %v1115 = vmul.f32 %v1098, %v1112
      %v1116 = vmul.f32 %v1100, %v1113
      %v1117 = vmul.f32 %v1102, %v1114
      %v1119 = vsel %vm835, %v1115, 0
      %v1122 = vsel %vm835, %v1116, 0
      %v1125 = vsel %vm835, %v1117, 0
      %1127 = vmatpush.msra.mxu0 0.0
      %1128 = vmatpush.msra.mxu0 0.0
      %1129 = vmatpush.msra.mxu0 0.0
      %1130 = vmatpush.msra.mxu0 0.0
      %1131 = vmatpush.msra.mxu0 0.0
      %1132 = vmatpush.msra.mxu0 0.0
      %1133 = vmatpush.msra.mxu0 0.0
      %1134 = vmatpush.msra.mxu0 0.0
      %1135 = vmatpush.msra.mxu0 0.0
      %1136 = vmatpush.msra.mxu0 0.0
      %1137 = vmatpush.msra.mxu0 0.0
      %1138 = vmatpush.msra.mxu0 0.0
      %1139 = vmatpush.msra.mxu0 0.0
      %1140 = vmatpush.msra.mxu0 %v1036
      %1141 = vmatpush.msra.mxu0 %v1033
      %1142 = vmatpush.msra.mxu0 %v1030
      %1143 = vmatmul.f32.gmra.mxu0 %v1119
      %v1144 = vpop.f32.mrf.mxu0
      %v1145 = vadd.f32 0.0, %v1144
      %1146 = vmatmul.f32.gmra.mxu0 %v1122
      %v1147 = vpop.f32.mrf.mxu0
      %v1148 = vadd.f32 0.0, %v1147
      %1149 = vmatmul.f32.gmra.mxu0 %v1125
      %v1150 = vpop.f32.mrf.mxu0
      %v1151 = vadd.f32 0.0, %v1150
      %1152 = vdwg.mxu0
      %s1153 = scalar_lea.vmem %s6, 16
      %v1154 = vld [vmem:[%s1153] sm:$0xff]
      %v1155 = vld [vmem:[%s1153 + $0x8] sm:$0xff]
      %v1157 = vsel %vm787, %v1145, 0
      %v1160 = vsel %vm787, %v1148, 0
      %v1163 = vsel %vm787, %v1151, 0
      %1165 = vmatpush.msra.mxu0 0.0
      %1166 = vmatpush.msra.mxu0 0.0
      %1167 = vmatpush.msra.mxu0 0.0
      %1168 = vmatpush.msra.mxu0 0.0
      %1169 = vmatpush.msra.mxu0 0.0
      %1170 = vmatpush.msra.mxu0 0.0
      %1171 = vmatpush.msra.mxu0 0.0
      %1172 = vmatpush.msra.mxu0 0.0
      %1173 = vmatpush.msra.mxu0 0.0
      %1174 = vmatpush.msra.mxu0 0.0
      %1175 = vmatpush.msra.mxu0 0.0
      %1176 = vmatpush.msra.mxu0 0.0
      %1177 = vmatpush.msra.mxu0 0.0
      %1178 = vmatpush.msra.mxu0 0.0
      %1179 = vmatpush.msra.mxu0 %v1155
      %1180 = vmatpush.msra.mxu0 %v1154
      %1181 = vmatmul.f32.gmra.mxu0 %v1157
      %v1182 = vpop.f32.mrf.mxu0
      %v1183 = vadd.f32 0.0, %v1182
      %1184 = vmatmul.f32.gmra.mxu0 %v1160
      %v1185 = vpop.f32.mrf.mxu0
      %v1186 = vadd.f32 0.0, %v1185
      %1187 = vmatmul.f32.gmra.mxu0 %v1163
      %v1188 = vpop.f32.mrf.mxu0
      %v1189 = vadd.f32 0.0, %v1188
      %1190 = vdwg.mxu0
      %v1192 = vsel %vm787, %v896, 0
      %v1195 = vsel %vm787, %v899, 0
      %v1198 = vsel %vm787, %v902, 0
      %1200 = vmatpush.msra.mxu0 0.0
      %1201 = vmatpush.msra.mxu0 0.0
      %1202 = vmatpush.msra.mxu0 0.0
      %1203 = vmatpush.msra.mxu0 0.0
      %1204 = vmatpush.msra.mxu0 0.0
      %1205 = vmatpush.msra.mxu0 0.0
      %1206 = vmatpush.msra.mxu0 0.0
      %1207 = vmatpush.msra.mxu0 0.0
      %1208 = vmatpush.msra.mxu0 0.0
      %1209 = vmatpush.msra.mxu0 0.0
      %1210 = vmatpush.msra.mxu0 0.0
      %1211 = vmatpush.msra.mxu0 0.0
      %1212 = vmatpush.msra.mxu0 0.0
      %1213 = vmatpush.msra.mxu0 0.0
      %1214 = vmatpush.msra.mxu0 %v905
      %1215 = vmatpush.msra.mxu0 %v904
      %1216 = vmatmul.f32.gmra.mxu0 %v1192
      %v1217 = vpop.f32.mrf.mxu0
      %v1218 = vadd.f32 %v1183, %v1217
      %1219 = vmatmul.f32.gmra.mxu0 %v1195
      %v1220 = vpop.f32.mrf.mxu0
      %v1221 = vadd.f32 %v1186, %v1220
      %1222 = vmatmul.f32.gmra.mxu0 %v1198
      %v1223 = vpop.f32.mrf.mxu0
      %v1224 = vadd.f32 %v1189, %v1223
      %1225 = vdwg.mxu0
      %s1226 = scalar_lea.vmem %s3, 256
      %v1227 = vld [vmem:[%s1226] sm:$0xff]
      %v1228 = vld [vmem:[%s1226 + $0x8] sm:$0xff]
      %v1229 = vld [vmem:[%s1226 + $0x10] sm:$0xff]
      %v1230 = vld [vmem:[%s1226 + $0x18] sm:$0xff]
      %v1231 = vld [vmem:[%s1226 + $0x20] sm:$0xff]
      %v1232 = vld [vmem:[%s1226 + $0x28] sm:$0xff]
      %v1233 = vld [vmem:[%s1226 + $0x30] sm:$0xff]
      %v1234 = vld [vmem:[%s1226 + $0x38] sm:$0xff]
      %v1235 = vld [vmem:[%s1226 + $0x40] sm:$0xff]
      %v1236 = vld [vmem:[%s1226 + $0x48] sm:$0xff]
      %v1237 = vld [vmem:[%s1226 + $0x50] sm:$0xff]
      %v1238 = vld [vmem:[%s1226 + $0x58] sm:$0xff]
      %v1239 = vld [vmem:[%s1226 + $0x60] sm:$0xff]
      %v1240 = vld [vmem:[%s1226 + $0x68] sm:$0xff]
      %v1241 = vld [vmem:[%s1226 + $0x70] sm:$0xff]
      %v1242 = vld [vmem:[%s1226 + $0x78] sm:$0xff]
      %1243 = vmatpush.msra.mxu0 %v1242
      %1244 = vmatpush.msra.mxu0 %v1241
      %1245 = vmatpush.msra.mxu0 %v1240
      %1246 = vmatpush.msra.mxu0 %v1239
      %1247 = vmatpush.msra.mxu0 %v1238
      %1248 = vmatpush.msra.mxu0 %v1237
      %1249 = vmatpush.msra.mxu0 %v1236
      %1250 = vmatpush.msra.mxu0 %v1235
      %1251 = vmatpush.msra.mxu0 %v1234
      %1252 = vmatpush.msra.mxu0 %v1233
      %1253 = vmatpush.msra.mxu0 %v1232
      %1254 = vmatpush.msra.mxu0 %v1231
      %1255 = vmatpush.msra.mxu0 %v1230
      %1256 = vmatpush.msra.mxu0 %v1229
      %1257 = vmatpush.msra.mxu0 %v1228
      %1258 = vmatpush.msra.mxu0 %v1227
      %1259 = vmatmul.f32.gmra.mxu0 %v655
      %v1260 = vpop.f32.mrf.mxu0
      %v1261 = vadd.f32 0.0, %v1260
      %1262 = vmatmul.f32.gmra.mxu0 %v656
      %v1263 = vpop.f32.mrf.mxu0
      %v1264 = vadd.f32 0.0, %v1263
      %1265 = vmatmul.f32.gmra.mxu0 %v657
      %v1266 = vpop.f32.mrf.mxu0
      %v1267 = vadd.f32 0.0, %v1266
      %1268 = vdwg.mxu0
      %v1269 = vmul.f32 %v1261, 0.25
      %v1270 = vmul.f32 %v1264, 0.25
      %v1271 = vmul.f32 %v1267, 0.25
      %s1272 = scalar_lea.vmem %s4, 256
      %v1273 = vld [vmem:[%s1272] sm:$0xff]
      %v1274 = vld [vmem:[%s1272 + $0x8] sm:$0xff]
      %v1275 = vld [vmem:[%s1272 + $0x10] sm:$0xff]
      %v1276 = vld [vmem:[%s1272 + $0x18] sm:$0xff]
      %v1277 = vld [vmem:[%s1272 + $0x20] sm:$0xff]
      %v1278 = vld [vmem:[%s1272 + $0x28] sm:$0xff]
      %v1279 = vld [vmem:[%s1272 + $0x30] sm:$0xff]
      %v1280 = vld [vmem:[%s1272 + $0x38] sm:$0xff]
      %v1281 = vld [vmem:[%s1272 + $0x40] sm:$0xff]
      %v1282 = vld [vmem:[%s1272 + $0x48] sm:$0xff]
      %v1283 = vld [vmem:[%s1272 + $0x50] sm:$0xff]
      %v1284 = vld [vmem:[%s1272 + $0x58] sm:$0xff]
      %v1285 = vld [vmem:[%s1272 + $0x60] sm:$0xff]
      %v1286 = vld [vmem:[%s1272 + $0x68] sm:$0xff]
      %v1287 = vld [vmem:[%s1272 + $0x70] sm:$0xff]
      %v1288 = vld [vmem:[%s1272 + $0x78] sm:$0xff]
      %1289 = vmatpush.msra.mxu0 %v1288
      %1290 = vmatpush.msra.mxu0 %v1287
      %1291 = vmatpush.msra.mxu0 %v1286
      %1292 = vmatpush.msra.mxu0 %v1285
      %1293 = vmatpush.msra.mxu0 %v1284
      %1294 = vmatpush.msra.mxu0 %v1283
      %1295 = vmatpush.msra.mxu0 %v1282
      %1296 = vmatpush.msra.mxu0 %v1281
      %1297 = vmatpush.msra.mxu0 %v1280
      %1298 = vmatpush.msra.mxu0 %v1279
      %1299 = vmatpush.msra.mxu0 %v1278
      %1300 = vmatpush.msra.mxu0 %v1277
      %1301 = vmatpush.msra.mxu0 %v1276
      %1302 = vmatpush.msra.mxu0 %v1275
      %1303 = vmatpush.msra.mxu0 %v1274
      %1304 = vmatpush.msra.mxu0 %v1273
      %1305 = vmatmul.f32.gmra.mxu0 %v655
      %v1306 = vpop.f32.mrf.mxu0
      %v1307 = vadd.f32 0.0, %v1306
      %1308 = vmatmul.f32.gmra.mxu0 %v656
      %v1309 = vpop.f32.mrf.mxu0
      %v1310 = vadd.f32 0.0, %v1309
      %1311 = vmatmul.f32.gmra.mxu0 %v657
      %v1312 = vpop.f32.mrf.mxu0
      %v1313 = vadd.f32 0.0, %v1312
      %1314 = vdwg.mxu0
      %s1315 = scalar_lea.vmem %s5, 256
      %v1316 = vld [vmem:[%s1315] sm:$0xff]
      %v1317 = vld [vmem:[%s1315 + $0x8] sm:$0xff]
      %v1318 = vld [vmem:[%s1315 + $0x10] sm:$0xff]
      %v1319 = vld [vmem:[%s1315 + $0x18] sm:$0xff]
      %v1320 = vld [vmem:[%s1315 + $0x20] sm:$0xff]
      %v1321 = vld [vmem:[%s1315 + $0x28] sm:$0xff]
      %v1322 = vld [vmem:[%s1315 + $0x30] sm:$0xff]
      %v1323 = vld [vmem:[%s1315 + $0x38] sm:$0xff]
      %v1324 = vld [vmem:[%s1315 + $0x40] sm:$0xff]
      %v1325 = vld [vmem:[%s1315 + $0x48] sm:$0xff]
      %v1326 = vld [vmem:[%s1315 + $0x50] sm:$0xff]
      %v1327 = vld [vmem:[%s1315 + $0x58] sm:$0xff]
      %v1328 = vld [vmem:[%s1315 + $0x60] sm:$0xff]
      %v1329 = vld [vmem:[%s1315 + $0x68] sm:$0xff]
      %v1330 = vld [vmem:[%s1315 + $0x70] sm:$0xff]
      %v1331 = vld [vmem:[%s1315 + $0x78] sm:$0xff]
      %1332 = vmatpush.msra.mxu0 %v1331
      %1333 = vmatpush.msra.mxu0 %v1330
      %1334 = vmatpush.msra.mxu0 %v1329
      %1335 = vmatpush.msra.mxu0 %v1328
      %1336 = vmatpush.msra.mxu0 %v1327
      %1337 = vmatpush.msra.mxu0 %v1326
      %1338 = vmatpush.msra.mxu0 %v1325
      %1339 = vmatpush.msra.mxu0 %v1324
      %1340 = vmatpush.msra.mxu0 %v1323
      %1341 = vmatpush.msra.mxu0 %v1322
      %1342 = vmatpush.msra.mxu0 %v1321
      %1343 = vmatpush.msra.mxu0 %v1320
      %1344 = vmatpush.msra.mxu0 %v1319
      %1345 = vmatpush.msra.mxu0 %v1318
      %1346 = vmatpush.msra.mxu0 %v1317
      %1347 = vmatpush.msra.mxu0 %v1316
      %1348 = vmatmul.f32.gmra.mxu0 %v655
      %v1349 = vpop.f32.mrf.mxu0
      %v1350 = vadd.f32 0.0, %v1349
      %1351 = vmatmul.f32.gmra.mxu0 %v656
      %v1352 = vpop.f32.mrf.mxu0
      %v1353 = vadd.f32 0.0, %v1352
      %1354 = vmatmul.f32.gmra.mxu0 %v657
      %v1355 = vpop.f32.mrf.mxu0
      %v1356 = vadd.f32 0.0, %v1355
      %1357 = vdwg.mxu0
      %v1359 = vsel %vm787, %v1269, 0
      %v1362 = vsel %vm787, %v1270, 0
      %v1365 = vsel %vm787, %v1271, 0
      %v1368 = vsel %vm787, %v1307, 0
      %v1371 = vsel %vm787, %v1310, 0
      %v1374 = vsel %vm787, %v1313, 0
      %1376 = vmatpush.xpose.msra.mxu0 0.0
      %1377 = vmatpush.xpose.msra.mxu0 0.0
      %1378 = vmatpush.xpose.msra.mxu0 0.0
      %1379 = vmatpush.xpose.msra.mxu0 0.0
      %1380 = vmatpush.xpose.msra.mxu0 0.0
      %1381 = vmatpush.xpose.msra.mxu0 0.0
      %1382 = vmatpush.xpose.msra.mxu0 0.0
      %1383 = vmatpush.xpose.msra.mxu0 0.0
      %1384 = vmatpush.xpose.msra.mxu0 0.0
      %1385 = vmatpush.xpose.msra.mxu0 0.0
      %1386 = vmatpush.xpose.msra.mxu0 0.0
      %1387 = vmatpush.xpose.msra.mxu0 0.0
      %1388 = vmatpush.xpose.msra.mxu0 0.0
      %1389 = vmatpush.xpose.msra.mxu0 %v1374
      %1390 = vmatpush.xpose.msra.mxu0 %v1371
      %1391 = vmatpush.xpose.msra.mxu0 %v1368
      %1392 = vmatmul.f32.gmra.mxu0 %v1359
      %v1393 = vpop.f32.mrf.mxu0
      %v1394 = vadd.f32 0.0, %v1393
      %1395 = vmatmul.f32.gmra.mxu0 %v1362
      %v1396 = vpop.f32.mrf.mxu0
      %v1397 = vadd.f32 0.0, %v1396
      %1398 = vmatmul.f32.gmra.mxu0 %v1365
      %v1399 = vpop.f32.mrf.mxu0
      %v1400 = vadd.f32 0.0, %v1399
      %1401 = vdwg.mxu0
      %v1402 = vsel %vm579, %v1394, -1e+30
      %v1403 = vsel %vm579, %v1397, -1e+30
      %v1404 = vsel %vm579, %v1400, -1e+30
      %v1405 = vsel %vm835, %v1402, -inf
      %1406 = vmax.xlane.f32.xlu0 %v1405
      %v1407 = vpop.xlane.xlu0 %1406
      %v1408 = vsel %vm835, %v1403, -inf
      %1409 = vmax.xlane.f32.xlu0 %v1408
      %v1410 = vpop.xlane.xlu0 %1409
      %v1411 = vsel %vm835, %v1404, -inf
      %1412 = vmax.xlane.f32.xlu0 %v1411
      %v1413 = vpop.xlane.xlu0 %1412
      %v1414 = vsub.f32 %v1402, %v1407
      %v1415 = vsub.f32 %v1403, %v1410
      %v1416 = vsub.f32 %v1404, %v1413
      %v1417 = vmul.f32 %v1414, 1.442695
      %v1418 = vpow.pop %v1417
      %v1419 = vmul.f32 %v1415, 1.442695
      %v1420 = vpow.pop %v1419
      %v1421 = vmul.f32 %v1416, 1.442695
      %v1422 = vpow.pop %v1421
      %v1423 = vsel %vm835, %v1418, 0.0
      %1424 = vadd.xlane.f32.xlu0 %v1423
      %v1425 = vpop.xlane.xlu0 %1424
      %v1426 = vsel %vm835, %v1420, 0.0
      %1427 = vadd.xlane.f32.xlu0 %v1426
      %v1428 = vpop.xlane.xlu0 %1427
      %v1429 = vsel %vm835, %v1422, 0.0
      %1430 = vadd.xlane.f32.xlu0 %v1429
      %v1431 = vpop.xlane.xlu0 %1430
      %v1432 = vrcp.pop %v1425
      %v1433 = vrcp.pop %v1428
      %v1434 = vrcp.pop %v1431
      %v1435 = vmul.f32 %v1418, %v1432
      %v1436 = vmul.f32 %v1420, %v1433
      %v1437 = vmul.f32 %v1422, %v1434
      %v1439 = vsel %vm835, %v1435, 0
      %v1442 = vsel %vm835, %v1436, 0
      %v1445 = vsel %vm835, %v1437, 0
      %1447 = vmatpush.msra.mxu0 0.0
      %1448 = vmatpush.msra.mxu0 0.0
      %1449 = vmatpush.msra.mxu0 0.0
      %1450 = vmatpush.msra.mxu0 0.0
      %1451 = vmatpush.msra.mxu0 0.0
      %1452 = vmatpush.msra.mxu0 0.0
      %1453 = vmatpush.msra.mxu0 0.0
      %1454 = vmatpush.msra.mxu0 0.0
      %1455 = vmatpush.msra.mxu0 0.0
      %1456 = vmatpush.msra.mxu0 0.0
      %1457 = vmatpush.msra.mxu0 0.0
      %1458 = vmatpush.msra.mxu0 0.0
      %1459 = vmatpush.msra.mxu0 0.0
      %1460 = vmatpush.msra.mxu0 %v1356
      %1461 = vmatpush.msra.mxu0 %v1353
      %1462 = vmatpush.msra.mxu0 %v1350
      %1463 = vmatmul.f32.gmra.mxu0 %v1439
      %v1464 = vpop.f32.mrf.mxu0
      %v1465 = vadd.f32 0.0, %v1464
      %1466 = vmatmul.f32.gmra.mxu0 %v1442
      %v1467 = vpop.f32.mrf.mxu0
      %v1468 = vadd.f32 0.0, %v1467
      %1469 = vmatmul.f32.gmra.mxu0 %v1445
      %v1470 = vpop.f32.mrf.mxu0
      %v1471 = vadd.f32 0.0, %v1470
      %1472 = vdwg.mxu0
      %s1473 = scalar_lea.vmem %s6, 32
      %v1474 = vld [vmem:[%s1473] sm:$0xff]
      %v1475 = vld [vmem:[%s1473 + $0x8] sm:$0xff]
      %v1477 = vsel %vm787, %v1465, 0
      %v1480 = vsel %vm787, %v1468, 0
      %v1483 = vsel %vm787, %v1471, 0
      %1485 = vmatpush.msra.mxu0 0.0
      %1486 = vmatpush.msra.mxu0 0.0
      %1487 = vmatpush.msra.mxu0 0.0
      %1488 = vmatpush.msra.mxu0 0.0
      %1489 = vmatpush.msra.mxu0 0.0
      %1490 = vmatpush.msra.mxu0 0.0
      %1491 = vmatpush.msra.mxu0 0.0
      %1492 = vmatpush.msra.mxu0 0.0
      %1493 = vmatpush.msra.mxu0 0.0
      %1494 = vmatpush.msra.mxu0 0.0
      %1495 = vmatpush.msra.mxu0 0.0
      %1496 = vmatpush.msra.mxu0 0.0
      %1497 = vmatpush.msra.mxu0 0.0
      %1498 = vmatpush.msra.mxu0 0.0
      %1499 = vmatpush.msra.mxu0 %v1475
      %1500 = vmatpush.msra.mxu0 %v1474
      %1501 = vmatmul.f32.gmra.mxu0 %v1477
      %v1502 = vpop.f32.mrf.mxu0
      %v1503 = vadd.f32 0.0, %v1502
      %1504 = vmatmul.f32.gmra.mxu0 %v1480
      %v1505 = vpop.f32.mrf.mxu0
      %v1506 = vadd.f32 0.0, %v1505
      %1507 = vmatmul.f32.gmra.mxu0 %v1483
      %v1508 = vpop.f32.mrf.mxu0
      %v1509 = vadd.f32 0.0, %v1508
      %1510 = vdwg.mxu0
      %v1511 = vadd.f32 %v1218, %v1503
      %v1512 = vadd.f32 %v1221, %v1506
      %v1513 = vadd.f32 %v1224, %v1509
      %s1514 = scalar_lea.vmem %s3, 384
      %v1515 = vld [vmem:[%s1514] sm:$0xff]
      %v1516 = vld [vmem:[%s1514 + $0x8] sm:$0xff]
      %v1517 = vld [vmem:[%s1514 + $0x10] sm:$0xff]
      %v1518 = vld [vmem:[%s1514 + $0x18] sm:$0xff]
      %v1519 = vld [vmem:[%s1514 + $0x20] sm:$0xff]
      %v1520 = vld [vmem:[%s1514 + $0x28] sm:$0xff]
      %v1521 = vld [vmem:[%s1514 + $0x30] sm:$0xff]
      %v1522 = vld [vmem:[%s1514 + $0x38] sm:$0xff]
      %v1523 = vld [vmem:[%s1514 + $0x40] sm:$0xff]
      %v1524 = vld [vmem:[%s1514 + $0x48] sm:$0xff]
      %v1525 = vld [vmem:[%s1514 + $0x50] sm:$0xff]
      %v1526 = vld [vmem:[%s1514 + $0x58] sm:$0xff]
      %v1527 = vld [vmem:[%s1514 + $0x60] sm:$0xff]
      %v1528 = vld [vmem:[%s1514 + $0x68] sm:$0xff]
      %v1529 = vld [vmem:[%s1514 + $0x70] sm:$0xff]
      %v1530 = vld [vmem:[%s1514 + $0x78] sm:$0xff]
      %1531 = vmatpush.msra.mxu0 %v1530
      %1532 = vmatpush.msra.mxu0 %v1529
      %1533 = vmatpush.msra.mxu0 %v1528
      %1534 = vmatpush.msra.mxu0 %v1527
      %1535 = vmatpush.msra.mxu0 %v1526
      %1536 = vmatpush.msra.mxu0 %v1525
      %1537 = vmatpush.msra.mxu0 %v1524
      %1538 = vmatpush.msra.mxu0 %v1523
      %1539 = vmatpush.msra.mxu0 %v1522
      %1540 = vmatpush.msra.mxu0 %v1521
      %1541 = vmatpush.msra.mxu0 %v1520
      %1542 = vmatpush.msra.mxu0 %v1519
      %1543 = vmatpush.msra.mxu0 %v1518
      %1544 = vmatpush.msra.mxu0 %v1517
      %1545 = vmatpush.msra.mxu0 %v1516
      %1546 = vmatpush.msra.mxu0 %v1515
      %1547 = vmatmul.f32.gmra.mxu0 %v655
      %v1548 = vpop.f32.mrf.mxu0
      %v1549 = vadd.f32 0.0, %v1548
      %1550 = vmatmul.f32.gmra.mxu0 %v656
      %v1551 = vpop.f32.mrf.mxu0
      %v1552 = vadd.f32 0.0, %v1551
      %1553 = vmatmul.f32.gmra.mxu0 %v657
      %v1554 = vpop.f32.mrf.mxu0
      %v1555 = vadd.f32 0.0, %v1554
      %1556 = vdwg.mxu0
      %v1557 = vmul.f32 %v1549, 0.25
      %v1558 = vmul.f32 %v1552, 0.25
      %v1559 = vmul.f32 %v1555, 0.25
      %s1560 = scalar_lea.vmem %s4, 384
      %v1561 = vld [vmem:[%s1560] sm:$0xff]
      %v1562 = vld [vmem:[%s1560 + $0x8] sm:$0xff]
      %v1563 = vld [vmem:[%s1560 + $0x10] sm:$0xff]
      %v1564 = vld [vmem:[%s1560 + $0x18] sm:$0xff]
      %v1565 = vld [vmem:[%s1560 + $0x20] sm:$0xff]
      %v1566 = vld [vmem:[%s1560 + $0x28] sm:$0xff]
      %v1567 = vld [vmem:[%s1560 + $0x30] sm:$0xff]
      %v1568 = vld [vmem:[%s1560 + $0x38] sm:$0xff]
      %v1569 = vld [vmem:[%s1560 + $0x40] sm:$0xff]
      %v1570 = vld [vmem:[%s1560 + $0x48] sm:$0xff]
      %v1571 = vld [vmem:[%s1560 + $0x50] sm:$0xff]
      %v1572 = vld [vmem:[%s1560 + $0x58] sm:$0xff]
      %v1573 = vld [vmem:[%s1560 + $0x60] sm:$0xff]
      %v1574 = vld [vmem:[%s1560 + $0x68] sm:$0xff]
      %v1575 = vld [vmem:[%s1560 + $0x70] sm:$0xff]
      %v1576 = vld [vmem:[%s1560 + $0x78] sm:$0xff]
      %1577 = vmatpush.msra.mxu0 %v1576
      %1578 = vmatpush.msra.mxu0 %v1575
      %1579 = vmatpush.msra.mxu0 %v1574
      %1580 = vmatpush.msra.mxu0 %v1573
      %1581 = vmatpush.msra.mxu0 %v1572
      %1582 = vmatpush.msra.mxu0 %v1571
      %1583 = vmatpush.msra.mxu0 %v1570
      %1584 = vmatpush.msra.mxu0 %v1569
      %1585 = vmatpush.msra.mxu0 %v1568
      %1586 = vmatpush.msra.mxu0 %v1567
      %1587 = vmatpush.msra.mxu0 %v1566
      %1588 = vmatpush.msra.mxu0 %v1565
      %1589 = vmatpush.msra.mxu0 %v1564
      %1590 = vmatpush.msra.mxu0 %v1563
      %1591 = vmatpush.msra.mxu0 %v1562
      %1592 = vmatpush.msra.mxu0 %v1561
      %1593 = vmatmul.f32.gmra.mxu0 %v655
      %v1594 = vpop.f32.mrf.mxu0
      %v1595 = vadd.f32 0.0, %v1594
      %1596 = vmatmul.f32.gmra.mxu0 %v656
      %v1597 = vpop.f32.mrf.mxu0
      %v1598 = vadd.f32 0.0, %v1597
      %1599 = vmatmul.f32.gmra.mxu0 %v657
      %v1600 = vpop.f32.mrf.mxu0
      %v1601 = vadd.f32 0.0, %v1600
      %1602 = vdwg.mxu0
      %s1603 = scalar_lea.vmem %s5, 384
      %v1604 = vld [vmem:[%s1603] sm:$0xff]
      %v1605 = vld [vmem:[%s1603 + $0x8] sm:$0xff]
      %v1606 = vld [vmem:[%s1603 + $0x10] sm:$0xff]
      %v1607 = vld [vmem:[%s1603 + $0x18] sm:$0xff]
      %v1608 = vld [vmem:[%s1603 + $0x20] sm:$0xff]
      %v1609 = vld [vmem:[%s1603 + $0x28] sm:$0xff]
      %v1610 = vld [vmem:[%s1603 + $0x30] sm:$0xff]
      %v1611 = vld [vmem:[%s1603 + $0x38] sm:$0xff]
      %v1612 = vld [vmem:[%s1603 + $0x40] sm:$0xff]
      %v1613 = vld [vmem:[%s1603 + $0x48] sm:$0xff]
      %v1614 = vld [vmem:[%s1603 + $0x50] sm:$0xff]
      %v1615 = vld [vmem:[%s1603 + $0x58] sm:$0xff]
      %v1616 = vld [vmem:[%s1603 + $0x60] sm:$0xff]
      %v1617 = vld [vmem:[%s1603 + $0x68] sm:$0xff]
      %v1618 = vld [vmem:[%s1603 + $0x70] sm:$0xff]
      %v1619 = vld [vmem:[%s1603 + $0x78] sm:$0xff]
      %1620 = vmatpush.msra.mxu0 %v1619
      %1621 = vmatpush.msra.mxu0 %v1618
      %1622 = vmatpush.msra.mxu0 %v1617
      %1623 = vmatpush.msra.mxu0 %v1616
      %1624 = vmatpush.msra.mxu0 %v1615
      %1625 = vmatpush.msra.mxu0 %v1614
      %1626 = vmatpush.msra.mxu0 %v1613
      %1627 = vmatpush.msra.mxu0 %v1612
      %1628 = vmatpush.msra.mxu0 %v1611
      %1629 = vmatpush.msra.mxu0 %v1610
      %1630 = vmatpush.msra.mxu0 %v1609
      %1631 = vmatpush.msra.mxu0 %v1608
      %1632 = vmatpush.msra.mxu0 %v1607
      %1633 = vmatpush.msra.mxu0 %v1606
      %1634 = vmatpush.msra.mxu0 %v1605
      %1635 = vmatpush.msra.mxu0 %v1604
      %1636 = vmatmul.f32.gmra.mxu0 %v655
      %v1637 = vpop.f32.mrf.mxu0
      %v1638 = vadd.f32 0.0, %v1637
      %1639 = vmatmul.f32.gmra.mxu0 %v656
      %v1640 = vpop.f32.mrf.mxu0
      %v1641 = vadd.f32 0.0, %v1640
      %1642 = vmatmul.f32.gmra.mxu0 %v657
      %v1643 = vpop.f32.mrf.mxu0
      %v1644 = vadd.f32 0.0, %v1643
      %1645 = vdwg.mxu0
      %v1647 = vsel %vm787, %v1557, 0
      %v1650 = vsel %vm787, %v1558, 0
      %v1653 = vsel %vm787, %v1559, 0
      %v1656 = vsel %vm787, %v1595, 0
      %v1659 = vsel %vm787, %v1598, 0
      %v1662 = vsel %vm787, %v1601, 0
      %1664 = vmatpush.xpose.msra.mxu0 0.0
      %1665 = vmatpush.xpose.msra.mxu0 0.0
      %1666 = vmatpush.xpose.msra.mxu0 0.0
      %1667 = vmatpush.xpose.msra.mxu0 0.0
      %1668 = vmatpush.xpose.msra.mxu0 0.0
      %1669 = vmatpush.xpose.msra.mxu0 0.0
      %1670 = vmatpush.xpose.msra.mxu0 0.0
      %1671 = vmatpush.xpose.msra.mxu0 0.0
      %1672 = vmatpush.xpose.msra.mxu0 0.0
      %1673 = vmatpush.xpose.msra.mxu0 0.0
      %1674 = vmatpush.xpose.msra.mxu0 0.0
      %1675 = vmatpush.xpose.msra.mxu0 0.0
      %1676 = vmatpush.xpose.msra.mxu0 0.0
      %1677 = vmatpush.xpose.msra.mxu0 %v1662
      %1678 = vmatpush.xpose.msra.mxu0 %v1659
      %1679 = vmatpush.xpose.msra.mxu0 %v1656
      %1680 = vmatmul.f32.gmra.mxu0 %v1647
      %v1681 = vpop.f32.mrf.mxu0
      %v1682 = vadd.f32 0.0, %v1681
      %1683 = vmatmul.f32.gmra.mxu0 %v1650
      %v1684 = vpop.f32.mrf.mxu0
      %v1685 = vadd.f32 0.0, %v1684
      %1686 = vmatmul.f32.gmra.mxu0 %v1653
      %v1687 = vpop.f32.mrf.mxu0
      %v1688 = vadd.f32 0.0, %v1687
      %1689 = vdwg.mxu0
      %v1690 = vsel %vm579, %v1682, -1e+30
      %v1691 = vsel %vm579, %v1685, -1e+30
      %v1692 = vsel %vm579, %v1688, -1e+30
      %v1693 = vsel %vm835, %v1690, -inf
      %1694 = vmax.xlane.f32.xlu0 %v1693
      %v1695 = vpop.xlane.xlu0 %1694
      %v1696 = vsel %vm835, %v1691, -inf
      %1697 = vmax.xlane.f32.xlu0 %v1696
      %v1698 = vpop.xlane.xlu0 %1697
      %v1699 = vsel %vm835, %v1692, -inf
      %1700 = vmax.xlane.f32.xlu0 %v1699
      %v1701 = vpop.xlane.xlu0 %1700
      %v1702 = vsub.f32 %v1690, %v1695
      %v1703 = vsub.f32 %v1691, %v1698
      %v1704 = vsub.f32 %v1692, %v1701
      %v1705 = vmul.f32 %v1702, 1.442695
      %v1706 = vpow.pop %v1705
      %v1707 = vmul.f32 %v1703, 1.442695
      %v1708 = vpow.pop %v1707
      %v1709 = vmul.f32 %v1704, 1.442695
      %v1710 = vpow.pop %v1709
      %v1711 = vsel %vm835, %v1706, 0.0
      %1712 = vadd.xlane.f32.xlu0 %v1711
      %v1713 = vpop.xlane.xlu0 %1712
      %v1714 = vsel %vm835, %v1708, 0.0
      %1715 = vadd.xlane.f32.xlu0 %v1714
      %v1716 = vpop.xlane.xlu0 %1715
      %v1717 = vsel %vm835, %v1710, 0.0
      %1718 = vadd.xlane.f32.xlu0 %v1717
      %v1719 = vpop.xlane.xlu0 %1718
      %v1720 = vrcp.pop %v1713
      %v1721 = vrcp.pop %v1716
      %v1722 = vrcp.pop %v1719
      %v1723 = vmul.f32 %v1706, %v1720
      %v1724 = vmul.f32 %v1708, %v1721
      %v1725 = vmul.f32 %v1710, %v1722
      %v1727 = vsel %vm835, %v1723, 0
      %v1730 = vsel %vm835, %v1724, 0
      %v1733 = vsel %vm835, %v1725, 0
      %1735 = vmatpush.msra.mxu0 0.0
      %1736 = vmatpush.msra.mxu0 0.0
      %1737 = vmatpush.msra.mxu0 0.0
      %1738 = vmatpush.msra.mxu0 0.0
      %1739 = vmatpush.msra.mxu0 0.0
      %1740 = vmatpush.msra.mxu0 0.0
      %1741 = vmatpush.msra.mxu0 0.0
      %1742 = vmatpush.msra.mxu0 0.0
      %1743 = vmatpush.msra.mxu0 0.0
      %1744 = vmatpush.msra.mxu0 0.0
      %1745 = vmatpush.msra.mxu0 0.0
      %1746 = vmatpush.msra.mxu0 0.0
      %1747 = vmatpush.msra.mxu0 0.0
      %1748 = vmatpush.msra.mxu0 %v1644
      %1749 = vmatpush.msra.mxu0 %v1641
      %1750 = vmatpush.msra.mxu0 %v1638
      %1751 = vmatmul.f32.gmra.mxu0 %v1727
      %v1752 = vpop.f32.mrf.mxu0
      %v1753 = vadd.f32 0.0, %v1752
      %1754 = vmatmul.f32.gmra.mxu0 %v1730
      %v1755 = vpop.f32.mrf.mxu0
      %v1756 = vadd.f32 0.0, %v1755
      %1757 = vmatmul.f32.gmra.mxu0 %v1733
      %v1758 = vpop.f32.mrf.mxu0
      %v1759 = vadd.f32 0.0, %v1758
      %1760 = vdwg.mxu0
      %s1761 = scalar_lea.vmem %s6, 48
      %v1762 = vld [vmem:[%s1761] sm:$0xff]
      %v1763 = vld [vmem:[%s1761 + $0x8] sm:$0xff]
      %v1765 = vsel %vm787, %v1753, 0
      %v1768 = vsel %vm787, %v1756, 0
      %v1771 = vsel %vm787, %v1759, 0
      %1773 = vmatpush.msra.mxu0 0.0
      %1774 = vmatpush.msra.mxu0 0.0
      %1775 = vmatpush.msra.mxu0 0.0
      %1776 = vmatpush.msra.mxu0 0.0
      %1777 = vmatpush.msra.mxu0 0.0
      %1778 = vmatpush.msra.mxu0 0.0
      %1779 = vmatpush.msra.mxu0 0.0
      %1780 = vmatpush.msra.mxu0 0.0
      %1781 = vmatpush.msra.mxu0 0.0
      %1782 = vmatpush.msra.mxu0 0.0
      %1783 = vmatpush.msra.mxu0 0.0
      %1784 = vmatpush.msra.mxu0 0.0
      %1785 = vmatpush.msra.mxu0 0.0
      %1786 = vmatpush.msra.mxu0 0.0
      %1787 = vmatpush.msra.mxu0 %v1763
      %1788 = vmatpush.msra.mxu0 %v1762
      %1789 = vmatmul.f32.gmra.mxu0 %v1765
      %v1790 = vpop.f32.mrf.mxu0
      %v1791 = vadd.f32 0.0, %v1790
      %1792 = vmatmul.f32.gmra.mxu0 %v1768
      %v1793 = vpop.f32.mrf.mxu0
      %v1794 = vadd.f32 0.0, %v1793
      %1795 = vmatmul.f32.gmra.mxu0 %v1771
      %v1796 = vpop.f32.mrf.mxu0
      %v1797 = vadd.f32 0.0, %v1796
      %1798 = vdwg.mxu0
      %v1799 = vadd.f32 %v1511, %v1791
      %v1800 = vadd.f32 %v1512, %v1794
      %v1801 = vadd.f32 %v1513, %v1797
      %v1802 = vadd.f32 %v574, %v1799
      %v1803 = vadd.f32 %v575, %v1800
      %v1804 = vadd.f32 %v576, %v1801
      %v1805 = vld [vmem:[%s7] sm:$0x1]
      %v1807 = vperm.slane %v1805, 0
      %v1809 = vadd.f32 %v1802, %v1807
      %v1810 = vadd.f32 %v1803, %v1807
      %v1811 = vadd.f32 %v1804, %v1807
      %v1812 = vld [vmem:[%s8] sm:$0x1]
      %v1813 = vld [vmem:[%s9] sm:$0x1]
      %1814 = vadd.xlane.f32.xlu0 %v1809
      %v1815 = vpop.xlane.xlu0 %1814
      %1816 = vadd.xlane.f32.xlu0 %v1810
      %v1817 = vpop.xlane.xlu0 %1816
      %1818 = vadd.xlane.f32.xlu0 %v1811
      %v1819 = vpop.xlane.xlu0 %1818
      %v1820 = vmul.f32 %v1815, 0.015625
      %v1821 = vmul.f32 %v1817, 0.015625
      %v1822 = vmul.f32 %v1819, 0.015625
      %v1823 = vsub.f32 %v1809, %v1820
      %v1824 = vsub.f32 %v1810, %v1821
      %v1825 = vsub.f32 %v1811, %v1822
      %v1826 = vsel %vm582, %v1823, 0.0
      %v1827 = vsel %vm582, %v1824, 0.0
      %v1828 = vsel %vm582, %v1825, 0.0
      %v1829 = vmul.f32 %v1826, %v1826
      %v1830 = vmul.f32 %v1827, %v1827
      %v1831 = vmul.f32 %v1828, %v1828
      %1832 = vadd.xlane.f32.xlu0 %v1829
      %v1833 = vpop.xlane.xlu0 %1832
      %1834 = vadd.xlane.f32.xlu0 %v1830
      %v1835 = vpop.xlane.xlu0 %1834
      %1836 = vadd.xlane.f32.xlu0 %v1831
      %v1837 = vpop.xlane.xlu0 %1836
      %v1838 = vmul.f32 %v1833, 0.015625
      %v1839 = vmul.f32 %v1835, 0.015625
      %v1840 = vmul.f32 %v1837, 0.015625
      %v1841 = vadd.f32 %v1838, 1e-05
      %v1842 = vadd.f32 %v1839, 1e-05
      %v1843 = vadd.f32 %v1840, 1e-05
      %v1844 = vrsqrt.pop %v1841
      %v1845 = vmul.f32 %v1844, %v1841
      %v1846 = vmul.f32 %v1845, %v1844
      %v1847 = vmul.f32 0.5, %v1846
      %v1848 = vsub.f32 1.5, %v1847
      %v1849 = vmul.f32 %v1844, %v1848
      %vm1850 = vweird.f32 %v1841
      %vm1851 = vweird.f32 %v1844
      %vm1852 = vmor %vm1850, %vm1851
      %v1853 = vsel %vm1852, %v1844, %v1849
      %v1854 = vrsqrt.pop %v1842
      %v1855 = vmul.f32 %v1854, %v1842
      %v1856 = vmul.f32 %v1855, %v1854
      %v1857 = vmul.f32 0.5, %v1856
      %v1858 = vsub.f32 1.5, %v1857
      %v1859 = vmul.f32 %v1854, %v1858
      %vm1860 = vweird.f32 %v1842
      %vm1861 = vweird.f32 %v1854
      %vm1862 = vmor %vm1860, %vm1861
      %v1863 = vsel %vm1862, %v1854, %v1859
      %v1864 = vrsqrt.pop %v1843
      %v1865 = vmul.f32 %v1864, %v1843
      %v1866 = vmul.f32 %v1865, %v1864
      %v1867 = vmul.f32 0.5, %v1866
      %v1868 = vsub.f32 1.5, %v1867
      %v1869 = vmul.f32 %v1864, %v1868
      %vm1870 = vweird.f32 %v1843
      %vm1871 = vweird.f32 %v1864
      %vm1872 = vmor %vm1870, %vm1871
      %v1873 = vsel %vm1872, %v1864, %v1869
      %v1874 = vmul.f32 %v1826, %v1853
      %v1875 = vmul.f32 %v1827, %v1863
      %v1876 = vmul.f32 %v1828, %v1873
      %v1878 = vperm.slane %v1812, 0
      %v1880 = vmul.f32 %v1874, %v1878
      %v1881 = vmul.f32 %v1875, %v1878
      %v1882 = vmul.f32 %v1876, %v1878
      %v1884 = vperm.slane %v1813, 0
      %v1886 = vadd.f32 %v1880, %v1884
      %v1887 = vadd.f32 %v1881, %v1884
      %v1888 = vadd.f32 %v1882, %v1884
      %v1889 = vld [vmem:[%s10] sm:$0xff]
      %v1890 = vld [vmem:[%s10 + $0x8] sm:$0xff]
      %v1891 = vld [vmem:[%s10 + $0x10] sm:$0xff]
      %v1892 = vld [vmem:[%s10 + $0x18] sm:$0xff]
      %v1893 = vld [vmem:[%s10 + $0x20] sm:$0xff]
      %v1894 = vld [vmem:[%s10 + $0x28] sm:$0xff]
      %v1895 = vld [vmem:[%s10 + $0x30] sm:$0xff]
      %v1896 = vld [vmem:[%s10 + $0x38] sm:$0xff]
      %v1897 = vld [vmem:[%s10 + $0x40] sm:$0xff]
      %v1898 = vld [vmem:[%s10 + $0x48] sm:$0xff]
      %v1899 = vld [vmem:[%s10 + $0x50] sm:$0xff]
      %v1900 = vld [vmem:[%s10 + $0x58] sm:$0xff]
      %v1901 = vld [vmem:[%s10 + $0x60] sm:$0xff]
      %v1902 = vld [vmem:[%s10 + $0x68] sm:$0xff]
      %v1903 = vld [vmem:[%s10 + $0x70] sm:$0xff]
      %v1904 = vld [vmem:[%s10 + $0x78] sm:$0xff]
      %v1905 = vld [vmem:[%s11] sm:$0x1]
      %v1907 = vperm.slane %v1905, 0
      %1909 = vmatpush.msra.mxu0 %v1904
      %1910 = vmatpush.msra.mxu0 %v1903
      %1911 = vmatpush.msra.mxu0 %v1902
      %1912 = vmatpush.msra.mxu0 %v1901
      %1913 = vmatpush.msra.mxu0 %v1900
      %1914 = vmatpush.msra.mxu0 %v1899
      %1915 = vmatpush.msra.mxu0 %v1898
      %1916 = vmatpush.msra.mxu0 %v1897
      %1917 = vmatpush.msra.mxu0 %v1896
      %1918 = vmatpush.msra.mxu0 %v1895
      %1919 = vmatpush.msra.mxu0 %v1894
      %1920 = vmatpush.msra.mxu0 %v1893
      %1921 = vmatpush.msra.mxu0 %v1892
      %1922 = vmatpush.msra.mxu0 %v1891
      %1923 = vmatpush.msra.mxu0 %v1890
      %1924 = vmatpush.msra.mxu0 %v1889
      %1925 = vmatmul.f32.gmra.mxu0 %v1886
      %v1926 = vpop.f32.mrf.mxu0
      %v1927 = vadd.f32 %v1907, %v1926
      %1928 = vmatmul.f32.gmra.mxu0 %v1887
      %v1929 = vpop.f32.mrf.mxu0
      %v1930 = vadd.f32 %v1907, %v1929
      %1931 = vmatmul.f32.gmra.mxu0 %v1888
      %v1932 = vpop.f32.mrf.mxu0
      %v1933 = vadd.f32 %v1907, %v1932
      %1934 = vdwg.mxu0
      %v1935 = vmul.f32 %v1927, %v1927
      %v1936 = vmul.f32 %v1930, %v1930
      %v1937 = vmul.f32 %v1933, %v1933
      %v1938 = vmul.f32 %v1927, %v1935
      %v1939 = vmul.f32 %v1930, %v1936
      %v1940 = vmul.f32 %v1933, %v1937
      %v1941 = vmul.f32 %v1938, 0.044715
      %v1942 = vmul.f32 %v1939, 0.044715
      %v1943 = vmul.f32 %v1940, 0.044715
      %v1944 = vadd.f32 %v1927, %v1941
      %v1945 = vadd.f32 %v1930, %v1942
      %v1946 = vadd.f32 %v1933, %v1943
      %v1947 = vmul.f32 %v1944, 0.7978846
      %v1948 = vmul.f32 %v1945, 0.7978846
      %v1949 = vmul.f32 %v1946, 0.7978846
      %v1950 = vtanh.pop %v1947
      %v1951 = vtanh.pop %v1948
      %v1952 = vtanh.pop %v1949
      %v1953 = vadd.f32 %v1950, 1.0
      %v1954 = vadd.f32 %v1951, 1.0
      %v1955 = vadd.f32 %v1952, 1.0
      %v1956 = vmul.f32 %v1953, 0.5
      %v1957 = vmul.f32 %v1954, 0.5
      %v1958 = vmul.f32 %v1955, 0.5
      %v1959 = vmul.f32 %v1927, %v1956
      %v1960 = vmul.f32 %v1930, %v1957
      %v1961 = vmul.f32 %v1933, %v1958
      %v1962 = vld [vmem:[%s12] sm:$0xff]
      %v1963 = vld [vmem:[%s12 + $0x8] sm:$0xff]
      %v1964 = vld [vmem:[%s12 + $0x10] sm:$0xff]
      %v1965 = vld [vmem:[%s12 + $0x18] sm:$0xff]
      %v1966 = vld [vmem:[%s12 + $0x20] sm:$0xff]
      %v1967 = vld [vmem:[%s12 + $0x28] sm:$0xff]
      %v1968 = vld [vmem:[%s12 + $0x30] sm:$0xff]
      %v1969 = vld [vmem:[%s12 + $0x38] sm:$0xff]
      %v1970 = vld [vmem:[%s12 + $0x40] sm:$0xff]
      %v1971 = vld [vmem:[%s12 + $0x48] sm:$0xff]
      %v1972 = vld [vmem:[%s12 + $0x50] sm:$0xff]
      %v1973 = vld [vmem:[%s12 + $0x58] sm:$0xff]
      %v1974 = vld [vmem:[%s12 + $0x60] sm:$0xff]
      %v1975 = vld [vmem:[%s12 + $0x68] sm:$0xff]
      %v1976 = vld [vmem:[%s12 + $0x70] sm:$0xff]
      %v1977 = vld [vmem:[%s12 + $0x78] sm:$0xff]
      %v1978 = vld [vmem:[%s13] sm:$0x1]
      %v1980 = vperm.slane %v1978, 0
      %1982 = vmatpush.msra.mxu0 %v1977
      %1983 = vmatpush.msra.mxu0 %v1976
      %1984 = vmatpush.msra.mxu0 %v1975
      %1985 = vmatpush.msra.mxu0 %v1974
      %1986 = vmatpush.msra.mxu0 %v1973
      %1987 = vmatpush.msra.mxu0 %v1972
      %1988 = vmatpush.msra.mxu0 %v1971
      %1989 = vmatpush.msra.mxu0 %v1970
      %1990 = vmatpush.msra.mxu0 %v1969
      %1991 = vmatpush.msra.mxu0 %v1968
      %1992 = vmatpush.msra.mxu0 %v1967
      %1993 = vmatpush.msra.mxu0 %v1966
      %1994 = vmatpush.msra.mxu0 %v1965
      %1995 = vmatpush.msra.mxu0 %v1964
      %1996 = vmatpush.msra.mxu0 %v1963
      %1997 = vmatpush.msra.mxu0 %v1962
      %1998 = vmatmul.f32.gmra.mxu0 %v1959
      %v1999 = vpop.f32.mrf.mxu0
      %v2000 = vadd.f32 %v1980, %v1999
      %2001 = vmatmul.f32.gmra.mxu0 %v1960
      %v2002 = vpop.f32.mrf.mxu0
      %v2003 = vadd.f32 %v1980, %v2002
      %2004 = vmatmul.f32.gmra.mxu0 %v1961
      %v2005 = vpop.f32.mrf.mxu0
      %v2006 = vadd.f32 %v1980, %v2005
      %2007 = vdwg.mxu0
      %v2008 = vadd.f32 %v1886, %v2000
      %v2009 = vadd.f32 %v1887, %v2003
      %v2010 = vadd.f32 %v1888, %v2006
      %s2011 = scalar_lea.vmem %s1, 1
      %v2012 = vld [vmem:[%s2011] sm:$0x1]
      %s2013 = scalar_lea.vmem %s2, 1
      %v2014 = vld [vmem:[%s2013] sm:$0x1]
      %2015 = vadd.xlane.f32.xlu0 %v2008
      %v2016 = vpop.xlane.xlu0 %2015
      %2017 = vadd.xlane.f32.xlu0 %v2009
      %v2018 = vpop.xlane.xlu0 %2017
      %2019 = vadd.xlane.f32.xlu0 %v2010
      %v2020 = vpop.xlane.xlu0 %2019
      %v2021 = vmul.f32 %v2016, 0.015625
      %v2022 = vmul.f32 %v2018, 0.015625
      %v2023 = vmul.f32 %v2020, 0.015625
      %v2024 = vsub.f32 %v2008, %v2021
      %v2025 = vsub.f32 %v2009, %v2022
      %v2026 = vsub.f32 %v2010, %v2023
      %v2027 = vsel %vm582, %v2024, 0.0
      %v2028 = vsel %vm582, %v2025, 0.0
      %v2029 = vsel %vm582, %v2026, 0.0
      %v2030 = vmul.f32 %v2027, %v2027
      %v2031 = vmul.f32 %v2028, %v2028
      %v2032 = vmul.f32 %v2029, %v2029
      %2033 = vadd.xlane.f32.xlu0 %v2030
      %v2034 = vpop.xlane.xlu0 %2033
      %2035 = vadd.xlane.f32.xlu0 %v2031
      %v2036 = vpop.xlane.xlu0 %2035
      %2037 = vadd.xlane.f32.xlu0 %v2032
      %v2038 = vpop.xlane.xlu0 %2037
      %v2039 = vmul.f32 %v2034, 0.015625
      %v2040 = vmul.f32 %v2036, 0.015625
      %v2041 = vmul.f32 %v2038, 0.015625
      %v2042 = vadd.f32 %v2039, 1e-05
      %v2043 = vadd.f32 %v2040, 1e-05
      %v2044 = vadd.f32 %v2041, 1e-05
      %v2045 = vrsqrt.pop %v2042
      %v2046 = vmul.f32 %v2045, %v2042
      %v2047 = vmul.f32 %v2046, %v2045
      %v2048 = vmul.f32 0.5, %v2047
      %v2049 = vsub.f32 1.5, %v2048
      %v2050 = vmul.f32 %v2045, %v2049
      %vm2051 = vweird.f32 %v2042
      %vm2052 = vweird.f32 %v2045
      %vm2053 = vmor %vm2051, %vm2052
      %v2054 = vsel %vm2053, %v2045, %v2050
      %v2055 = vrsqrt.pop %v2043
      %v2056 = vmul.f32 %v2055, %v2043
      %v2057 = vmul.f32 %v2056, %v2055
      %v2058 = vmul.f32 0.5, %v2057
      %v2059 = vsub.f32 1.5, %v2058
      %v2060 = vmul.f32 %v2055, %v2059
      %vm2061 = vweird.f32 %v2043
      %vm2062 = vweird.f32 %v2055
      %vm2063 = vmor %vm2061, %vm2062
      %v2064 = vsel %vm2063, %v2055, %v2060
      %v2065 = vrsqrt.pop %v2044
      %v2066 = vmul.f32 %v2065, %v2044
      %v2067 = vmul.f32 %v2066, %v2065
      %v2068 = vmul.f32 0.5, %v2067
      %v2069 = vsub.f32 1.5, %v2068
      %v2070 = vmul.f32 %v2065, %v2069
      %vm2071 = vweird.f32 %v2044
      %vm2072 = vweird.f32 %v2065
      %vm2073 = vmor %vm2071, %vm2072
      %v2074 = vsel %vm2073, %v2065, %v2070
      %v2075 = vmul.f32 %v2027, %v2054
      %v2076 = vmul.f32 %v2028, %v2064
      %v2077 = vmul.f32 %v2029, %v2074
      %v2079 = vperm.slane %v2012, 0
      %v2081 = vmul.f32 %v2075, %v2079
      %v2082 = vmul.f32 %v2076, %v2079
      %v2083 = vmul.f32 %v2077, %v2079
      %v2085 = vperm.slane %v2014, 0
      %v2087 = vadd.f32 %v2081, %v2085
      %v2088 = vadd.f32 %v2082, %v2085
      %v2089 = vadd.f32 %v2083, %v2085
      %s2090 = scalar_lea.vmem %s3, 512
      %v2091 = vld [vmem:[%s2090] sm:$0xff]
      %v2092 = vld [vmem:[%s2090 + $0x8] sm:$0xff]
      %v2093 = vld [vmem:[%s2090 + $0x10] sm:$0xff]
      %v2094 = vld [vmem:[%s2090 + $0x18] sm:$0xff]
      %v2095 = vld [vmem:[%s2090 + $0x20] sm:$0xff]
      %v2096 = vld [vmem:[%s2090 + $0x28] sm:$0xff]
      %v2097 = vld [vmem:[%s2090 + $0x30] sm:$0xff]
      %v2098 = vld [vmem:[%s2090 + $0x38] sm:$0xff]
      %v2099 = vld [vmem:[%s2090 + $0x40] sm:$0xff]
      %v2100 = vld [vmem:[%s2090 + $0x48] sm:$0xff]
      %v2101 = vld [vmem:[%s2090 + $0x50] sm:$0xff]
      %v2102 = vld [vmem:[%s2090 + $0x58] sm:$0xff]
      %v2103 = vld [vmem:[%s2090 + $0x60] sm:$0xff]
      %v2104 = vld [vmem:[%s2090 + $0x68] sm:$0xff]
      %v2105 = vld [vmem:[%s2090 + $0x70] sm:$0xff]
      %v2106 = vld [vmem:[%s2090 + $0x78] sm:$0xff]
      %2107 = vmatpush.msra.mxu0 %v2106
      %2108 = vmatpush.msra.mxu0 %v2105
      %2109 = vmatpush.msra.mxu0 %v2104
      %2110 = vmatpush.msra.mxu0 %v2103
      %2111 = vmatpush.msra.mxu0 %v2102
      %2112 = vmatpush.msra.mxu0 %v2101
      %2113 = vmatpush.msra.mxu0 %v2100
      %2114 = vmatpush.msra.mxu0 %v2099
      %2115 = vmatpush.msra.mxu0 %v2098
      %2116 = vmatpush.msra.mxu0 %v2097
      %2117 = vmatpush.msra.mxu0 %v2096
      %2118 = vmatpush.msra.mxu0 %v2095
      %2119 = vmatpush.msra.mxu0 %v2094
      %2120 = vmatpush.msra.mxu0 %v2093
      %2121 = vmatpush.msra.mxu0 %v2092
      %2122 = vmatpush.msra.mxu0 %v2091
      %2123 = vmatmul.f32.gmra.mxu0 %v2087
      %v2124 = vpop.f32.mrf.mxu0
      %v2125 = vadd.f32 0.0, %v2124
      %2126 = vmatmul.f32.gmra.mxu0 %v2088
      %v2127 = vpop.f32.mrf.mxu0
      %v2128 = vadd.f32 0.0, %v2127
      %2129 = vmatmul.f32.gmra.mxu0 %v2089
      %v2130 = vpop.f32.mrf.mxu0
      %v2131 = vadd.f32 0.0, %v2130
      %2132 = vdwg.mxu0
      %v2133 = vmul.f32 %v2125, 0.25
      %v2134 = vmul.f32 %v2128, 0.25
      %v2135 = vmul.f32 %v2131, 0.25
      %s2136 = scalar_lea.vmem %s4, 512
      %v2137 = vld [vmem:[%s2136] sm:$0xff]
      %v2138 = vld [vmem:[%s2136 + $0x8] sm:$0xff]
      %v2139 = vld [vmem:[%s2136 + $0x10] sm:$0xff]
      %v2140 = vld [vmem:[%s2136 + $0x18] sm:$0xff]
      %v2141 = vld [vmem:[%s2136 + $0x20] sm:$0xff]
      %v2142 = vld [vmem:[%s2136 + $0x28] sm:$0xff]
      %v2143 = vld [vmem:[%s2136 + $0x30] sm:$0xff]
      %v2144 = vld [vmem:[%s2136 + $0x38] sm:$0xff]
      %v2145 = vld [vmem:[%s2136 + $0x40] sm:$0xff]
      %v2146 = vld [vmem:[%s2136 + $0x48] sm:$0xff]
      %v2147 = vld [vmem:[%s2136 + $0x50] sm:$0xff]
      %v2148 = vld [vmem:[%s2136 + $0x58] sm:$0xff]
      %v2149 = vld [vmem:[%s2136 + $0x60] sm:$0xff]
      %v2150 = vld [vmem:[%s2136 + $0x68] sm:$0xff]
      %v2151 = vld [vmem:[%s2136 + $0x70] sm:$0xff]
      %v2152 = vld [vmem:[%s2136 + $0x78] sm:$0xff]
      %2153 = vmatpush.msra.mxu0 %v2152
      %2154 = vmatpush.msra.mxu0 %v2151
      %2155 = vmatpush.msra.mxu0 %v2150
      %2156 = vmatpush.msra.mxu0 %v2149
      %2157 = vmatpush.msra.mxu0 %v2148
      %2158 = vmatpush.msra.mxu0 %v2147
      %2159 = vmatpush.msra.mxu0 %v2146
      %2160 = vmatpush.msra.mxu0 %v2145
      %2161 = vmatpush.msra.mxu0 %v2144
      %2162 = vmatpush.msra.mxu0 %v2143
      %2163 = vmatpush.msra.mxu0 %v2142
      %2164 = vmatpush.msra.mxu0 %v2141
      %2165 = vmatpush.msra.mxu0 %v2140
      %2166 = vmatpush.msra.mxu0 %v2139
      %2167 = vmatpush.msra.mxu0 %v2138
      %2168 = vmatpush.msra.mxu0 %v2137
      %2169 = vmatmul.f32.gmra.mxu0 %v2087
      %v2170 = vpop.f32.mrf.mxu0
      %v2171 = vadd.f32 0.0, %v2170
      %2172 = vmatmul.f32.gmra.mxu0 %v2088
      %v2173 = vpop.f32.mrf.mxu0
      %v2174 = vadd.f32 0.0, %v2173
      %2175 = vmatmul.f32.gmra.mxu0 %v2089
      %v2176 = vpop.f32.mrf.mxu0
      %v2177 = vadd.f32 0.0, %v2176
      %2178 = vdwg.mxu0
      %s2179 = scalar_lea.vmem %s5, 512
      %v2180 = vld [vmem:[%s2179] sm:$0xff]
      %v2181 = vld [vmem:[%s2179 + $0x8] sm:$0xff]
      %v2182 = vld [vmem:[%s2179 + $0x10] sm:$0xff]
      %v2183 = vld [vmem:[%s2179 + $0x18] sm:$0xff]
      %v2184 = vld [vmem:[%s2179 + $0x20] sm:$0xff]
      %v2185 = vld [vmem:[%s2179 + $0x28] sm:$0xff]
      %v2186 = vld [vmem:[%s2179 + $0x30] sm:$0xff]
      %v2187 = vld [vmem:[%s2179 + $0x38] sm:$0xff]
      %v2188 = vld [vmem:[%s2179 + $0x40] sm:$0xff]
      %v2189 = vld [vmem:[%s2179 + $0x48] sm:$0xff]
      %v2190 = vld [vmem:[%s2179 + $0x50] sm:$0xff]
      %v2191 = vld [vmem:[%s2179 + $0x58] sm:$0xff]
      %v2192 = vld [vmem:[%s2179 + $0x60] sm:$0xff]
      %v2193 = vld [vmem:[%s2179 + $0x68] sm:$0xff]
      %v2194 = vld [vmem:[%s2179 + $0x70] sm:$0xff]
      %v2195 = vld [vmem:[%s2179 + $0x78] sm:$0xff]
      %2196 = vmatpush.msra.mxu0 %v2195
      %2197 = vmatpush.msra.mxu0 %v2194
      %2198 = vmatpush.msra.mxu0 %v2193
      %2199 = vmatpush.msra.mxu0 %v2192
      %2200 = vmatpush.msra.mxu0 %v2191
      %2201 = vmatpush.msra.mxu0 %v2190
      %2202 = vmatpush.msra.mxu0 %v2189
      %2203 = vmatpush.msra.mxu0 %v2188
      %2204 = vmatpush.msra.mxu0 %v2187
      %2205 = vmatpush.msra.mxu0 %v2186
      %2206 = vmatpush.msra.mxu0 %v2185
      %2207 = vmatpush.msra.mxu0 %v2184
      %2208 = vmatpush.msra.mxu0 %v2183
      %2209 = vmatpush.msra.mxu0 %v2182
      %2210 = vmatpush.msra.mxu0 %v2181
      %2211 = vmatpush.msra.mxu0 %v2180
      %2212 = vmatmul.f32.gmra.mxu0 %v2087
      %v2213 = vpop.f32.mrf.mxu0
      %v2214 = vadd.f32 0.0, %v2213
      %2215 = vmatmul.f32.gmra.mxu0 %v2088
      %v2216 = vpop.f32.mrf.mxu0
      %v2217 = vadd.f32 0.0, %v2216
      %2218 = vmatmul.f32.gmra.mxu0 %v2089
      %v2219 = vpop.f32.mrf.mxu0
      %v2220 = vadd.f32 0.0, %v2219
      %2221 = vdwg.mxu0
      %v2223 = vsel %vm787, %v2133, 0
      %v2226 = vsel %vm787, %v2134, 0
      %v2229 = vsel %vm787, %v2135, 0
      %v2232 = vsel %vm787, %v2171, 0
      %v2235 = vsel %vm787, %v2174, 0
      %v2238 = vsel %vm787, %v2177, 0
      %2240 = vmatpush.xpose.msra.mxu0 0.0
      %2241 = vmatpush.xpose.msra.mxu0 0.0
      %2242 = vmatpush.xpose.msra.mxu0 0.0
      %2243 = vmatpush.xpose.msra.mxu0 0.0
      %2244 = vmatpush.xpose.msra.mxu0 0.0
      %2245 = vmatpush.xpose.msra.mxu0 0.0
      %2246 = vmatpush.xpose.msra.mxu0 0.0
      %2247 = vmatpush.xpose.msra.mxu0 0.0
      %2248 = vmatpush.xpose.msra.mxu0 0.0
      %2249 = vmatpush.xpose.msra.mxu0 0.0
      %2250 = vmatpush.xpose.msra.mxu0 0.0
      %2251 = vmatpush.xpose.msra.mxu0 0.0
      %2252 = vmatpush.xpose.msra.mxu0 0.0
      %2253 = vmatpush.xpose.msra.mxu0 %v2238
      %2254 = vmatpush.xpose.msra.mxu0 %v2235
      %2255 = vmatpush.xpose.msra.mxu0 %v2232
      %2256 = vmatmul.f32.gmra.mxu0 %v2223
      %v2257 = vpop.f32.mrf.mxu0
      %v2258 = vadd.f32 0.0, %v2257
      %2259 = vmatmul.f32.gmra.mxu0 %v2226
      %v2260 = vpop.f32.mrf.mxu0
      %v2261 = vadd.f32 0.0, %v2260
      %2262 = vmatmul.f32.gmra.mxu0 %v2229
      %v2263 = vpop.f32.mrf.mxu0
      %v2264 = vadd.f32 0.0, %v2263
      %2265 = vdwg.mxu0
      %v2266 = vsel %vm579, %v2258, -1e+30
      %v2267 = vsel %vm579, %v2261, -1e+30
      %v2268 = vsel %vm579, %v2264, -1e+30
      %v2269 = vsel %vm835, %v2266, -inf
      %2270 = vmax.xlane.f32.xlu0 %v2269
      %v2271 = vpop.xlane.xlu0 %2270
      %v2272 = vsel %vm835, %v2267, -inf
      %2273 = vmax.xlane.f32.xlu0 %v2272
      %v2274 = vpop.xlane.xlu0 %2273
      %v2275 = vsel %vm835, %v2268, -inf
      %2276 = vmax.xlane.f32.xlu0 %v2275
      %v2277 = vpop.xlane.xlu0 %2276
      %v2278 = vsub.f32 %v2266, %v2271
      %v2279 = vsub.f32 %v2267, %v2274
      %v2280 = vsub.f32 %v2268, %v2277
      %v2281 = vmul.f32 %v2278, 1.442695
      %v2282 = vpow.pop %v2281
      %v2283 = vmul.f32 %v2279, 1.442695
      %v2284 = vpow.pop %v2283
      %v2285 = vmul.f32 %v2280, 1.442695
      %v2286 = vpow.pop %v2285
      %v2287 = vsel %vm835, %v2282, 0.0
      %2288 = vadd.xlane.f32.xlu0 %v2287
      %v2289 = vpop.xlane.xlu0 %2288
      %v2290 = vsel %vm835, %v2284, 0.0
      %2291 = vadd.xlane.f32.xlu0 %v2290
      %v2292 = vpop.xlane.xlu0 %2291
      %v2293 = vsel %vm835, %v2286, 0.0
      %2294 = vadd.xlane.f32.xlu0 %v2293
      %v2295 = vpop.xlane.xlu0 %2294
      %v2296 = vrcp.pop %v2289
      %v2297 = vrcp.pop %v2292
      %v2298 = vrcp.pop %v2295
      %v2299 = vmul.f32 %v2282, %v2296
      %v2300 = vmul.f32 %v2284, %v2297
      %v2301 = vmul.f32 %v2286, %v2298
      %v2303 = vsel %vm835, %v2299, 0
      %v2306 = vsel %vm835, %v2300, 0
      %v2309 = vsel %vm835, %v2301, 0
      %2311 = vmatpush.msra.mxu0 0.0
      %2312 = vmatpush.msra.mxu0 0.0
      %2313 = vmatpush.msra.mxu0 0.0
      %2314 = vmatpush.msra.mxu0 0.0
      %2315 = vmatpush.msra.mxu0 0.0
      %2316 = vmatpush.msra.mxu0 0.0
      %2317 = vmatpush.msra.mxu0 0.0
      %2318 = vmatpush.msra.mxu0 0.0
      %2319 = vmatpush.msra.mxu0 0.0
      %2320 = vmatpush.msra.mxu0 0.0
      %2321 = vmatpush.msra.mxu0 0.0
      %2322 = vmatpush.msra.mxu0 0.0
      %2323 = vmatpush.msra.mxu0 0.0
      %2324 = vmatpush.msra.mxu0 %v2220
      %2325 = vmatpush.msra.mxu0 %v2217
      %2326 = vmatpush.msra.mxu0 %v2214
      %2327 = vmatmul.f32.gmra.mxu0 %v2303
      %v2328 = vpop.f32.mrf.mxu0
      %v2329 = vadd.f32 0.0, %v2328
      %2330 = vmatmul.f32.gmra.mxu0 %v2306
      %v2331 = vpop.f32.mrf.mxu0
      %v2332 = vadd.f32 0.0, %v2331
      %2333 = vmatmul.f32.gmra.mxu0 %v2309
      %v2334 = vpop.f32.mrf.mxu0
      %v2335 = vadd.f32 0.0, %v2334
      %2336 = vdwg.mxu0
      %s2337 = scalar_lea.vmem %s6, 64
      %v2338 = vld [vmem:[%s2337] sm:$0xff]
      %v2339 = vld [vmem:[%s2337 + $0x8] sm:$0xff]
      %s2340 = scalar_lea.vmem %s3, 640
      %v2341 = vld [vmem:[%s2340] sm:$0xff]
      %v2342 = vld [vmem:[%s2340 + $0x8] sm:$0xff]
      %v2343 = vld [vmem:[%s2340 + $0x10] sm:$0xff]
      %v2344 = vld [vmem:[%s2340 + $0x18] sm:$0xff]
      %v2345 = vld [vmem:[%s2340 + $0x20] sm:$0xff]
      %v2346 = vld [vmem:[%s2340 + $0x28] sm:$0xff]
      %v2347 = vld [vmem:[%s2340 + $0x30] sm:$0xff]
      %v2348 = vld [vmem:[%s2340 + $0x38] sm:$0xff]
      %v2349 = vld [vmem:[%s2340 + $0x40] sm:$0xff]
      %v2350 = vld [vmem:[%s2340 + $0x48] sm:$0xff]
      %v2351 = vld [vmem:[%s2340 + $0x50] sm:$0xff]
      %v2352 = vld [vmem:[%s2340 + $0x58] sm:$0xff]
      %v2353 = vld [vmem:[%s2340 + $0x60] sm:$0xff]
      %v2354 = vld [vmem:[%s2340 + $0x68] sm:$0xff]
      %v2355 = vld [vmem:[%s2340 + $0x70] sm:$0xff]
      %v2356 = vld [vmem:[%s2340 + $0x78] sm:$0xff]
      %2357 = vmatpush.msra.mxu0 %v2356
      %2358 = vmatpush.msra.mxu0 %v2355
      %2359 = vmatpush.msra.mxu0 %v2354
      %2360 = vmatpush.msra.mxu0 %v2353
      %2361 = vmatpush.msra.mxu0 %v2352
      %2362 = vmatpush.msra.mxu0 %v2351
      %2363 = vmatpush.msra.mxu0 %v2350
      %2364 = vmatpush.msra.mxu0 %v2349
      %2365 = vmatpush.msra.mxu0 %v2348
      %2366 = vmatpush.msra.mxu0 %v2347
      %2367 = vmatpush.msra.mxu0 %v2346
      %2368 = vmatpush.msra.mxu0 %v2345
      %2369 = vmatpush.msra.mxu0 %v2344
      %2370 = vmatpush.msra.mxu0 %v2343
      %2371 = vmatpush.msra.mxu0 %v2342
      %2372 = vmatpush.msra.mxu0 %v2341
      %2373 = vmatmul.f32.gmra.mxu0 %v2087
      %v2374 = vpop.f32.mrf.mxu0
      %v2375 = vadd.f32 0.0, %v2374
      %2376 = vmatmul.f32.gmra.mxu0 %v2088
      %v2377 = vpop.f32.mrf.mxu0
      %v2378 = vadd.f32 0.0, %v2377
      %2379 = vmatmul.f32.gmra.mxu0 %v2089
      %v2380 = vpop.f32.mrf.mxu0
      %v2381 = vadd.f32 0.0, %v2380
      %2382 = vdwg.mxu0
      %v2383 = vmul.f32 %v2375, 0.25
      %v2384 = vmul.f32 %v2378, 0.25
      %v2385 = vmul.f32 %v2381, 0.25
      %s2386 = scalar_lea.vmem %s4, 640
      %v2387 = vld [vmem:[%s2386] sm:$0xff]
      %v2388 = vld [vmem:[%s2386 + $0x8] sm:$0xff]
      %v2389 = vld [vmem:[%s2386 + $0x10] sm:$0xff]
      %v2390 = vld [vmem:[%s2386 + $0x18] sm:$0xff]
      %v2391 = vld [vmem:[%s2386 + $0x20] sm:$0xff]
      %v2392 = vld [vmem:[%s2386 + $0x28] sm:$0xff]
      %v2393 = vld [vmem:[%s2386 + $0x30] sm:$0xff]
      %v2394 = vld [vmem:[%s2386 + $0x38] sm:$0xff]
      %v2395 = vld [vmem:[%s2386 + $0x40] sm:$0xff]
      %v2396 = vld [vmem:[%s2386 + $0x48] sm:$0xff]
      %v2397 = vld [vmem:[%s2386 + $0x50] sm:$0xff]
      %v2398 = vld [vmem:[%s2386 + $0x58] sm:$0xff]
      %v2399 = vld [vmem:[%s2386 + $0x60] sm:$0xff]
      %v2400 = vld [vmem:[%s2386 + $0x68] sm:$0xff]
      %v2401 = vld [vmem:[%s2386 + $0x70] sm:$0xff]
      %v2402 = vld [vmem:[%s2386 + $0x78] sm:$0xff]
      %2403 = vmatpush.msra.mxu0 %v2402
      %2404 = vmatpush.msra.mxu0 %v2401
      %2405 = vmatpush.msra.mxu0 %v2400
      %2406 = vmatpush.msra.mxu0 %v2399
      %2407 = vmatpush.msra.mxu0 %v2398
      %2408 = vmatpush.msra.mxu0 %v2397
      %2409 = vmatpush.msra.mxu0 %v2396
      %2410 = vmatpush.msra.mxu0 %v2395
      %2411 = vmatpush.msra.mxu0 %v2394
      %2412 = vmatpush.msra.mxu0 %v2393
      %2413 = vmatpush.msra.mxu0 %v2392
      %2414 = vmatpush.msra.mxu0 %v2391
      %2415 = vmatpush.msra.mxu0 %v2390
      %2416 = vmatpush.msra.mxu0 %v2389
      %2417 = vmatpush.msra.mxu0 %v2388
      %2418 = vmatpush.msra.mxu0 %v2387
      %2419 = vmatmul.f32.gmra.mxu0 %v2087
      %v2420 = vpop.f32.mrf.mxu0
      %v2421 = vadd.f32 0.0, %v2420
      %2422 = vmatmul.f32.gmra.mxu0 %v2088
      %v2423 = vpop.f32.mrf.mxu0
      %v2424 = vadd.f32 0.0, %v2423
      %2425 = vmatmul.f32.gmra.mxu0 %v2089
      %v2426 = vpop.f32.mrf.mxu0
      %v2427 = vadd.f32 0.0, %v2426
      %2428 = vdwg.mxu0
      %s2429 = scalar_lea.vmem %s5, 640
      %v2430 = vld [vmem:[%s2429] sm:$0xff]
      %v2431 = vld [vmem:[%s2429 + $0x8] sm:$0xff]
      %v2432 = vld [vmem:[%s2429 + $0x10] sm:$0xff]
      %v2433 = vld [vmem:[%s2429 + $0x18] sm:$0xff]
      %v2434 = vld [vmem:[%s2429 + $0x20] sm:$0xff]
      %v2435 = vld [vmem:[%s2429 + $0x28] sm:$0xff]
      %v2436 = vld [vmem:[%s2429 + $0x30] sm:$0xff]
      %v2437 = vld [vmem:[%s2429 + $0x38] sm:$0xff]
      %v2438 = vld [vmem:[%s2429 + $0x40] sm:$0xff]
      %v2439 = vld [vmem:[%s2429 + $0x48] sm:$0xff]
      %v2440 = vld [vmem:[%s2429 + $0x50] sm:$0xff]
      %v2441 = vld [vmem:[%s2429 + $0x58] sm:$0xff]
      %v2442 = vld [vmem:[%s2429 + $0x60] sm:$0xff]
      %v2443 = vld [vmem:[%s2429 + $0x68] sm:$0xff]
      %v2444 = vld [vmem:[%s2429 + $0x70] sm:$0xff]
      %v2445 = vld [vmem:[%s2429 + $0x78] sm:$0xff]
      %2446 = vmatpush.msra.mxu0 %v2445
      %2447 = vmatpush.msra.mxu0 %v2444
      %2448 = vmatpush.msra.mxu0 %v2443
      %2449 = vmatpush.msra.mxu0 %v2442
      %2450 = vmatpush.msra.mxu0 %v2441
      %2451 = vmatpush.msra.mxu0 %v2440
      %2452 = vmatpush.msra.mxu0 %v2439
      %2453 = vmatpush.msra.mxu0 %v2438
      %2454 = vmatpush.msra.mxu0 %v2437
      %2455 = vmatpush.msra.mxu0 %v2436
      %2456 = vmatpush.msra.mxu0 %v2435
      %2457 = vmatpush.msra.mxu0 %v2434
      %2458 = vmatpush.msra.mxu0 %v2433
      %2459 = vmatpush.msra.mxu0 %v2432
      %2460 = vmatpush.msra.mxu0 %v2431
      %2461 = vmatpush.msra.mxu0 %v2430
      %2462 = vmatmul.f32.gmra.mxu0 %v2087
      %v2463 = vpop.f32.mrf.mxu0
      %v2464 = vadd.f32 0.0, %v2463
      %2465 = vmatmul.f32.gmra.mxu0 %v2088
      %v2466 = vpop.f32.mrf.mxu0
      %v2467 = vadd.f32 0.0, %v2466
      %2468 = vmatmul.f32.gmra.mxu0 %v2089
      %v2469 = vpop.f32.mrf.mxu0
      %v2470 = vadd.f32 0.0, %v2469
      %2471 = vdwg.mxu0
      %v2473 = vsel %vm787, %v2383, 0
      %v2476 = vsel %vm787, %v2384, 0
      %v2479 = vsel %vm787, %v2385, 0
      %v2482 = vsel %vm787, %v2421, 0
      %v2485 = vsel %vm787, %v2424, 0
      %v2488 = vsel %vm787, %v2427, 0
      %2490 = vmatpush.xpose.msra.mxu0 0.0
      %2491 = vmatpush.xpose.msra.mxu0 0.0
      %2492 = vmatpush.xpose.msra.mxu0 0.0
      %2493 = vmatpush.xpose.msra.mxu0 0.0
      %2494 = vmatpush.xpose.msra.mxu0 0.0
      %2495 = vmatpush.xpose.msra.mxu0 0.0
      %2496 = vmatpush.xpose.msra.mxu0 0.0
      %2497 = vmatpush.xpose.msra.mxu0 0.0
      %2498 = vmatpush.xpose.msra.mxu0 0.0
      %2499 = vmatpush.xpose.msra.mxu0 0.0
      %2500 = vmatpush.xpose.msra.mxu0 0.0
      %2501 = vmatpush.xpose.msra.mxu0 0.0
      %2502 = vmatpush.xpose.msra.mxu0 0.0
      %2503 = vmatpush.xpose.msra.mxu0 %v2488
      %2504 = vmatpush.xpose.msra.mxu0 %v2485
      %2505 = vmatpush.xpose.msra.mxu0 %v2482
      %2506 = vmatmul.f32.gmra.mxu0 %v2473
      %v2507 = vpop.f32.mrf.mxu0
      %v2508 = vadd.f32 0.0, %v2507
      %2509 = vmatmul.f32.gmra.mxu0 %v2476
      %v2510 = vpop.f32.mrf.mxu0
      %v2511 = vadd.f32 0.0, %v2510
      %2512 = vmatmul.f32.gmra.mxu0 %v2479
      %v2513 = vpop.f32.mrf.mxu0
      %v2514 = vadd.f32 0.0, %v2513
      %2515 = vdwg.mxu0
      %v2516 = vsel %vm579, %v2508, -1e+30
      %v2517 = vsel %vm579, %v2511, -1e+30
      %v2518 = vsel %vm579, %v2514, -1e+30
      %v2519 = vsel %vm835, %v2516, -inf
      %2520 = vmax.xlane.f32.xlu0 %v2519
      %v2521 = vpop.xlane.xlu0 %2520
      %v2522 = vsel %vm835, %v2517, -inf
      %2523 = vmax.xlane.f32.xlu0 %v2522
      %v2524 = vpop.xlane.xlu0 %2523
      %v2525 = vsel %vm835, %v2518, -inf
      %2526 = vmax.xlane.f32.xlu0 %v2525
      %v2527 = vpop.xlane.xlu0 %2526
      %v2528 = vsub.f32 %v2516, %v2521
      %v2529 = vsub.f32 %v2517, %v2524
      %v2530 = vsub.f32 %v2518, %v2527
      %v2531 = vmul.f32 %v2528, 1.442695
      %v2532 = vpow.pop %v2531
      %v2533 = vmul.f32 %v2529, 1.442695
      %v2534 = vpow.pop %v2533
      %v2535 = vmul.f32 %v2530, 1.442695
      %v2536 = vpow.pop %v2535
      %v2537 = vsel %vm835, %v2532, 0.0
      %2538 = vadd.xlane.f32.xlu0 %v2537
      %v2539 = vpop.xlane.xlu0 %2538
      %v2540 = vsel %vm835, %v2534, 0.0
      %2541 = vadd.xlane.f32.xlu0 %v2540
      %v2542 = vpop.xlane.xlu0 %2541
      %v2543 = vsel %vm835, %v2536, 0.0
      %2544 = vadd.xlane.f32.xlu0 %v2543
      %v2545 = vpop.xlane.xlu0 %2544
      %v2546 = vrcp.pop %v2539
      %v2547 = vrcp.pop %v2542
      %v2548 = vrcp.pop %v2545
      %v2549 = vmul.f32 %v2532, %v2546
      %v2550 = vmul.f32 %v2534, %v2547
      %v2551 = vmul.f32 %v2536, %v2548
      %v2553 = vsel %vm835, %v2549, 0
      %v2556 = vsel %vm835, %v2550, 0
      %v2559 = vsel %vm835, %v2551, 0
      %2561 = vmatpush.msra.mxu0 0.0
      %2562 = vmatpush.msra.mxu0 0.0
      %2563 = vmatpush.msra.mxu0 0.0
      %2564 = vmatpush.msra.mxu0 0.0
      %2565 = vmatpush.msra.mxu0 0.0
      %2566 = vmatpush.msra.mxu0 0.0
      %2567 = vmatpush.msra.mxu0 0.0
      %2568 = vmatpush.msra.mxu0 0.0
      %2569 = vmatpush.msra.mxu0 0.0
      %2570 = vmatpush.msra.mxu0 0.0
      %2571 = vmatpush.msra.mxu0 0.0
      %2572 = vmatpush.msra.mxu0 0.0
      %2573 = vmatpush.msra.mxu0 0.0
      %2574 = vmatpush.msra.mxu0 %v2470
      %2575 = vmatpush.msra.mxu0 %v2467
      %2576 = vmatpush.msra.mxu0 %v2464
      %2577 = vmatmul.f32.gmra.mxu0 %v2553
      %v2578 = vpop.f32.mrf.mxu0
      %v2579 = vadd.f32 0.0, %v2578
      %2580 = vmatmul.f32.gmra.mxu0 %v2556
      %v2581 = vpop.f32.mrf.mxu0
      %v2582 = vadd.f32 0.0, %v2581
      %2583 = vmatmul.f32.gmra.mxu0 %v2559
      %v2584 = vpop.f32.mrf.mxu0
      %v2585 = vadd.f32 0.0, %v2584
      %2586 = vdwg.mxu0
      %s2587 = scalar_lea.vmem %s6, 80
      %v2588 = vld [vmem:[%s2587] sm:$0xff]
      %v2589 = vld [vmem:[%s2587 + $0x8] sm:$0xff]
      %v2591 = vsel %vm787, %v2579, 0
      %v2594 = vsel %vm787, %v2582, 0
      %v2597 = vsel %vm787, %v2585, 0
      %2599 = vmatpush.msra.mxu0 0.0
      %2600 = vmatpush.msra.mxu0 0.0
      %2601 = vmatpush.msra.mxu0 0.0
      %2602 = vmatpush.msra.mxu0 0.0
      %2603 = vmatpush.msra.mxu0 0.0
      %2604 = vmatpush.msra.mxu0 0.0
      %2605 = vmatpush.msra.mxu0 0.0
      %2606 = vmatpush.msra.mxu0 0.0
      %2607 = vmatpush.msra.mxu0 0.0
      %2608 = vmatpush.msra.mxu0 0.0
      %2609 = vmatpush.msra.mxu0 0.0
      %2610 = vmatpush.msra.mxu0 0.0
      %2611 = vmatpush.msra.mxu0 0.0
      %2612 = vmatpush.msra.mxu0 0.0
      %2613 = vmatpush.msra.mxu0 %v2589
      %2614 = vmatpush.msra.mxu0 %v2588
      %2615 = vmatmul.f32.gmra.mxu0 %v2591
      %v2616 = vpop.f32.mrf.mxu0
      %v2617 = vadd.f32 0.0, %v2616
      %2618 = vmatmul.f32.gmra.mxu0 %v2594
      %v2619 = vpop.f32.mrf.mxu0
      %v2620 = vadd.f32 0.0, %v2619
      %2621 = vmatmul.f32.gmra.mxu0 %v2597
      %v2622 = vpop.f32.mrf.mxu0
      %v2623 = vadd.f32 0.0, %v2622
      %2624 = vdwg.mxu0
      %v2626 = vsel %vm787, %v2329, 0
      %v2629 = vsel %vm787, %v2332, 0
      %v2632 = vsel %vm787, %v2335, 0
      %2634 = vmatpush.msra.mxu0 0.0
      %2635 = vmatpush.msra.mxu0 0.0
      %2636 = vmatpush.msra.mxu0 0.0
      %2637 = vmatpush.msra.mxu0 0.0
      %2638 = vmatpush.msra.mxu0 0.0
      %2639 = vmatpush.msra.mxu0 0.0
      %2640 = vmatpush.msra.mxu0 0.0
      %2641 = vmatpush.msra.mxu0 0.0
      %2642 = vmatpush.msra.mxu0 0.0
      %2643 = vmatpush.msra.mxu0 0.0
      %2644 = vmatpush.msra.mxu0 0.0
      %2645 = vmatpush.msra.mxu0 0.0
      %2646 = vmatpush.msra.mxu0 0.0
      %2647 = vmatpush.msra.mxu0 0.0
      %2648 = vmatpush.msra.mxu0 %v2339
      %2649 = vmatpush.msra.mxu0 %v2338
      %2650 = vmatmul.f32.gmra.mxu0 %v2626
      %v2651 = vpop.f32.mrf.mxu0
      %v2652 = vadd.f32 %v2617, %v2651
      %2653 = vmatmul.f32.gmra.mxu0 %v2629
      %v2654 = vpop.f32.mrf.mxu0
      %v2655 = vadd.f32 %v2620, %v2654
      %2656 = vmatmul.f32.gmra.mxu0 %v2632
      %v2657 = vpop.f32.mrf.mxu0
      %v2658 = vadd.f32 %v2623, %v2657
      %2659 = vdwg.mxu0
      %s2660 = scalar_lea.vmem %s3, 768
      %v2661 = vld [vmem:[%s2660] sm:$0xff]
      %v2662 = vld [vmem:[%s2660 + $0x8] sm:$0xff]
      %v2663 = vld [vmem:[%s2660 + $0x10] sm:$0xff]
      %v2664 = vld [vmem:[%s2660 + $0x18] sm:$0xff]
      %v2665 = vld [vmem:[%s2660 + $0x20] sm:$0xff]
      %v2666 = vld [vmem:[%s2660 + $0x28] sm:$0xff]
      %v2667 = vld [vmem:[%s2660 + $0x30] sm:$0xff]
      %v2668 = vld [vmem:[%s2660 + $0x38] sm:$0xff]
      %v2669 = vld [vmem:[%s2660 + $0x40] sm:$0xff]
      %v2670 = vld [vmem:[%s2660 + $0x48] sm:$0xff]
      %v2671 = vld [vmem:[%s2660 + $0x50] sm:$0xff]
      %v2672 = vld [vmem:[%s2660 + $0x58] sm:$0xff]
      %v2673 = vld [vmem:[%s2660 + $0x60] sm:$0xff]
      %v2674 = vld [vmem:[%s2660 + $0x68] sm:$0xff]
      %v2675 = vld [vmem:[%s2660 + $0x70] sm:$0xff]
      %v2676 = vld [vmem:[%s2660 + $0x78] sm:$0xff]
      %2677 = vmatpush.msra.mxu0 %v2676
      %2678 = vmatpush.msra.mxu0 %v2675
      %2679 = vmatpush.msra.mxu0 %v2674
      %2680 = vmatpush.msra.mxu0 %v2673
      %2681 = vmatpush.msra.mxu0 %v2672
      %2682 = vmatpush.msra.mxu0 %v2671
      %2683 = vmatpush.msra.mxu0 %v2670
      %2684 = vmatpush.msra.mxu0 %v2669
      %2685 = vmatpush.msra.mxu0 %v2668
      %2686 = vmatpush.msra.mxu0 %v2667
      %2687 = vmatpush.msra.mxu0 %v2666
      %2688 = vmatpush.msra.mxu0 %v2665
      %2689 = vmatpush.msra.mxu0 %v2664
      %2690 = vmatpush.msra.mxu0 %v2663
      %2691 = vmatpush.msra.mxu0 %v2662
      %2692 = vmatpush.msra.mxu0 %v2661
      %2693 = vmatmul.f32.gmra.mxu0 %v2087
      %v2694 = vpop.f32.mrf.mxu0
      %v2695 = vadd.f32 0.0, %v2694
      %2696 = vmatmul.f32.gmra.mxu0 %v2088
      %v2697 = vpop.f32.mrf.mxu0
      %v2698 = vadd.f32 0.0, %v2697
      %2699 = vmatmul.f32.gmra.mxu0 %v2089
      %v2700 = vpop.f32.mrf.mxu0
      %v2701 = vadd.f32 0.0, %v2700
      %2702 = vdwg.mxu0
      %v2703 = vmul.f32 %v2695, 0.25
      %v2704 = vmul.f32 %v2698, 0.25
      %v2705 = vmul.f32 %v2701, 0.25
      %s2706 = scalar_lea.vmem %s4, 768
      %v2707 = vld [vmem:[%s2706] sm:$0xff]
      %v2708 = vld [vmem:[%s2706 + $0x8] sm:$0xff]
      %v2709 = vld [vmem:[%s2706 + $0x10] sm:$0xff]
      %v2710 = vld [vmem:[%s2706 + $0x18] sm:$0xff]
      %v2711 = vld [vmem:[%s2706 + $0x20] sm:$0xff]
      %v2712 = vld [vmem:[%s2706 + $0x28] sm:$0xff]
      %v2713 = vld [vmem:[%s2706 + $0x30] sm:$0xff]
      %v2714 = vld [vmem:[%s2706 + $0x38] sm:$0xff]
      %v2715 = vld [vmem:[%s2706 + $0x40] sm:$0xff]
      %v2716 = vld [vmem:[%s2706 + $0x48] sm:$0xff]
      %v2717 = vld [vmem:[%s2706 + $0x50] sm:$0xff]
      %v2718 = vld [vmem:[%s2706 + $0x58] sm:$0xff]
      %v2719 = vld [vmem:[%s2706 + $0x60] sm:$0xff]
      %v2720 = vld [vmem:[%s2706 + $0x68] sm:$0xff]
      %v2721 = vld [vmem:[%s2706 + $0x70] sm:$0xff]
      %v2722 = vld [vmem:[%s2706 + $0x78] sm:$0xff]
      %2723 = vmatpush.msra.mxu0 %v2722
      %2724 = vmatpush.msra.mxu0 %v2721
      %2725 = vmatpush.msra.mxu0 %v2720
      %2726 = vmatpush.msra.mxu0 %v2719
      %2727 = vmatpush.msra.mxu0 %v2718
      %2728 = vmatpush.msra.mxu0 %v2717
      %2729 = vmatpush.msra.mxu0 %v2716
      %2730 = vmatpush.msra.mxu0 %v2715
      %2731 = vmatpush.msra.mxu0 %v2714
      %2732 = vmatpush.msra.mxu0 %v2713
      %2733 = vmatpush.msra.mxu0 %v2712
      %2734 = vmatpush.msra.mxu0 %v2711
      %2735 = vmatpush.msra.mxu0 %v2710
      %2736 = vmatpush.msra.mxu0 %v2709
      %2737 = vmatpush.msra.mxu0 %v2708
      %2738 = vmatpush.msra.mxu0 %v2707
      %2739 = vmatmul.f32.gmra.mxu0 %v2087
      %v2740 = vpop.f32.mrf.mxu0
      %v2741 = vadd.f32 0.0, %v2740
      %2742 = vmatmul.f32.gmra.mxu0 %v2088
      %v2743 = vpop.f32.mrf.mxu0
      %v2744 = vadd.f32 0.0, %v2743
      %2745 = vmatmul.f32.gmra.mxu0 %v2089
      %v2746 = vpop.f32.mrf.mxu0
      %v2747 = vadd.f32 0.0, %v2746
      %2748 = vdwg.mxu0
      %s2749 = scalar_lea.vmem %s5, 768
      %v2750 = vld [vmem:[%s2749] sm:$0xff]
      %v2751 = vld [vmem:[%s2749 + $0x8] sm:$0xff]
      %v2752 = vld [vmem:[%s2749 + $0x10] sm:$0xff]
      %v2753 = vld [vmem:[%s2749 + $0x18] sm:$0xff]
      %v2754 = vld [vmem:[%s2749 + $0x20] sm:$0xff]
      %v2755 = vld [vmem:[%s2749 + $0x28] sm:$0xff]
      %v2756 = vld [vmem:[%s2749 + $0x30] sm:$0xff]
      %v2757 = vld [vmem:[%s2749 + $0x38] sm:$0xff]
      %v2758 = vld [vmem:[%s2749 + $0x40] sm:$0xff]
      %v2759 = vld [vmem:[%s2749 + $0x48] sm:$0xff]
      %v2760 = vld [vmem:[%s2749 + $0x50] sm:$0xff]
      %v2761 = vld [vmem:[%s2749 + $0x58] sm:$0xff]
      %v2762 = vld [vmem:[%s2749 + $0x60] sm:$0xff]
      %v2763 = vld [vmem:[%s2749 + $0x68] sm:$0xff]
      %v2764 = vld [vmem:[%s2749 + $0x70] sm:$0xff]
      %v2765 = vld [vmem:[%s2749 + $0x78] sm:$0xff]
      %2766 = vmatpush.msra.mxu0 %v2765
      %2767 = vmatpush.msra.mxu0 %v2764
      %2768 = vmatpush.msra.mxu0 %v2763
      %2769 = vmatpush.msra.mxu0 %v2762
      %2770 = vmatpush.msra.mxu0 %v2761
      %2771 = vmatpush.msra.mxu0 %v2760
      %2772 = vmatpush.msra.mxu0 %v2759
      %2773 = vmatpush.msra.mxu0 %v2758
      %2774 = vmatpush.msra.mxu0 %v2757
      %2775 = vmatpush.msra.mxu0 %v2756
      %2776 = vmatpush.msra.mxu0 %v2755
      %2777 = vmatpush.msra.mxu0 %v2754
      %2778 = vmatpush.msra.mxu0 %v2753
      %2779 = vmatpush.msra.mxu0 %v2752
      %2780 = vmatpush.msra.mxu0 %v2751
      %2781 = vmatpush.msra.mxu0 %v2750
      %2782 = vmatmul.f32.gmra.mxu0 %v2087
      %v2783 = vpop.f32.mrf.mxu0
      %v2784 = vadd.f32 0.0, %v2783
      %2785 = vmatmul.f32.gmra.mxu0 %v2088
      %v2786 = vpop.f32.mrf.mxu0
      %v2787 = vadd.f32 0.0, %v2786
      %2788 = vmatmul.f32.gmra.mxu0 %v2089
      %v2789 = vpop.f32.mrf.mxu0
      %v2790 = vadd.f32 0.0, %v2789
      %2791 = vdwg.mxu0
      %v2793 = vsel %vm787, %v2703, 0
      %v2796 = vsel %vm787, %v2704, 0
      %v2799 = vsel %vm787, %v2705, 0
      %v2802 = vsel %vm787, %v2741, 0
      %v2805 = vsel %vm787, %v2744, 0
      %v2808 = vsel %vm787, %v2747, 0
      %2810 = vmatpush.xpose.msra.mxu0 0.0
      %2811 = vmatpush.xpose.msra.mxu0 0.0
      %2812 = vmatpush.xpose.msra.mxu0 0.0
      %2813 = vmatpush.xpose.msra.mxu0 0.0
      %2814 = vmatpush.xpose.msra.mxu0 0.0
      %2815 = vmatpush.xpose.msra.mxu0 0.0
      %2816 = vmatpush.xpose.msra.mxu0 0.0
      %2817 = vmatpush.xpose.msra.mxu0 0.0
      %2818 = vmatpush.xpose.msra.mxu0 0.0
      %2819 = vmatpush.xpose.msra.mxu0 0.0
      %2820 = vmatpush.xpose.msra.mxu0 0.0
      %2821 = vmatpush.xpose.msra.mxu0 0.0
      %2822 = vmatpush.xpose.msra.mxu0 0.0
      %2823 = vmatpush.xpose.msra.mxu0 %v2808
      %2824 = vmatpush.xpose.msra.mxu0 %v2805
      %2825 = vmatpush.xpose.msra.mxu0 %v2802
      %2826 = vmatmul.f32.gmra.mxu0 %v2793
      %v2827 = vpop.f32.mrf.mxu0
      %v2828 = vadd.f32 0.0, %v2827
      %2829 = vmatmul.f32.gmra.mxu0 %v2796
      %v2830 = vpop.f32.mrf.mxu0
      %v2831 = vadd.f32 0.0, %v2830
      %2832 = vmatmul.f32.gmra.mxu0 %v2799
      %v2833 = vpop.f32.mrf.mxu0
      %v2834 = vadd.f32 0.0, %v2833
      %2835 = vdwg.mxu0
      %v2836 = vsel %vm579, %v2828, -1e+30
      %v2837 = vsel %vm579, %v2831, -1e+30
      %v2838 = vsel %vm579, %v2834, -1e+30
      %v2839 = vsel %vm835, %v2836, -inf
      %2840 = vmax.xlane.f32.xlu0 %v2839
      %v2841 = vpop.xlane.xlu0 %2840
      %v2842 = vsel %vm835, %v2837, -inf
      %2843 = vmax.xlane.f32.xlu0 %v2842
      %v2844 = vpop.xlane.xlu0 %2843
      %v2845 = vsel %vm835, %v2838, -inf
      %2846 = vmax.xlane.f32.xlu0 %v2845
      %v2847 = vpop.xlane.xlu0 %2846
      %v2848 = vsub.f32 %v2836, %v2841
      %v2849 = vsub.f32 %v2837, %v2844
      %v2850 = vsub.f32 %v2838, %v2847
      %v2851 = vmul.f32 %v2848, 1.442695
      %v2852 = vpow.pop %v2851
      %v2853 = vmul.f32 %v2849, 1.442695
      %v2854 = vpow.pop %v2853
      %v2855 = vmul.f32 %v2850, 1.442695
      %v2856 = vpow.pop %v2855
      %v2857 = vsel %vm835, %v2852, 0.0
      %2858 = vadd.xlane.f32.xlu0 %v2857
      %v2859 = vpop.xlane.xlu0 %2858
      %v2860 = vsel %vm835, %v2854, 0.0
      %2861 = vadd.xlane.f32.xlu0 %v2860
      %v2862 = vpop.xlane.xlu0 %2861
      %v2863 = vsel %vm835, %v2856, 0.0
      %2864 = vadd.xlane.f32.xlu0 %v2863
      %v2865 = vpop.xlane.xlu0 %2864
      %v2866 = vrcp.pop %v2859
      %v2867 = vrcp.pop %v2862
      %v2868 = vrcp.pop %v2865
      %v2869 = vmul.f32 %v2852, %v2866
      %v2870 = vmul.f32 %v2854, %v2867
      %v2871 = vmul.f32 %v2856, %v2868
      %v2873 = vsel %vm835, %v2869, 0
      %v2876 = vsel %vm835, %v2870, 0
      %v2879 = vsel %vm835, %v2871, 0
      %2881 = vmatpush.msra.mxu0 0.0
      %2882 = vmatpush.msra.mxu0 0.0
      %2883 = vmatpush.msra.mxu0 0.0
      %2884 = vmatpush.msra.mxu0 0.0
      %2885 = vmatpush.msra.mxu0 0.0
      %2886 = vmatpush.msra.mxu0 0.0
      %2887 = vmatpush.msra.mxu0 0.0
      %2888 = vmatpush.msra.mxu0 0.0
      %2889 = vmatpush.msra.mxu0 0.0
      %2890 = vmatpush.msra.mxu0 0.0
      %2891 = vmatpush.msra.mxu0 0.0
      %2892 = vmatpush.msra.mxu0 0.0
      %2893 = vmatpush.msra.mxu0 0.0
      %2894 = vmatpush.msra.mxu0 %v2790
      %2895 = vmatpush.msra.mxu0 %v2787
      %2896 = vmatpush.msra.mxu0 %v2784
      %2897 = vmatmul.f32.gmra.mxu0 %v2873
      %v2898 = vpop.f32.mrf.mxu0
      %v2899 = vadd.f32 0.0, %v2898
      %2900 = vmatmul.f32.gmra.mxu0 %v2876
      %v2901 = vpop.f32.mrf.mxu0
      %v2902 = vadd.f32 0.0, %v2901
      %2903 = vmatmul.f32.gmra.mxu0 %v2879
      %v2904 = vpop.f32.mrf.mxu0
      %v2905 = vadd.f32 0.0, %v2904
      %2906 = vdwg.mxu0
      %s2907 = scalar_lea.vmem %s6, 96
      %v2908 = vld [vmem:[%s2907] sm:$0xff]
      %v2909 = vld [vmem:[%s2907 + $0x8] sm:$0xff]
      %v2911 = vsel %vm787, %v2899, 0
      %v2914 = vsel %vm787, %v2902, 0
      %v2917 = vsel %vm787, %v2905, 0
      %2919 = vmatpush.msra.mxu0 0.0
      %2920 = vmatpush.msra.mxu0 0.0
      %2921 = vmatpush.msra.mxu0 0.0
      %2922 = vmatpush.msra.mxu0 0.0
      %2923 = vmatpush.msra.mxu0 0.0
      %2924 = vmatpush.msra.mxu0 0.0
      %2925 = vmatpush.msra.mxu0 0.0
      %2926 = vmatpush.msra.mxu0 0.0
      %2927 = vmatpush.msra.mxu0 0.0
      %2928 = vmatpush.msra.mxu0 0.0
      %2929 = vmatpush.msra.mxu0 0.0
      %2930 = vmatpush.msra.mxu0 0.0
      %2931 = vmatpush.msra.mxu0 0.0
      %2932 = vmatpush.msra.mxu0 0.0
      %2933 = vmatpush.msra.mxu0 %v2909
      %2934 = vmatpush.msra.mxu0 %v2908
      %2935 = vmatmul.f32.gmra.mxu0 %v2911
      %v2936 = vpop.f32.mrf.mxu0
      %v2937 = vadd.f32 0.0, %v2936
      %2938 = vmatmul.f32.gmra.mxu0 %v2914
      %v2939 = vpop.f32.mrf.mxu0
      %v2940 = vadd.f32 0.0, %v2939
      %2941 = vmatmul.f32.gmra.mxu0 %v2917
      %v2942 = vpop.f32.mrf.mxu0
      %v2943 = vadd.f32 0.0, %v2942
      %2944 = vdwg.mxu0
      %v2945 = vadd.f32 %v2652, %v2937
      %v2946 = vadd.f32 %v2655, %v2940
      %v2947 = vadd.f32 %v2658, %v2943
      %s2948 = scalar_lea.vmem %s3, 896
      %v2949 = vld [vmem:[%s2948] sm:$0xff]
      %v2950 = vld [vmem:[%s2948 + $0x8] sm:$0xff]
      %v2951 = vld [vmem:[%s2948 + $0x10] sm:$0xff]
      %v2952 = vld [vmem:[%s2948 + $0x18] sm:$0xff]
      %v2953 = vld [vmem:[%s2948 + $0x20] sm:$0xff]
      %v2954 = vld [vmem:[%s2948 + $0x28] sm:$0xff]
      %v2955 = vld [vmem:[%s2948 + $0x30] sm:$0xff]
      %v2956 = vld [vmem:[%s2948 + $0x38] sm:$0xff]
      %v2957 = vld [vmem:[%s2948 + $0x40] sm:$0xff]
      %v2958 = vld [vmem:[%s2948 + $0x48] sm:$0xff]
      %v2959 = vld [vmem:[%s2948 + $0x50] sm:$0xff]
      %v2960 = vld [vmem:[%s2948 + $0x58] sm:$0xff]
      %v2961 = vld [vmem:[%s2948 + $0x60] sm:$0xff]
      %v2962 = vld [vmem:[%s2948 + $0x68] sm:$0xff]
      %v2963 = vld [vmem:[%s2948 + $0x70] sm:$0xff]
      %v2964 = vld [vmem:[%s2948 + $0x78] sm:$0xff]
      %2965 = vmatpush.msra.mxu0 %v2964
      %2966 = vmatpush.msra.mxu0 %v2963
      %2967 = vmatpush.msra.mxu0 %v2962
      %2968 = vmatpush.msra.mxu0 %v2961
      %2969 = vmatpush.msra.mxu0 %v2960
      %2970 = vmatpush.msra.mxu0 %v2959
      %2971 = vmatpush.msra.mxu0 %v2958
      %2972 = vmatpush.msra.mxu0 %v2957
      %2973 = vmatpush.msra.mxu0 %v2956
      %2974 = vmatpush.msra.mxu0 %v2955
      %2975 = vmatpush.msra.mxu0 %v2954
      %2976 = vmatpush.msra.mxu0 %v2953
      %2977 = vmatpush.msra.mxu0 %v2952
      %2978 = vmatpush.msra.mxu0 %v2951
      %2979 = vmatpush.msra.mxu0 %v2950
      %2980 = vmatpush.msra.mxu0 %v2949
      %2981 = vmatmul.f32.gmra.mxu0 %v2087
      %v2982 = vpop.f32.mrf.mxu0
      %v2983 = vadd.f32 0.0, %v2982
      %2984 = vmatmul.f32.gmra.mxu0 %v2088
      %v2985 = vpop.f32.mrf.mxu0
      %v2986 = vadd.f32 0.0, %v2985
      %2987 = vmatmul.f32.gmra.mxu0 %v2089
      %v2988 = vpop.f32.mrf.mxu0
      %v2989 = vadd.f32 0.0, %v2988
      %2990 = vdwg.mxu0
      %v2991 = vmul.f32 %v2983, 0.25
      %v2992 = vmul.f32 %v2986, 0.25
      %v2993 = vmul.f32 %v2989, 0.25
      %s2994 = scalar_lea.vmem %s4, 896
      %v2995 = vld [vmem:[%s2994] sm:$0xff]
      %v2996 = vld [vmem:[%s2994 + $0x8] sm:$0xff]
      %v2997 = vld [vmem:[%s2994 + $0x10] sm:$0xff]
      %v2998 = vld [vmem:[%s2994 + $0x18] sm:$0xff]
      %v2999 = vld [vmem:[%s2994 + $0x20] sm:$0xff]
      %v3000 = vld [vmem:[%s2994 + $0x28] sm:$0xff]
      %v3001 = vld [vmem:[%s2994 + $0x30] sm:$0xff]
      %v3002 = vld [vmem:[%s2994 + $0x38] sm:$0xff]
      %v3003 = vld [vmem:[%s2994 + $0x40] sm:$0xff]
      %v3004 = vld [vmem:[%s2994 + $0x48] sm:$0xff]
      %v3005 = vld [vmem:[%s2994 + $0x50] sm:$0xff]
      %v3006 = vld [vmem:[%s2994 + $0x58] sm:$0xff]
      %v3007 = vld [vmem:[%s2994 + $0x60] sm:$0xff]
      %v3008 = vld [vmem:[%s2994 + $0x68] sm:$0xff]
      %v3009 = vld [vmem:[%s2994 + $0x70] sm:$0xff]
      %v3010 = vld [vmem:[%s2994 + $0x78] sm:$0xff]
      %3011 = vmatpush.msra.mxu0 %v3010
      %3012 = vmatpush.msra.mxu0 %v3009
      %3013 = vmatpush.msra.mxu0 %v3008
      %3014 = vmatpush.msra.mxu0 %v3007
      %3015 = vmatpush.msra.mxu0 %v3006
      %3016 = vmatpush.msra.mxu0 %v3005
      %3017 = vmatpush.msra.mxu0 %v3004
      %3018 = vmatpush.msra.mxu0 %v3003
      %3019 = vmatpush.msra.mxu0 %v3002
      %3020 = vmatpush.msra.mxu0 %v3001
      %3021 = vmatpush.msra.mxu0 %v3000
      %3022 = vmatpush.msra.mxu0 %v2999
      %3023 = vmatpush.msra.mxu0 %v2998
      %3024 = vmatpush.msra.mxu0 %v2997
      %3025 = vmatpush.msra.mxu0 %v2996
      %3026 = vmatpush.msra.mxu0 %v2995
      %3027 = vmatmul.f32.gmra.mxu0 %v2087
      %v3028 = vpop.f32.mrf.mxu0
      %v3029 = vadd.f32 0.0, %v3028
      %3030 = vmatmul.f32.gmra.mxu0 %v2088
      %v3031 = vpop.f32.mrf.mxu0
      %v3032 = vadd.f32 0.0, %v3031
      %3033 = vmatmul.f32.gmra.mxu0 %v2089
      %v3034 = vpop.f32.mrf.mxu0
      %v3035 = vadd.f32 0.0, %v3034
      %3036 = vdwg.mxu0
      %s3037 = scalar_lea.vmem %s5, 896
      %v3038 = vld [vmem:[%s3037] sm:$0xff]
      %v3039 = vld [vmem:[%s3037 + $0x8] sm:$0xff]
      %v3040 = vld [vmem:[%s3037 + $0x10] sm:$0xff]
      %v3041 = vld [vmem:[%s3037 + $0x18] sm:$0xff]
      %v3042 = vld [vmem:[%s3037 + $0x20] sm:$0xff]
      %v3043 = vld [vmem:[%s3037 + $0x28] sm:$0xff]
      %v3044 = vld [vmem:[%s3037 + $0x30] sm:$0xff]
      %v3045 = vld [vmem:[%s3037 + $0x38] sm:$0xff]
      %v3046 = vld [vmem:[%s3037 + $0x40] sm:$0xff]
      %v3047 = vld [vmem:[%s3037 + $0x48] sm:$0xff]
      %v3048 = vld [vmem:[%s3037 + $0x50] sm:$0xff]
      %v3049 = vld [vmem:[%s3037 + $0x58] sm:$0xff]
      %v3050 = vld [vmem:[%s3037 + $0x60] sm:$0xff]
      %v3051 = vld [vmem:[%s3037 + $0x68] sm:$0xff]
      %v3052 = vld [vmem:[%s3037 + $0x70] sm:$0xff]
      %v3053 = vld [vmem:[%s3037 + $0x78] sm:$0xff]
      %3054 = vmatpush.msra.mxu0 %v3053
      %3055 = vmatpush.msra.mxu0 %v3052
      %3056 = vmatpush.msra.mxu0 %v3051
      %3057 = vmatpush.msra.mxu0 %v3050
      %3058 = vmatpush.msra.mxu0 %v3049
      %3059 = vmatpush.msra.mxu0 %v3048
      %3060 = vmatpush.msra.mxu0 %v3047
      %3061 = vmatpush.msra.mxu0 %v3046
      %3062 = vmatpush.msra.mxu0 %v3045
      %3063 = vmatpush.msra.mxu0 %v3044
      %3064 = vmatpush.msra.mxu0 %v3043
      %3065 = vmatpush.msra.mxu0 %v3042
      %3066 = vmatpush.msra.mxu0 %v3041
      %3067 = vmatpush.msra.mxu0 %v3040
      %3068 = vmatpush.msra.mxu0 %v3039
      %3069 = vmatpush.msra.mxu0 %v3038
      %3070 = vmatmul.f32.gmra.mxu0 %v2087
      %v3071 = vpop.f32.mrf.mxu0
      %v3072 = vadd.f32 0.0, %v3071
      %3073 = vmatmul.f32.gmra.mxu0 %v2088
      %v3074 = vpop.f32.mrf.mxu0
      %v3075 = vadd.f32 0.0, %v3074
      %3076 = vmatmul.f32.gmra.mxu0 %v2089
      %v3077 = vpop.f32.mrf.mxu0
      %v3078 = vadd.f32 0.0, %v3077
      %3079 = vdwg.mxu0
      %v3081 = vsel %vm787, %v2991, 0
      %v3084 = vsel %vm787, %v2992, 0
      %v3087 = vsel %vm787, %v2993, 0
      %v3090 = vsel %vm787, %v3029, 0
      %v3093 = vsel %vm787, %v3032, 0
      %v3096 = vsel %vm787, %v3035, 0
      %3098 = vmatpush.xpose.msra.mxu0 0.0
      %3099 = vmatpush.xpose.msra.mxu0 0.0
      %3100 = vmatpush.xpose.msra.mxu0 0.0
      %3101 = vmatpush.xpose.msra.mxu0 0.0
      %3102 = vmatpush.xpose.msra.mxu0 0.0
      %3103 = vmatpush.xpose.msra.mxu0 0.0
      %3104 = vmatpush.xpose.msra.mxu0 0.0
      %3105 = vmatpush.xpose.msra.mxu0 0.0
      %3106 = vmatpush.xpose.msra.mxu0 0.0
      %3107 = vmatpush.xpose.msra.mxu0 0.0
      %3108 = vmatpush.xpose.msra.mxu0 0.0
      %3109 = vmatpush.xpose.msra.mxu0 0.0
      %3110 = vmatpush.xpose.msra.mxu0 0.0
      %3111 = vmatpush.xpose.msra.mxu0 %v3096
      %3112 = vmatpush.xpose.msra.mxu0 %v3093
      %3113 = vmatpush.xpose.msra.mxu0 %v3090
      %3114 = vmatmul.f32.gmra.mxu0 %v3081
      %v3115 = vpop.f32.mrf.mxu0
      %v3116 = vadd.f32 0.0, %v3115
      %3117 = vmatmul.f32.gmra.mxu0 %v3084
      %v3118 = vpop.f32.mrf.mxu0
      %v3119 = vadd.f32 0.0, %v3118
      %3120 = vmatmul.f32.gmra.mxu0 %v3087
      %v3121 = vpop.f32.mrf.mxu0
      %v3122 = vadd.f32 0.0, %v3121
      %3123 = vdwg.mxu0
      %v3124 = vsel %vm579, %v3116, -1e+30
      %v3125 = vsel %vm579, %v3119, -1e+30
      %v3126 = vsel %vm579, %v3122, -1e+30
      %v3127 = vsel %vm835, %v3124, -inf
      %3128 = vmax.xlane.f32.xlu0 %v3127
      %v3129 = vpop.xlane.xlu0 %3128
      %v3130 = vsel %vm835, %v3125, -inf
      %3131 = vmax.xlane.f32.xlu0 %v3130
      %v3132 = vpop.xlane.xlu0 %3131
      %v3133 = vsel %vm835, %v3126, -inf
      %3134 = vmax.xlane.f32.xlu0 %v3133
      %v3135 = vpop.xlane.xlu0 %3134
      %v3136 = vsub.f32 %v3124, %v3129
      %v3137 = vsub.f32 %v3125, %v3132
      %v3138 = vsub.f32 %v3126, %v3135
      %v3139 = vmul.f32 %v3136, 1.442695
      %v3140 = vpow.pop %v3139
      %v3141 = vmul.f32 %v3137, 1.442695
      %v3142 = vpow.pop %v3141
      %v3143 = vmul.f32 %v3138, 1.442695
      %v3144 = vpow.pop %v3143
      %v3145 = vsel %vm835, %v3140, 0.0
      %3146 = vadd.xlane.f32.xlu0 %v3145
      %v3147 = vpop.xlane.xlu0 %3146
      %v3148 = vsel %vm835, %v3142, 0.0
      %3149 = vadd.xlane.f32.xlu0 %v3148
      %v3150 = vpop.xlane.xlu0 %3149
      %v3151 = vsel %vm835, %v3144, 0.0
      %3152 = vadd.xlane.f32.xlu0 %v3151
      %v3153 = vpop.xlane.xlu0 %3152
      %v3154 = vrcp.pop %v3147
      %v3155 = vrcp.pop %v3150
      %v3156 = vrcp.pop %v3153
      %v3157 = vmul.f32 %v3140, %v3154
      %v3158 = vmul.f32 %v3142, %v3155
      %v3159 = vmul.f32 %v3144, %v3156
      %v3161 = vsel %vm835, %v3157, 0
      %v3164 = vsel %vm835, %v3158, 0
      %v3167 = vsel %vm835, %v3159, 0
      %3169 = vmatpush.msra.mxu0 0.0
      %3170 = vmatpush.msra.mxu0 0.0
      %3171 = vmatpush.msra.mxu0 0.0
      %3172 = vmatpush.msra.mxu0 0.0
      %3173 = vmatpush.msra.mxu0 0.0
      %3174 = vmatpush.msra.mxu0 0.0
      %3175 = vmatpush.msra.mxu0 0.0
      %3176 = vmatpush.msra.mxu0 0.0
      %3177 = vmatpush.msra.mxu0 0.0
      %3178 = vmatpush.msra.mxu0 0.0
      %3179 = vmatpush.msra.mxu0 0.0
      %3180 = vmatpush.msra.mxu0 0.0
      %3181 = vmatpush.msra.mxu0 0.0
      %3182 = vmatpush.msra.mxu0 %v3078
      %3183 = vmatpush.msra.mxu0 %v3075
      %3184 = vmatpush.msra.mxu0 %v3072
      %3185 = vmatmul.f32.gmra.mxu0 %v3161
      %v3186 = vpop.f32.mrf.mxu0
      %v3187 = vadd.f32 0.0, %v3186
      %3188 = vmatmul.f32.gmra.mxu0 %v3164
      %v3189 = vpop.f32.mrf.mxu0
      %v3190 = vadd.f32 0.0, %v3189
      %3191 = vmatmul.f32.gmra.mxu0 %v3167
      %v3192 = vpop.f32.mrf.mxu0
      %v3193 = vadd.f32 0.0, %v3192
      %3194 = vdwg.mxu0
      %s3195 = scalar_lea.vmem %s6, 112
      %v3196 = vld [vmem:[%s3195] sm:$0xff]
      %v3197 = vld [vmem:[%s3195 + $0x8] sm:$0xff]
      %v3199 = vsel %vm787, %v3187, 0
      %v3202 = vsel %vm787, %v3190, 0
      %v3205 = vsel %vm787, %v3193, 0
      %3207 = vmatpush.msra.mxu0 0.0
      %3208 = vmatpush.msra.mxu0 0.0
      %3209 = vmatpush.msra.mxu0 0.0
      %3210 = vmatpush.msra.mxu0 0.0
      %3211 = vmatpush.msra.mxu0 0.0
      %3212 = vmatpush.msra.mxu0 0.0
      %3213 = vmatpush.msra.mxu0 0.0
      %3214 = vmatpush.msra.mxu0 0.0
      %3215 = vmatpush.msra.mxu0 0.0
      %3216 = vmatpush.msra.mxu0 0.0
      %3217 = vmatpush.msra.mxu0 0.0
      %3218 = vmatpush.msra.mxu0 0.0
      %3219 = vmatpush.msra.mxu0 0.0
      %3220 = vmatpush.msra.mxu0 0.0
      %3221 = vmatpush.msra.mxu0 %v3197
      %3222 = vmatpush.msra.mxu0 %v3196
      %3223 = vmatmul.f32.gmra.mxu0 %v3199
      %v3224 = vpop.f32.mrf.mxu0
      %v3225 = vadd.f32 0.0, %v3224
      %3226 = vmatmul.f32.gmra.mxu0 %v3202
      %v3227 = vpop.f32.mrf.mxu0
      %v3228 = vadd.f32 0.0, %v3227
      %3229 = vmatmul.f32.gmra.mxu0 %v3205
      %v3230 = vpop.f32.mrf.mxu0
      %v3231 = vadd.f32 0.0, %v3230
      %3232 = vdwg.mxu0
      %v3233 = vadd.f32 %v2945, %v3225
      %v3234 = vadd.f32 %v2946, %v3228
      %v3235 = vadd.f32 %v2947, %v3231
      %v3236 = vadd.f32 %v2008, %v3233
      %v3237 = vadd.f32 %v2009, %v3234
      %v3238 = vadd.f32 %v2010, %v3235
      %s3239 = scalar_lea.vmem %s7, 1
      %v3240 = vld [vmem:[%s3239] sm:$0x1]
      %v3242 = vperm.slane %v3240, 0
      %v3244 = vadd.f32 %v3236, %v3242
      %v3245 = vadd.f32 %v3237, %v3242
      %v3246 = vadd.f32 %v3238, %v3242
      %s3247 = scalar_lea.vmem %s8, 1
      %v3248 = vld [vmem:[%s3247] sm:$0x1]
      %s3249 = scalar_lea.vmem %s9, 1
      %v3250 = vld [vmem:[%s3249] sm:$0x1]
      %3251 = vadd.xlane.f32.xlu0 %v3244
      %v3252 = vpop.xlane.xlu0 %3251
      %3253 = vadd.xlane.f32.xlu0 %v3245
      %v3254 = vpop.xlane.xlu0 %3253
      %3255 = vadd.xlane.f32.xlu0 %v3246
      %v3256 = vpop.xlane.xlu0 %3255
      %v3257 = vmul.f32 %v3252, 0.015625
      %v3258 = vmul.f32 %v3254, 0.015625
      %v3259 = vmul.f32 %v3256, 0.015625
      %v3260 = vsub.f32 %v3244, %v3257
      %v3261 = vsub.f32 %v3245, %v3258
      %v3262 = vsub.f32 %v3246, %v3259
      %v3263 = vsel %vm582, %v3260, 0.0
      %v3264 = vsel %vm582, %v3261, 0.0
      %v3265 = vsel %vm582, %v3262, 0.0
      %v3266 = vmul.f32 %v3263, %v3263
      %v3267 = vmul.f32 %v3264, %v3264
      %v3268 = vmul.f32 %v3265, %v3265
      %3269 = vadd.xlane.f32.xlu0 %v3266
      %v3270 = vpop.xlane.xlu0 %3269
      %3271 = vadd.xlane.f32.xlu0 %v3267
      %v3272 = vpop.xlane.xlu0 %3271
      %3273 = vadd.xlane.f32.xlu0 %v3268
      %v3274 = vpop.xlane.xlu0 %3273
      %v3275 = vmul.f32 %v3270, 0.015625
      %v3276 = vmul.f32 %v3272, 0.015625
      %v3277 = vmul.f32 %v3274, 0.015625
      %v3278 = vadd.f32 %v3275, 1e-05
      %v3279 = vadd.f32 %v3276, 1e-05
      %v3280 = vadd.f32 %v3277, 1e-05
      %v3281 = vrsqrt.pop %v3278
      %v3282 = vmul.f32 %v3281, %v3278
      %v3283 = vmul.f32 %v3282, %v3281
      %v3284 = vmul.f32 0.5, %v3283
      %v3285 = vsub.f32 1.5, %v3284
      %v3286 = vmul.f32 %v3281, %v3285
      %vm3287 = vweird.f32 %v3278
      %vm3288 = vweird.f32 %v3281
      %vm3289 = vmor %vm3287, %vm3288
      %v3290 = vsel %vm3289, %v3281, %v3286
      %v3291 = vrsqrt.pop %v3279
      %v3292 = vmul.f32 %v3291, %v3279
      %v3293 = vmul.f32 %v3292, %v3291
      %v3294 = vmul.f32 0.5, %v3293
      %v3295 = vsub.f32 1.5, %v3294
      %v3296 = vmul.f32 %v3291, %v3295
      %vm3297 = vweird.f32 %v3279
      %vm3298 = vweird.f32 %v3291
      %vm3299 = vmor %vm3297, %vm3298
      %v3300 = vsel %vm3299, %v3291, %v3296
      %v3301 = vrsqrt.pop %v3280
      %v3302 = vmul.f32 %v3301, %v3280
      %v3303 = vmul.f32 %v3302, %v3301
      %v3304 = vmul.f32 0.5, %v3303
      %v3305 = vsub.f32 1.5, %v3304
      %v3306 = vmul.f32 %v3301, %v3305
      %vm3307 = vweird.f32 %v3280
      %vm3308 = vweird.f32 %v3301
      %vm3309 = vmor %vm3307, %vm3308
      %v3310 = vsel %vm3309, %v3301, %v3306
      %v3311 = vmul.f32 %v3263, %v3290
      %v3312 = vmul.f32 %v3264, %v3300
      %v3313 = vmul.f32 %v3265, %v3310
      %v3315 = vperm.slane %v3248, 0
      %v3317 = vmul.f32 %v3311, %v3315
      %v3318 = vmul.f32 %v3312, %v3315
      %v3319 = vmul.f32 %v3313, %v3315
      %v3321 = vperm.slane %v3250, 0
      %v3323 = vadd.f32 %v3317, %v3321
      %v3324 = vadd.f32 %v3318, %v3321
      %v3325 = vadd.f32 %v3319, %v3321
      %s3326 = scalar_lea.vmem %s10, 128
      %v3327 = vld [vmem:[%s3326] sm:$0xff]
      %v3328 = vld [vmem:[%s3326 + $0x8] sm:$0xff]
      %v3329 = vld [vmem:[%s3326 + $0x10] sm:$0xff]
      %v3330 = vld [vmem:[%s3326 + $0x18] sm:$0xff]
      %v3331 = vld [vmem:[%s3326 + $0x20] sm:$0xff]
      %v3332 = vld [vmem:[%s3326 + $0x28] sm:$0xff]
      %v3333 = vld [vmem:[%s3326 + $0x30] sm:$0xff]
      %v3334 = vld [vmem:[%s3326 + $0x38] sm:$0xff]
      %v3335 = vld [vmem:[%s3326 + $0x40] sm:$0xff]
      %v3336 = vld [vmem:[%s3326 + $0x48] sm:$0xff]
      %v3337 = vld [vmem:[%s3326 + $0x50] sm:$0xff]
      %v3338 = vld [vmem:[%s3326 + $0x58] sm:$0xff]
      %v3339 = vld [vmem:[%s3326 + $0x60] sm:$0xff]
      %v3340 = vld [vmem:[%s3326 + $0x68] sm:$0xff]
      %v3341 = vld [vmem:[%s3326 + $0x70] sm:$0xff]
      %v3342 = vld [vmem:[%s3326 + $0x78] sm:$0xff]
      %s3343 = scalar_lea.vmem %s11, 1
      %v3344 = vld [vmem:[%s3343] sm:$0x1]
      %v3346 = vperm.slane %v3344, 0
      %3348 = vmatpush.msra.mxu0 %v3342
      %3349 = vmatpush.msra.mxu0 %v3341
      %3350 = vmatpush.msra.mxu0 %v3340
      %3351 = vmatpush.msra.mxu0 %v3339
      %3352 = vmatpush.msra.mxu0 %v3338
      %3353 = vmatpush.msra.mxu0 %v3337
      %3354 = vmatpush.msra.mxu0 %v3336
      %3355 = vmatpush.msra.mxu0 %v3335
      %3356 = vmatpush.msra.mxu0 %v3334
      %3357 = vmatpush.msra.mxu0 %v3333
      %3358 = vmatpush.msra.mxu0 %v3332
      %3359 = vmatpush.msra.mxu0 %v3331
      %3360 = vmatpush.msra.mxu0 %v3330
      %3361 = vmatpush.msra.mxu0 %v3329
      %3362 = vmatpush.msra.mxu0 %v3328
      %3363 = vmatpush.msra.mxu0 %v3327
      %3364 = vmatmul.f32.gmra.mxu0 %v3323
      %v3365 = vpop.f32.mrf.mxu0
      %v3366 = vadd.f32 %v3346, %v3365
      %3367 = vmatmul.f32.gmra.mxu0 %v3324
      %v3368 = vpop.f32.mrf.mxu0
      %v3369 = vadd.f32 %v3346, %v3368
      %3370 = vmatmul.f32.gmra.mxu0 %v3325
      %v3371 = vpop.f32.mrf.mxu0
      %v3372 = vadd.f32 %v3346, %v3371
      %3373 = vdwg.mxu0
      %v3374 = vmul.f32 %v3366, %v3366
      %v3375 = vmul.f32 %v3369, %v3369
      %v3376 = vmul.f32 %v3372, %v3372
      %v3377 = vmul.f32 %v3366, %v3374
      %v3378 = vmul.f32 %v3369, %v3375
      %v3379 = vmul.f32 %v3372, %v3376
      %v3380 = vmul.f32 %v3377, 0.044715
      %v3381 = vmul.f32 %v3378, 0.044715
      %v3382 = vmul.f32 %v3379, 0.044715
      %v3383 = vadd.f32 %v3366, %v3380
      %v3384 = vadd.f32 %v3369, %v3381
      %v3385 = vadd.f32 %v3372, %v3382
      %v3386 = vmul.f32 %v3383, 0.7978846
      %v3387 = vmul.f32 %v3384, 0.7978846
      %v3388 = vmul.f32 %v3385, 0.7978846
      %v3389 = vtanh.pop %v3386
      %v3390 = vtanh.pop %v3387
      %v3391 = vtanh.pop %v3388
      %v3392 = vadd.f32 %v3389, 1.0
      %v3393 = vadd.f32 %v3390, 1.0
      %v3394 = vadd.f32 %v3391, 1.0
      %v3395 = vmul.f32 %v3392, 0.5
      %v3396 = vmul.f32 %v3393, 0.5
      %v3397 = vmul.f32 %v3394, 0.5
      %v3398 = vmul.f32 %v3366, %v3395
      %v3399 = vmul.f32 %v3369, %v3396
      %v3400 = vmul.f32 %v3372, %v3397
      %s3401 = scalar_lea.vmem %s12, 128
      %v3402 = vld [vmem:[%s3401] sm:$0xff]
      %v3403 = vld [vmem:[%s3401 + $0x8] sm:$0xff]
      %v3404 = vld [vmem:[%s3401 + $0x10] sm:$0xff]
      %v3405 = vld [vmem:[%s3401 + $0x18] sm:$0xff]
      %v3406 = vld [vmem:[%s3401 + $0x20] sm:$0xff]
      %v3407 = vld [vmem:[%s3401 + $0x28] sm:$0xff]
      %v3408 = vld [vmem:[%s3401 + $0x30] sm:$0xff]
      %v3409 = vld [vmem:[%s3401 + $0x38] sm:$0xff]
      %v3410 = vld [vmem:[%s3401 + $0x40] sm:$0xff]
      %v3411 = vld [vmem:[%s3401 + $0x48] sm:$0xff]
      %v3412 = vld [vmem:[%s3401 + $0x50] sm:$0xff]
      %v3413 = vld [vmem:[%s3401 + $0x58] sm:$0xff]
      %v3414 = vld [vmem:[%s3401 + $0x60] sm:$0xff]
      %v3415 = vld [vmem:[%s3401 + $0x68] sm:$0xff]
      %v3416 = vld [vmem:[%s3401 + $0x70] sm:$0xff]
      %v3417 = vld [vmem:[%s3401 + $0x78] sm:$0xff]
      %s3418 = scalar_lea.vmem %s13, 1
      %v3419 = vld [vmem:[%s3418] sm:$0x1]
      %v3421 = vperm.slane %v3419, 0
      %3423 = vmatpush.msra.mxu0 %v3417
      %3424 = vmatpush.msra.mxu0 %v3416
      %3425 = vmatpush.msra.mxu0 %v3415
      %3426 = vmatpush.msra.mxu0 %v3414
      %3427 = vmatpush.msra.mxu0 %v3413
      %3428 = vmatpush.msra.mxu0 %v3412
      %3429 = vmatpush.msra.mxu0 %v3411
      %3430 = vmatpush.msra.mxu0 %v3410
      %3431 = vmatpush.msra.mxu0 %v3409
      %3432 = vmatpush.msra.mxu0 %v3408
      %3433 = vmatpush.msra.mxu0 %v3407
      %3434 = vmatpush.msra.mxu0 %v3406
      %3435 = vmatpush.msra.mxu0 %v3405
      %3436 = vmatpush.msra.mxu0 %v3404
      %3437 = vmatpush.msra.mxu0 %v3403
      %3438 = vmatpush.msra.mxu0 %v3402
      %3439 = vmatmul.f32.gmra.mxu0 %v3398
      %v3440 = vpop.f32.mrf.mxu0
      %v3441 = vadd.f32 %v3421, %v3440
      %3442 = vmatmul.f32.gmra.mxu0 %v3399
      %v3443 = vpop.f32.mrf.mxu0
      %3444 = vmatmul.f32.gmra.mxu0 %v3400
      %v3445 = vpop.f32.mrf.mxu0
      %3446 = vdwg.mxu0
      %v3447 = vadd.f32 %v3323, %v3441
      %v3448 = vld [vmem:[%s14] sm:$0x1]
      %v3449 = vld [vmem:[%s15] sm:$0x1]
      %vm3450 = vcmask 1040384
      %v3451 = vsel %vm3450, %v3447, 0.0
      %3452 = vadd.xlane.f32.xlu0 %v3451
      %v3453 = vpop.xlane.xlu0 %3452
      %v3454 = vmul.f32 %v3453, 0.015625
      %v3455 = vsub.f32 %v3447, %v3454
      %v3456 = vsel %vm582, %v3455, 0.0
      %v3457 = vmul.f32 %v3456, %v3456
      %v3458 = vsel %vm3450, %v3457, 0.0
      %3459 = vadd.xlane.f32.xlu0 %v3458
      %v3460 = vpop.xlane.xlu0 %3459
      %v3461 = vmul.f32 %v3460, 0.015625
      %v3462 = vadd.f32 %v3461, 1e-05
      %v3463 = vrsqrt.pop %v3462
      %v3464 = vmul.f32 %v3463, %v3462
      %v3465 = vmul.f32 %v3464, %v3463
      %v3466 = vmul.f32 0.5, %v3465
      %v3467 = vsub.f32 1.5, %v3466
      %v3468 = vmul.f32 %v3463, %v3467
      %vm3469 = vweird.f32 %v3462
      %vm3470 = vweird.f32 %v3463
      %vm3471 = vmor %vm3469, %vm3470
      %v3472 = vsel %vm3471, %v3463, %v3468
      %v3473 = vmul.f32 %v3456, %v3472
      %v3474 = vmul.f32 %v3473, %v3448
      %v3475 = vadd.f32 %v3474, %v3449
      %v3476 = vld [vmem:[%s16] sm:$0xff]
      %v3477 = vld [vmem:[%s16 + $0x8] sm:$0xff]
      %v3478 = vld [vmem:[%s16 + $0x10] sm:$0xff]
      %v3479 = vld [vmem:[%s16 + $0x18] sm:$0xff]
      %v3480 = vld [vmem:[%s16 + $0x20] sm:$0xff]
      %v3481 = vld [vmem:[%s16 + $0x28] sm:$0xff]
      %v3482 = vld [vmem:[%s16 + $0x30] sm:$0xff]
      %v3483 = vld [vmem:[%s16 + $0x38] sm:$0xff]
      %v3484 = vld [vmem:[%s16 + $0x40] sm:$0xff]
      %v3485 = vld [vmem:[%s16 + $0x48] sm:$0xff]
      %v3486 = vld [vmem:[%s16 + $0x50] sm:$0xff]
      %v3487 = vld [vmem:[%s16 + $0x58] sm:$0xff]
      %v3488 = vld [vmem:[%s16 + $0x60] sm:$0xff]
      %v3489 = vld [vmem:[%s16 + $0x68] sm:$0xff]
      %v3490 = vld [vmem:[%s16 + $0x70] sm:$0xff]
      %v3491 = vld [vmem:[%s16 + $0x78] sm:$0xff]
      %v3492 = vld [vmem:[%s17] sm:$0x1]
      %3493 = vmatpush.msra.mxu0 %v3491
      %3494 = vmatpush.msra.mxu0 %v3490
      %3495 = vmatpush.msra.mxu0 %v3489
      %3496 = vmatpush.msra.mxu0 %v3488
      %3497 = vmatpush.msra.mxu0 %v3487
      %3498 = vmatpush.msra.mxu0 %v3486
      %3499 = vmatpush.msra.mxu0 %v3485
      %3500 = vmatpush.msra.mxu0 %v3484
      %3501 = vmatpush.msra.mxu0 %v3483
      %3502 = vmatpush.msra.mxu0 %v3482
      %3503 = vmatpush.msra.mxu0 %v3481
      %3504 = vmatpush.msra.mxu0 %v3480
      %3505 = vmatpush.msra.mxu0 %v3479
      %3506 = vmatpush.msra.mxu0 %v3478
      %3507 = vmatpush.msra.mxu0 %v3477
      %3508 = vmatpush.msra.mxu0 %v3476
      %3509 = vmatmul.f32.gmra.mxu0 %v3475
      %v3510 = vpop.f32.mrf.mxu0
      %v3511 = vadd.f32 %v3492, %v3510
      %3512 = vdwg.mxu0
      %v3513 = vperm.slane %v3511, 0
      %3514 = vst [vmem:[%s573] sm:$0xff] %v3513
      %p3515 = scmp.lt.s32.totalorder %s29, 1
      %s3516 = scalar_select %p3515, %s29, 1
      %s3517 = smul.addr %s3516, 8
      %s3518 = scalar_lea.vmem %s18, %s3517
      // Predicated region
      $region93: #{forward.3} parent=91 // pred_check
        %p3519 = pneg %p430
      $region94: #{forward.3} parent=91 // pred_check_branch
        %3521 = sbr.rel (%p3519) target = $region96
      $region95: #{forward.3} parent=91 // pred_region
        _
      $region96: #{forward.3} parent=91 // pred_fallthru
        _
    $region92: #{forward.3} parent=5 // pred_fallthru
      _
    %p3522 = scmp.le.s32.totalorder 2, %s24
    // Predicated region
    $region97: #{forward.3} parent=5 // pred_check
      %p3523 = pneg %p3522
    $region98: #{forward.3} parent=5 // pred_check_branch
      %3525 = sbr.rel (%p3523) target = $region100
    $region99: #{forward.3} parent=5 // pred_region
      %s3526 = ssub.s32 %s24, 2
      // Predicated region
      $region101: #{forward.3} parent=99 // pred_check
        %p3527 = pneg %p436
      $region102: #{forward.3} parent=99 // pred_check_branch
        %3529 = sbr.rel (%p3527) target = $region104
      $region103: #{forward.3} parent=99 // pred_region
        %p3530 = scmp.lt.s32.totalorder %s30, 1
        %s3531 = scalar_select %p3530, %s30, 1
        %s3532 = smul.addr %s3531, 8
        %s3533 = scalar_lea.vmem %s18, %s3532
      $region104: #{forward.3} parent=99 // pred_fallthru
        _
    $region100: #{forward.3} parent=5 // pred_fallthru
      _
  $region6: #{forward.3} parent=0 // loop_footer
    %s28 = sadd.s32 1, %s24
  $region7: #{forward.3} parent=0 // loop_footer_branch
    %23 = sbr.rel target = $region3
  $region8: #{forward.3} parent=0 // loop_exit
    _

</llo_original>
